<compile_context>
chip_gen: v7x
topology: tpu7x:2x2x1
jax: 0.10.0
libtpu: 0.0.40
codegen_flags: <defaults>
</compile_context>

<pallas_src>
import functools

import jax
import jax.numpy as jnp
from jax.experimental import pallas as pl
from jax.experimental.pallas import tpu as pltpu

# ---- HyperParameters (small, consistent with the module) ----
BLOCK_SIZE = 8          # max sequence length T
N_EMBED    = 32         # embedding dim C
N_HEAD     = 4          # heads -> head_size = 8
N_BLOCK    = 2          # number of transformer blocks
VOCAB_SIZE = 65
HEAD_SIZE  = N_EMBED // N_HEAD
FF_HIDDEN  = 4 * N_EMBED
LN_EPS     = 1e-5       # PyTorch nn.LayerNorm default eps
VOCAB_PAD  = 128        # lane-dense padded vocab width
NEG_MASK   = -1e30      # finite causal-mask value (no inf/NaN corner cases)
PAD_LOGIT  = -1e9       # baked into padded vocab columns (softmax/argmax-safe)


def _layernorm(x, g, b):
    mu = jnp.mean(x, axis=-1, keepdims=True)
    var = jnp.mean((x - mu) ** 2, axis=-1, keepdims=True)
    return (x - mu) * jax.lax.rsqrt(var + LN_EPS) * g + b


def transformer_kernel(x_ref,
                       ln1g_ref, ln1b_ref, wqkv_ref, wo_ref, bo_ref,
                       ln2g_ref, ln2b_ref, w1_ref, b1_ref, w2_ref, b2_ref,
                       flng_ref, flnb_ref, wlm_ref, blm_ref,
                       out_ref, *, bt, seq, batched_heads):
    C = N_EMBED
    BT = bt * seq
    x = x_ref[...].astype(jnp.float32)                 # bf16 slab -> f32 residual stream

    # causal mask (T, T): keep positions where key index <= query index
    row = jax.lax.broadcasted_iota(jnp.int32, (seq, seq), 0)
    col = jax.lax.broadcasted_iota(jnp.int32, (seq, seq), 1)
    causal = row >= col
    scale = HEAD_SIZE ** -0.5

    for l in range(N_BLOCK):                           # static unroll over layers
        # ---- pre-LN multi-head causal self-attention (fused QKV) ----
        xn = _layernorm(x, ln1g_ref[l], ln1b_ref[l])   # (BT, C) f32
        qkv = jnp.dot(xn.astype(jnp.bfloat16), wqkv_ref[l],
                      preferred_element_type=jnp.float32)      # (BT, 3C) f32

        if batched_heads:
            # All heads in one batched einsum per direction; no per-head slices,
            # no concatenate (reshape back to (BT, C) is lane-contiguous).
            q = qkv[:, 0 * C:1 * C].reshape(bt, seq, N_HEAD, HEAD_SIZE).astype(jnp.bfloat16)
            k = qkv[:, 1 * C:2 * C].reshape(bt, seq, N_HEAD, HEAD_SIZE).astype(jnp.bfloat16)
            v = qkv[:, 2 * C:3 * C].reshape(bt, seq, N_HEAD, HEAD_SIZE).astype(jnp.bfloat16)
            att = jnp.einsum('bqhd,bkhd->bhqk', q, k,
                             preferred_element_type=jnp.float32) * scale
            att = jnp.where(causal, att, NEG_MASK)
            att = att - jnp.max(att, axis=-1, keepdims=True)
            p = jnp.exp(att)
            p = p * pl.reciprocal(jnp.sum(p, axis=-1, keepdims=True), approx=True)
            heads = jnp.einsum('bhqk,bkhd->bqhd', p.astype(jnp.bfloat16), v,
                               preferred_element_type=jnp.float32)
            heads = heads.reshape(BT, C)
        else:
            # Conservative fallback: per-head loop (proven to lower everywhere).
            q3 = qkv[:, 0 * C:1 * C].reshape(bt, seq, C)
            k3 = qkv[:, 1 * C:2 * C].reshape(bt, seq, C)
            v3 = qkv[:, 2 * C:3 * C].reshape(bt, seq, C)
            head_outs = []
            for h in range(N_HEAD):                    # static unroll over heads
                s = slice(h * HEAD_SIZE, (h + 1) * HEAD_SIZE)
                qh = q3[:, :, s].astype(jnp.bfloat16)  # (Bt, T, hs)
                kh = k3[:, :, s].astype(jnp.bfloat16)
                vh = v3[:, :, s].astype(jnp.bfloat16)
                att = jnp.einsum('bqd,bkd->bqk', qh, kh,
                                 preferred_element_type=jnp.float32) * scale
                att = jnp.where(causal, att, NEG_MASK)
                att = att - jnp.max(att, axis=-1, keepdims=True)
                p = jnp.exp(att)
                p = p * pl.reciprocal(jnp.sum(p, axis=-1, keepdims=True), approx=True)
                head_outs.append(
                    jnp.einsum('bqk,bkd->bqd', p.astype(jnp.bfloat16), vh,
                               preferred_element_type=jnp.float32))
            heads = jnp.concatenate(head_outs, axis=-1).reshape(BT, C)

        # concat(heads) @ Wo : one projection matmul
        sa = jnp.dot(heads.astype(jnp.bfloat16), wo_ref[l],
                     preferred_element_type=jnp.float32) + bo_ref[l]
        x = x + sa                                     # residual

        # ---- pre-LN feed-forward (ReLU) ----
        xn = _layernorm(x, ln2g_ref[l], ln2b_ref[l])
        h1 = jnp.dot(xn.astype(jnp.bfloat16), w1_ref[l],
                     preferred_element_type=jnp.float32) + b1_ref[l]
        h1 = jnp.maximum(h1, 0.0)
        ff = jnp.dot(h1.astype(jnp.bfloat16), w2_ref[l],
                     preferred_element_type=jnp.float32) + b2_ref[l]
        x = x + ff                                     # residual

    # ---- final LayerNorm + lm_head (vocab lane-padded to 128, pads -> -1e9) ----
    xn = _layernorm(x, flng_ref[...], flnb_ref[...])
    logits = jnp.dot(xn.astype(jnp.bfloat16), wlm_ref[...],
                     preferred_element_type=jnp.float32) + blm_ref[...]
    out_ref[...] = logits.astype(out_ref.dtype)        # bf16, unmasked full-lane stores


def init_params(key):
    ks = list(jax.random.split(key, 9))

    def nrm(k, shape):
        return (jax.random.normal(k, shape) * 0.02).astype(jnp.float32)

    C, V, H4 = N_EMBED, VOCAB_SIZE, FF_HIDDEN

    wq = nrm(ks[2], (N_BLOCK, C, C))
    wk = nrm(ks[3], (N_BLOCK, C, C))
    wv = nrm(ks[4], (N_BLOCK, C, C))
    wqkv = jnp.concatenate([wq, wk, wv], axis=-1)          # (N_BLOCK, C, 3C)

    wlm = nrm(ks[8], (C, V))
    wlm_pad = jnp.zeros((C, VOCAB_PAD), jnp.float32).at[:, :V].set(wlm)
    # padded vocab columns get a large negative bias so padded logits are
    # softmax/argmax-safe without any post-kernel slicing.
    blm_pad = jnp.full((1, VOCAB_PAD), PAD_LOGIT, jnp.float32).at[:, :V].set(0.0)

    return dict(
        tok_emb=nrm(ks[0], (V, C)),
        pos_emb=nrm(ks[1], (BLOCK_SIZE, C)),
        ln1g=jnp.ones((N_BLOCK, 1, C), jnp.float32),
        ln1b=jnp.zeros((N_BLOCK, 1, C), jnp.float32),
        wqkv=wqkv.astype(jnp.bfloat16),                    # bf16 matmul weights
        wo=nrm(ks[5], (N_BLOCK, C, C)).astype(jnp.bfloat16),
        bo=jnp.zeros((N_BLOCK, 1, C), jnp.float32),
        ln2g=jnp.ones((N_BLOCK, 1, C), jnp.float32),
        ln2b=jnp.zeros((N_BLOCK, 1, C), jnp.float32),
        w1=nrm(ks[6], (N_BLOCK, C, H4)).astype(jnp.bfloat16),
        b1=jnp.zeros((N_BLOCK, 1, H4), jnp.float32),
        w2=nrm(ks[7], (N_BLOCK, H4, C)).astype(jnp.bfloat16),
        b2=jnp.zeros((N_BLOCK, 1, C), jnp.float32),
        flng=jnp.ones((1, C), jnp.float32),
        flnb=jnp.zeros((1, C), jnp.float32),
        wlm=wlm_pad.astype(jnp.bfloat16),                  # (C, 128) padded lm_head
        blm=blm_pad,                                       # (1, 128), pads = -1e9
    )


def _select_tiling(B):
    """Generation-aware batch-chunk size and scoped-VMEM limit."""
    try:
        vmem_cap = pltpu.get_tpu_info().vmem_capacity_bytes
    except Exception:
        vmem_cap = 64 * 1024 * 1024                        # conservative default
    if vmem_cap >= 96 * 1024 * 1024:
        # v5e / v6e: 128 MiB VMEM -> large chunks, raised scoped-VMEM limit.
        cap, vmem_limit, min_chunks = 1024, 64 * 1024 * 1024, 1
    else:
        # v7x: 64 MiB VMEM / 2 TensorCores -> smaller cap, >=2 parallel chunks.
        cap, vmem_limit, min_chunks = 512, 40 * 1024 * 1024, 2
    bt = max(1, min(cap, pl.cdiv(B, min_chunks), B))
    return bt, vmem_limit


_BATCHED_HEADS_OK = None   # probed once per process: does the batched-head path lower?


def bigram_lm_forward(idx, params, *, batch_tile=None, unpad=False, attn_mode="auto"):
    """Forward pass; returns (logits, loss) with loss=None (targets=None path).

    By default logits keep the lane-padded 128-wide vocab axis (columns
    >= VOCAB_SIZE are ~-1e9, i.e. softmax/argmax-safe), avoiding an extra HBM
    pass; pass unpad=True to slice back to VOCAB_SIZE.
    """
    global _BATCHED_HEADS_OK
    B, T = idx.shape
    # embedding gathers are glue (plain JAX); activation slab travels in bf16
    tok = params["tok_emb"][idx]          # (B, T, C)
    pos = params["pos_emb"][:T]           # (T, C)
    x = (tok + pos).astype(jnp.bfloat16)  # (B, T, C)

    if batch_tile is None:
        Bt, vmem_limit = _select_tiling(B)
    else:
        Bt, vmem_limit = batch_tile, 64 * 1024 * 1024
    n_chunks = pl.cdiv(B, Bt)
    B_pad = n_chunks * Bt
    if B_pad != B:
        x = jnp.pad(x, ((0, B_pad - B), (0, 0), (0, 0)))
    x2 = x.reshape(B_pad * T, N_EMBED)    # 2-D (rows fill sublanes) bf16 slab

    weight_order = ["ln1g", "ln1b", "wqkv", "wo", "bo",
                    "ln2g", "ln2b", "w1", "b1", "w2", "b2",
                    "flng", "flnb", "wlm", "blm"]
    weights = [params[n] for n in weight_order]

    def full_spec(a):
        # constant block index across the batch grid -> weights stay VMEM-resident
        return pl.BlockSpec(a.shape, lambda b, _nd=a.ndim: (0,) * _nd)

    in_specs = [pl.BlockSpec((Bt * T, N_EMBED), lambda b: (b, 0))]
    in_specs += [full_spec(a) for a in weights]
    out_spec = pl.BlockSpec((Bt * T, VOCAB_PAD), lambda b: (b, 0))

    def run(batched_heads):
        kernel = functools.partial(transformer_kernel, bt=Bt, seq=T,
                                   batched_heads=batched_heads)
        return pl.pallas_call(
            kernel,
            out_shape=jax.ShapeDtypeStruct((B_pad * T, VOCAB_PAD), jnp.bfloat16),
            grid=(n_chunks,),
            in_specs=in_specs,
            out_specs=out_spec,
            compiler_params=pltpu.CompilerParams(
                dimension_semantics=("parallel",),        # batch chunks -> both TCs on v7x
                vmem_limit_bytes=vmem_limit),
        )(x2, *weights)

    if attn_mode == "batched":
        logits2d = run(True)
    elif attn_mode == "looped":
        logits2d = run(False)
    else:
        # Probe once (eager call): prefer the batched-head kernel, fall back to the
        # per-head-loop variant if this toolchain can't lower multi-batch-dim dots.
        if _BATCHED_HEADS_OK is None:
            try:
                logits2d = jax.block_until_ready(run(True))
                _BATCHED_HEADS_OK = True
            except Exception:
                _BATCHED_HEADS_OK = False
                logits2d = run(False)
        else:
            logits2d = run(_BATCHED_HEADS_OK)

    logits = logits2d.reshape(B_pad, T, VOCAB_PAD)
    if B_pad != B:
        logits = logits[:B]
    if unpad:
        logits = logits[:, :, :VOCAB_SIZE]

    # TODO(synk): cross-entropy loss path (targets is not None) not exercised here.
    return logits, None


def _reference_forward(idx, params):
    """Pure-JAX reference mirroring the kernel's bf16 cast points (exact softmax)."""
    B, T = idx.shape
    C = N_EMBED
    x = (params["tok_emb"][idx] + params["pos_emb"][:T]).astype(jnp.bfloat16).astype(jnp.float32)
    causal = jnp.arange(T)[:, None] >= jnp.arange(T)[None, :]
    scale = HEAD_SIZE ** -0.5

    def ln(v, g, b):
        mu = jnp.mean(v, axis=-1, keepdims=True)
        var = jnp.mean((v - mu) ** 2, axis=-1, keepdims=True)
        return (v - mu) * jax.lax.rsqrt(var + LN_EPS) * g + b

    for l in range(N_BLOCK):
        xn = ln(x, params["ln1g"][l], params["ln1b"][l])
        qkv = jnp.dot(xn.astype(jnp.bfloat16), params["wqkv"][l],
                      preferred_element_type=jnp.float32)
        q = qkv[..., 0 * C:1 * C].reshape(B, T, N_HEAD, HEAD_SIZE)
        k = qkv[..., 1 * C:2 * C].reshape(B, T, N_HEAD, HEAD_SIZE)
        v = qkv[..., 2 * C:3 * C].reshape(B, T, N_HEAD, HEAD_SIZE)
        att = jnp.einsum('bqhd,bkhd->bhqk', q.astype(jnp.bfloat16), k.astype(jnp.bfloat16),
                         preferred_element_type=jnp.float32) * scale
        att = jnp.where(causal, att, NEG_MASK)
        p = jax.nn.softmax(att, axis=-1)
        heads = jnp.einsum('bhqk,bkhd->bqhd', p.astype(jnp.bfloat16), v.astype(jnp.bfloat16),
                           preferred_element_type=jnp.float32).reshape(B, T, C)
        sa = jnp.dot(heads.astype(jnp.bfloat16), params["wo"][l],
                     preferred_element_type=jnp.float32) + params["bo"][l]
        x = x + sa
        xn = ln(x, params["ln2g"][l], params["ln2b"][l])
        h1 = jnp.maximum(jnp.dot(xn.astype(jnp.bfloat16), params["w1"][l],
                                 preferred_element_type=jnp.float32) + params["b1"][l], 0.0)
        ff = jnp.dot(h1.astype(jnp.bfloat16), params["w2"][l],
                     preferred_element_type=jnp.float32) + params["b2"][l]
        x = x + ff
    xn = ln(x, params["flng"], params["flnb"])
    logits = jnp.dot(xn.astype(jnp.bfloat16), params["wlm"],
                     preferred_element_type=jnp.float32) + params["blm"]
    return logits[..., :VOCAB_SIZE]


if __name__ == "__main__":
    key = jax.random.PRNGKey(0)
    k_param, k_idx = jax.random.split(key)
    params = init_params(k_param)

    B, T = 2, BLOCK_SIZE
    idx = jax.random.randint(k_idx, (B, T), 0, VOCAB_SIZE, dtype=jnp.int32)

    logits, loss = bigram_lm_forward(idx, params)
    logits = jax.block_until_ready(logits)

    ref = _reference_forward(idx, params)
    real = logits[..., :VOCAB_SIZE].astype(jnp.float32)
    if not bool(jnp.allclose(real, ref, atol=5e-2, rtol=5e-2)):
        # Batched-head path lowered but mismatched numerically -> rerun looped variant.
        logits, loss = bigram_lm_forward(idx, params, attn_mode="looped")
        logits = jax.block_until_ready(logits)
        real = logits[..., :VOCAB_SIZE].astype(jnp.float32)

    assert logits.shape == (B, T, VOCAB_PAD), logits.shape
    assert loss is None
    assert bool(jnp.all(jnp.isfinite(real)))
    assert bool(jnp.all(logits[..., VOCAB_SIZE:].astype(jnp.float32) < -1e8))
    assert bool(jnp.allclose(real, ref, atol=5e-2, rtol=5e-2)), \
        float(jnp.max(jnp.abs(real - ref)))
    print("KERNEL_OK")
</pallas_src>

<mosaic_0001>
module attributes {stable_mosaic.version = 11 : i64} {
  func.func @transformer_kernel(%arg0: i32, %arg1: memref<8x32xbf16, #tpu.memory_space<vmem>>, %arg2: memref<2x1x32xf32, #tpu.memory_space<vmem>>, %arg3: memref<2x1x32xf32, #tpu.memory_space<vmem>>, %arg4: memref<2x32x96xbf16, #tpu.memory_space<vmem>>, %arg5: memref<2x32x32xbf16, #tpu.memory_space<vmem>>, %arg6: memref<2x1x32xf32, #tpu.memory_space<vmem>>, %arg7: memref<2x1x32xf32, #tpu.memory_space<vmem>>, %arg8: memref<2x1x32xf32, #tpu.memory_space<vmem>>, %arg9: memref<2x32x128xbf16, #tpu.memory_space<vmem>>, %arg10: memref<2x1x128xf32, #tpu.memory_space<vmem>>, %arg11: memref<2x128x32xbf16, #tpu.memory_space<vmem>>, %arg12: memref<2x1x32xf32, #tpu.memory_space<vmem>>, %arg13: memref<1x32xf32, #tpu.memory_space<vmem>>, %arg14: memref<1x32xf32, #tpu.memory_space<vmem>>, %arg15: memref<32x128xbf16, #tpu.memory_space<vmem>>, %arg16: memref<1x128xf32, #tpu.memory_space<vmem>>, %arg17: memref<8x128xbf16, #tpu.memory_space<vmem>>) attributes {dimension_semantics = [#tpu.dimension_semantics<parallel>], iteration_bounds = array<i64: 2>, scalar_prefetch = 0 : i64, scratch_operands = 0 : i64, tpu.core_type = #tpu.core_type<tc>, window_params = [{transform_indices = @transform_0, window_bounds = array<i64: 8, 32>}, {pipeline_mode = #tpu.pipeline_mode<synchronous>, transform_indices = @transform_1, window_bounds = array<i64: 2, 1, 32>}, {pipeline_mode = #tpu.pipeline_mode<synchronous>, transform_indices = @transform_2, window_bounds = array<i64: 2, 1, 32>}, {pipeline_mode = #tpu.pipeline_mode<synchronous>, transform_indices = @transform_3, window_bounds = array<i64: 2, 32, 96>}, {pipeline_mode = #tpu.pipeline_mode<synchronous>, transform_indices = @transform_4, window_bounds = array<i64: 2, 32, 32>}, {pipeline_mode = #tpu.pipeline_mode<synchronous>, transform_indices = @transform_5, window_bounds = array<i64: 2, 1, 32>}, {pipeline_mode = #tpu.pipeline_mode<synchronous>, transform_indices = @transform_6, window_bounds = array<i64: 2, 1, 32>}, {pipeline_mode = #tpu.pipeline_mode<synchronous>, transform_indices = @transform_7, window_bounds = array<i64: 2, 1, 32>}, {pipeline_mode = #tpu.pipeline_mode<synchronous>, transform_indices = @transform_8, window_bounds = array<i64: 2, 32, 128>}, {pipeline_mode = #tpu.pipeline_mode<synchronous>, transform_indices = @transform_9, window_bounds = array<i64: 2, 1, 128>}, {pipeline_mode = #tpu.pipeline_mode<synchronous>, transform_indices = @transform_10, window_bounds = array<i64: 2, 128, 32>}, {pipeline_mode = #tpu.pipeline_mode<synchronous>, transform_indices = @transform_11, window_bounds = array<i64: 2, 1, 32>}, {pipeline_mode = #tpu.pipeline_mode<synchronous>, transform_indices = @transform_12, window_bounds = array<i64: 1, 32>}, {pipeline_mode = #tpu.pipeline_mode<synchronous>, transform_indices = @transform_13, window_bounds = array<i64: 1, 32>}, {pipeline_mode = #tpu.pipeline_mode<synchronous>, transform_indices = @transform_14, window_bounds = array<i64: 32, 128>}, {pipeline_mode = #tpu.pipeline_mode<synchronous>, transform_indices = @transform_15, window_bounds = array<i64: 1, 128>}, {transform_indices = @transform_16, window_bounds = array<i64: 8, 128>}]} {
    %c0 = arith.constant 0 : index
    %c0_0 = arith.constant 0 : index
    %0 = vector.load %arg1[%c0, %c0_0] : memref<8x32xbf16, #tpu.memory_space<vmem>>, vector<8x32xbf16>
    %1 = arith.extf %0 : vector<8x32xbf16> to vector<8x32xf32>
    %2 = tpu.iota {dimensions = array<i32: 0>} : vector<8x8xi32>
    %3 = tpu.iota {dimensions = array<i32: 1>} : vector<8x8xi32>
    %4 = arith.cmpi sge, %2, %3 : vector<8x8xi32>
    %c0_1 = arith.constant 0 : index
    %c0_2 = arith.constant 0 : index
    %c0_3 = arith.constant 0 : index
    %5 = vector.load %arg2[%c0_1, %c0_2, %c0_3] : memref<2x1x32xf32, #tpu.memory_space<vmem>>, vector<1x1x32xf32>
    %6 = vector.shape_cast %5 : vector<1x1x32xf32> to vector<1x32xf32>
    %c0_4 = arith.constant 0 : index
    %c0_5 = arith.constant 0 : index
    %c0_6 = arith.constant 0 : index
    %7 = vector.load %arg3[%c0_4, %c0_5, %c0_6] : memref<2x1x32xf32, #tpu.memory_space<vmem>>, vector<1x1x32xf32>
    %8 = vector.shape_cast %7 : vector<1x1x32xf32> to vector<1x32xf32>
    %cst = arith.constant dense<0.000000e+00> : vector<8xf32>
    %9 = vector.multi_reduction <add>, %1, %cst [1] : vector<8x32xf32> to vector<8xf32>
    %10 = vector.shape_cast %9 : vector<8xf32> to vector<8x1xf32>
    %cst_7 = arith.constant 3.200000e+01 : f32
    %11 = vector.broadcast %cst_7 : f32 to vector<8x1xf32>
    %12 = arith.divf %10, %11 : vector<8x1xf32>
    %13 = vector.broadcast %12 : vector<8x1xf32> to vector<8x32xf32>
    %14 = arith.subf %1, %13 : vector<8x32xf32>
    %15 = arith.mulf %14, %14 : vector<8x32xf32>
    %cst_8 = arith.constant dense<0.000000e+00> : vector<8xf32>
    %16 = vector.multi_reduction <add>, %15, %cst_8 [1] : vector<8x32xf32> to vector<8xf32>
    %17 = vector.shape_cast %16 : vector<8xf32> to vector<8x1xf32>
    %cst_9 = arith.constant 3.200000e+01 : f32
    %18 = vector.broadcast %cst_9 : f32 to vector<8x1xf32>
    %19 = arith.divf %17, %18 : vector<8x1xf32>
    %20 = vector.broadcast %12 : vector<8x1xf32> to vector<8x32xf32>
    %21 = arith.subf %1, %20 : vector<8x32xf32>
    %cst_10 = arith.constant 9.99999974E-6 : f32
    %22 = vector.broadcast %cst_10 : f32 to vector<8x1xf32>
    %23 = arith.addf %19, %22 : vector<8x1xf32>
    %24 = math.rsqrt %23 : vector<8x1xf32>
    %25 = vector.broadcast %24 : vector<8x1xf32> to vector<8x32xf32>
    %26 = arith.mulf %21, %25 : vector<8x32xf32>
    %27 = vector.broadcast %6 : vector<1x32xf32> to vector<8x32xf32>
    %28 = arith.mulf %26, %27 : vector<8x32xf32>
    %29 = vector.broadcast %8 : vector<1x32xf32> to vector<8x32xf32>
    %30 = arith.addf %28, %29 : vector<8x32xf32>
    %31 = arith.truncf %30 : vector<8x32xf32> to vector<8x32xbf16>
    %c0_11 = arith.constant 0 : index
    %c0_12 = arith.constant 0 : index
    %c0_13 = arith.constant 0 : index
    %32 = vector.load %arg4[%c0_11, %c0_12, %c0_13] : memref<2x32x96xbf16, #tpu.memory_space<vmem>>, vector<1x32x96xbf16>
    %33 = vector.shape_cast %32 : vector<1x32x96xbf16> to vector<32x96xbf16>
    %cst_14 = arith.constant dense<0.000000e+00> : vector<8x96xf32>
    %34 = tpu.matmul %31, %33, %cst_14 {dimension_numbers = #tpu.dot_dimension_numbers<[1], [0], [0], [1], [0, 0, 1, 1], [], []>} : vector<8x32xbf16>, vector<32x96xbf16>, vector<8x96xf32> -> vector<8x96xf32>
    %35 = vector.extract_strided_slice %34 {offsets = [0, 0], sizes = [8, 32], strides = [1, 1]} : vector<8x96xf32> to vector<8x32xf32>
    %36 = vector.shape_cast %35 : vector<8x32xf32> to vector<1x8x32xf32>
    %37 = vector.extract_strided_slice %34 {offsets = [0, 32], sizes = [8, 32], strides = [1, 1]} : vector<8x96xf32> to vector<8x32xf32>
    %38 = vector.shape_cast %37 : vector<8x32xf32> to vector<1x8x32xf32>
    %39 = vector.extract_strided_slice %34 {offsets = [0, 64], sizes = [8, 32], strides = [1, 1]} : vector<8x96xf32> to vector<8x32xf32>
    %40 = vector.shape_cast %39 : vector<8x32xf32> to vector<1x8x32xf32>
    %41 = vector.extract_strided_slice %36 {offsets = [0, 0, 0], sizes = [1, 8, 8], strides = [1, 1, 1]} : vector<1x8x32xf32> to vector<1x8x8xf32>
    %42 = arith.truncf %41 : vector<1x8x8xf32> to vector<1x8x8xbf16>
    %43 = vector.extract_strided_slice %38 {offsets = [0, 0, 0], sizes = [1, 8, 8], strides = [1, 1, 1]} : vector<1x8x32xf32> to vector<1x8x8xf32>
    %44 = arith.truncf %43 : vector<1x8x8xf32> to vector<1x8x8xbf16>
    %45 = vector.extract_strided_slice %40 {offsets = [0, 0, 0], sizes = [1, 8, 8], strides = [1, 1, 1]} : vector<1x8x32xf32> to vector<1x8x8xf32>
    %46 = arith.truncf %45 : vector<1x8x8xf32> to vector<1x8x8xbf16>
    "tpu.trace_start"() <{level = 10 : i32, message = "bqd,bkd->bqk"}> : () -> ()
    %cst_15 = arith.constant dense<0.000000e+00> : vector<1x8x8xf32>
    %47 = tpu.matmul %42, %44, %cst_15 {dimension_numbers = #tpu.dot_dimension_numbers<[2], [2], [1], [1], [0, 0, 0, 1, 1, 1], [0], [0]>} : vector<1x8x8xbf16>, vector<1x8x8xbf16>, vector<1x8x8xf32> -> vector<1x8x8xf32>
    "tpu.trace_stop"() : () -> ()
    %cst_16 = arith.constant 0.353553385 : f32
    %48 = vector.broadcast %cst_16 : f32 to vector<1x8x8xf32>
    %49 = arith.mulf %47, %48 : vector<1x8x8xf32>
    %cst_17 = arith.constant -1.000000e+30 : f32
    %50 = vector.shape_cast %4 : vector<8x8xi1> to vector<1x8x8xi1>
    %51 = vector.broadcast %cst_17 : f32 to vector<1x8x8xf32>
    %52 = arith.select %50, %49, %51 : vector<1x8x8xi1>, vector<1x8x8xf32>
    %cst_18 = arith.constant dense<0xFF800000> : vector<1x8xf32>
    %53 = vector.multi_reduction <maximumf>, %52, %cst_18 [2] : vector<1x8x8xf32> to vector<1x8xf32>
    %54 = vector.shape_cast %53 : vector<1x8xf32> to vector<1x8x1xf32>
    %55 = vector.broadcast %54 : vector<1x8x1xf32> to vector<1x8x8xf32>
    %56 = arith.subf %52, %55 : vector<1x8x8xf32>
    %57 = math.exp %56 : vector<1x8x8xf32>
    %cst_19 = arith.constant dense<0.000000e+00> : vector<1x8xf32>
    %58 = vector.multi_reduction <add>, %57, %cst_19 [2] : vector<1x8x8xf32> to vector<1x8xf32>
    %59 = vector.shape_cast %58 : vector<1x8xf32> to vector<1x8x1xf32>
    %60 = tpu.reciprocal %59 {approx = true} : vector<1x8x1xf32> -> vector<1x8x1xf32>
    %61 = vector.broadcast %60 : vector<1x8x1xf32> to vector<1x8x8xf32>
    %62 = arith.mulf %57, %61 : vector<1x8x8xf32>
    %63 = arith.truncf %62 : vector<1x8x8xf32> to vector<1x8x8xbf16>
    "tpu.trace_start"() <{level = 10 : i32, message = "bqk,bkd->bqd"}> : () -> ()
    %cst_20 = arith.constant dense<0.000000e+00> : vector<1x8x8xf32>
    %64 = tpu.matmul %63, %46, %cst_20 {dimension_numbers = #tpu.dot_dimension_numbers<[2], [1], [1], [2], [0, 0, 0, 1, 1, 2], [0], [0]>} : vector<1x8x8xbf16>, vector<1x8x8xbf16>, vector<1x8x8xf32> -> vector<1x8x8xf32>
    "tpu.trace_stop"() : () -> ()
    %65 = vector.extract_strided_slice %36 {offsets = [0, 0, 8], sizes = [1, 8, 8], strides = [1, 1, 1]} : vector<1x8x32xf32> to vector<1x8x8xf32>
    %66 = arith.truncf %65 : vector<1x8x8xf32> to vector<1x8x8xbf16>
    %67 = vector.extract_strided_slice %38 {offsets = [0, 0, 8], sizes = [1, 8, 8], strides = [1, 1, 1]} : vector<1x8x32xf32> to vector<1x8x8xf32>
    %68 = arith.truncf %67 : vector<1x8x8xf32> to vector<1x8x8xbf16>
    %69 = vector.extract_strided_slice %40 {offsets = [0, 0, 8], sizes = [1, 8, 8], strides = [1, 1, 1]} : vector<1x8x32xf32> to vector<1x8x8xf32>
    %70 = arith.truncf %69 : vector<1x8x8xf32> to vector<1x8x8xbf16>
    "tpu.trace_start"() <{level = 10 : i32, message = "bqd,bkd->bqk"}> : () -> ()
    %cst_21 = arith.constant dense<0.000000e+00> : vector<1x8x8xf32>
    %71 = tpu.matmul %66, %68, %cst_21 {dimension_numbers = #tpu.dot_dimension_numbers<[2], [2], [1], [1], [0, 0, 0, 1, 1, 1], [0], [0]>} : vector<1x8x8xbf16>, vector<1x8x8xbf16>, vector<1x8x8xf32> -> vector<1x8x8xf32>
    "tpu.trace_stop"() : () -> ()
    %cst_22 = arith.constant 0.353553385 : f32
    %72 = vector.broadcast %cst_22 : f32 to vector<1x8x8xf32>
    %73 = arith.mulf %71, %72 : vector<1x8x8xf32>
    %cst_23 = arith.constant -1.000000e+30 : f32
    %74 = vector.shape_cast %4 : vector<8x8xi1> to vector<1x8x8xi1>
    %75 = vector.broadcast %cst_23 : f32 to vector<1x8x8xf32>
    %76 = arith.select %74, %73, %75 : vector<1x8x8xi1>, vector<1x8x8xf32>
    %cst_24 = arith.constant dense<0xFF800000> : vector<1x8xf32>
    %77 = vector.multi_reduction <maximumf>, %76, %cst_24 [2] : vector<1x8x8xf32> to vector<1x8xf32>
    %78 = vector.shape_cast %77 : vector<1x8xf32> to vector<1x8x1xf32>
    %79 = vector.broadcast %78 : vector<1x8x1xf32> to vector<1x8x8xf32>
    %80 = arith.subf %76, %79 : vector<1x8x8xf32>
    %81 = math.exp %80 : vector<1x8x8xf32>
    %cst_25 = arith.constant dense<0.000000e+00> : vector<1x8xf32>
    %82 = vector.multi_reduction <add>, %81, %cst_25 [2] : vector<1x8x8xf32> to vector<1x8xf32>
    %83 = vector.shape_cast %82 : vector<1x8xf32> to vector<1x8x1xf32>
    %84 = tpu.reciprocal %83 {approx = true} : vector<1x8x1xf32> -> vector<1x8x1xf32>
    %85 = vector.broadcast %84 : vector<1x8x1xf32> to vector<1x8x8xf32>
    %86 = arith.mulf %81, %85 : vector<1x8x8xf32>
    %87 = arith.truncf %86 : vector<1x8x8xf32> to vector<1x8x8xbf16>
    "tpu.trace_start"() <{level = 10 : i32, message = "bqk,bkd->bqd"}> : () -> ()
    %cst_26 = arith.constant dense<0.000000e+00> : vector<1x8x8xf32>
    %88 = tpu.matmul %87, %70, %cst_26 {dimension_numbers = #tpu.dot_dimension_numbers<[2], [1], [1], [2], [0, 0, 0, 1, 1, 2], [0], [0]>} : vector<1x8x8xbf16>, vector<1x8x8xbf16>, vector<1x8x8xf32> -> vector<1x8x8xf32>
    "tpu.trace_stop"() : () -> ()
    %89 = vector.extract_strided_slice %36 {offsets = [0, 0, 16], sizes = [1, 8, 8], strides = [1, 1, 1]} : vector<1x8x32xf32> to vector<1x8x8xf32>
    %90 = arith.truncf %89 : vector<1x8x8xf32> to vector<1x8x8xbf16>
    %91 = vector.extract_strided_slice %38 {offsets = [0, 0, 16], sizes = [1, 8, 8], strides = [1, 1, 1]} : vector<1x8x32xf32> to vector<1x8x8xf32>
    %92 = arith.truncf %91 : vector<1x8x8xf32> to vector<1x8x8xbf16>
    %93 = vector.extract_strided_slice %40 {offsets = [0, 0, 16], sizes = [1, 8, 8], strides = [1, 1, 1]} : vector<1x8x32xf32> to vector<1x8x8xf32>
    %94 = arith.truncf %93 : vector<1x8x8xf32> to vector<1x8x8xbf16>
    "tpu.trace_start"() <{level = 10 : i32, message = "bqd,bkd->bqk"}> : () -> ()
    %cst_27 = arith.constant dense<0.000000e+00> : vector<1x8x8xf32>
    %95 = tpu.matmul %90, %92, %cst_27 {dimension_numbers = #tpu.dot_dimension_numbers<[2], [2], [1], [1], [0, 0, 0, 1, 1, 1], [0], [0]>} : vector<1x8x8xbf16>, vector<1x8x8xbf16>, vector<1x8x8xf32> -> vector<1x8x8xf32>
    "tpu.trace_stop"() : () -> ()
    %cst_28 = arith.constant 0.353553385 : f32
    %96 = vector.broadcast %cst_28 : f32 to vector<1x8x8xf32>
    %97 = arith.mulf %95, %96 : vector<1x8x8xf32>
    %cst_29 = arith.constant -1.000000e+30 : f32
    %98 = vector.shape_cast %4 : vector<8x8xi1> to vector<1x8x8xi1>
    %99 = vector.broadcast %cst_29 : f32 to vector<1x8x8xf32>
    %100 = arith.select %98, %97, %99 : vector<1x8x8xi1>, vector<1x8x8xf32>
    %cst_30 = arith.constant dense<0xFF800000> : vector<1x8xf32>
    %101 = vector.multi_reduction <maximumf>, %100, %cst_30 [2] : vector<1x8x8xf32> to vector<1x8xf32>
    %102 = vector.shape_cast %101 : vector<1x8xf32> to vector<1x8x1xf32>
    %103 = vector.broadcast %102 : vector<1x8x1xf32> to vector<1x8x8xf32>
    %104 = arith.subf %100, %103 : vector<1x8x8xf32>
    %105 = math.exp %104 : vector<1x8x8xf32>
    %cst_31 = arith.constant dense<0.000000e+00> : vector<1x8xf32>
    %106 = vector.multi_reduction <add>, %105, %cst_31 [2] : vector<1x8x8xf32> to vector<1x8xf32>
    %107 = vector.shape_cast %106 : vector<1x8xf32> to vector<1x8x1xf32>
    %108 = tpu.reciprocal %107 {approx = true} : vector<1x8x1xf32> -> vector<1x8x1xf32>
    %109 = vector.broadcast %108 : vector<1x8x1xf32> to vector<1x8x8xf32>
    %110 = arith.mulf %105, %109 : vector<1x8x8xf32>
    %111 = arith.truncf %110 : vector<1x8x8xf32> to vector<1x8x8xbf16>
    "tpu.trace_start"() <{level = 10 : i32, message = "bqk,bkd->bqd"}> : () -> ()
    %cst_32 = arith.constant dense<0.000000e+00> : vector<1x8x8xf32>
    %112 = tpu.matmul %111, %94, %cst_32 {dimension_numbers = #tpu.dot_dimension_numbers<[2], [1], [1], [2], [0, 0, 0, 1, 1, 2], [0], [0]>} : vector<1x8x8xbf16>, vector<1x8x8xbf16>, vector<1x8x8xf32> -> vector<1x8x8xf32>
    "tpu.trace_stop"() : () -> ()
    %113 = vector.extract_strided_slice %36 {offsets = [0, 0, 24], sizes = [1, 8, 8], strides = [1, 1, 1]} : vector<1x8x32xf32> to vector<1x8x8xf32>
    %114 = arith.truncf %113 : vector<1x8x8xf32> to vector<1x8x8xbf16>
    %115 = vector.extract_strided_slice %38 {offsets = [0, 0, 24], sizes = [1, 8, 8], strides = [1, 1, 1]} : vector<1x8x32xf32> to vector<1x8x8xf32>
    %116 = arith.truncf %115 : vector<1x8x8xf32> to vector<1x8x8xbf16>
    %117 = vector.extract_strided_slice %40 {offsets = [0, 0, 24], sizes = [1, 8, 8], strides = [1, 1, 1]} : vector<1x8x32xf32> to vector<1x8x8xf32>
    %118 = arith.truncf %117 : vector<1x8x8xf32> to vector<1x8x8xbf16>
    "tpu.trace_start"() <{level = 10 : i32, message = "bqd,bkd->bqk"}> : () -> ()
    %cst_33 = arith.constant dense<0.000000e+00> : vector<1x8x8xf32>
    %119 = tpu.matmul %114, %116, %cst_33 {dimension_numbers = #tpu.dot_dimension_numbers<[2], [2], [1], [1], [0, 0, 0, 1, 1, 1], [0], [0]>} : vector<1x8x8xbf16>, vector<1x8x8xbf16>, vector<1x8x8xf32> -> vector<1x8x8xf32>
    "tpu.trace_stop"() : () -> ()
    %cst_34 = arith.constant 0.353553385 : f32
    %120 = vector.broadcast %cst_34 : f32 to vector<1x8x8xf32>
    %121 = arith.mulf %119, %120 : vector<1x8x8xf32>
    %cst_35 = arith.constant -1.000000e+30 : f32
    %122 = vector.shape_cast %4 : vector<8x8xi1> to vector<1x8x8xi1>
    %123 = vector.broadcast %cst_35 : f32 to vector<1x8x8xf32>
    %124 = arith.select %122, %121, %123 : vector<1x8x8xi1>, vector<1x8x8xf32>
    %cst_36 = arith.constant dense<0xFF800000> : vector<1x8xf32>
    %125 = vector.multi_reduction <maximumf>, %124, %cst_36 [2] : vector<1x8x8xf32> to vector<1x8xf32>
    %126 = vector.shape_cast %125 : vector<1x8xf32> to vector<1x8x1xf32>
    %127 = vector.broadcast %126 : vector<1x8x1xf32> to vector<1x8x8xf32>
    %128 = arith.subf %124, %127 : vector<1x8x8xf32>
    %129 = math.exp %128 : vector<1x8x8xf32>
    %cst_37 = arith.constant dense<0.000000e+00> : vector<1x8xf32>
    %130 = vector.multi_reduction <add>, %129, %cst_37 [2] : vector<1x8x8xf32> to vector<1x8xf32>
    %131 = vector.shape_cast %130 : vector<1x8xf32> to vector<1x8x1xf32>
    %132 = tpu.reciprocal %131 {approx = true} : vector<1x8x1xf32> -> vector<1x8x1xf32>
    %133 = vector.broadcast %132 : vector<1x8x1xf32> to vector<1x8x8xf32>
    %134 = arith.mulf %129, %133 : vector<1x8x8xf32>
    %135 = arith.truncf %134 : vector<1x8x8xf32> to vector<1x8x8xbf16>
    "tpu.trace_start"() <{level = 10 : i32, message = "bqk,bkd->bqd"}> : () -> ()
    %cst_38 = arith.constant dense<0.000000e+00> : vector<1x8x8xf32>
    %136 = tpu.matmul %135, %118, %cst_38 {dimension_numbers = #tpu.dot_dimension_numbers<[2], [1], [1], [2], [0, 0, 0, 1, 1, 2], [0], [0]>} : vector<1x8x8xbf16>, vector<1x8x8xbf16>, vector<1x8x8xf32> -> vector<1x8x8xf32>
    "tpu.trace_stop"() : () -> ()
    %137 = tpu.concatenate %64, %88, %112, %136 in 2 : vector<1x8x8xf32>, vector<1x8x8xf32>, vector<1x8x8xf32>, vector<1x8x8xf32> -> vector<1x8x32xf32>
    %138 = vector.shape_cast %137 : vector<1x8x32xf32> to vector<8x32xf32>
    %139 = arith.truncf %138 : vector<8x32xf32> to vector<8x32xbf16>
    %c0_39 = arith.constant 0 : index
    %c0_40 = arith.constant 0 : index
    %c0_41 = arith.constant 0 : index
    %140 = vector.load %arg5[%c0_39, %c0_40, %c0_41] : memref<2x32x32xbf16, #tpu.memory_space<vmem>>, vector<1x32x32xbf16>
    %141 = vector.shape_cast %140 : vector<1x32x32xbf16> to vector<32x32xbf16>
    %cst_42 = arith.constant dense<0.000000e+00> : vector<8x32xf32>
    %142 = tpu.matmul %139, %141, %cst_42 {dimension_numbers = #tpu.dot_dimension_numbers<[1], [0], [0], [1], [0, 0, 1, 1], [], []>} : vector<8x32xbf16>, vector<32x32xbf16>, vector<8x32xf32> -> vector<8x32xf32>
    %c0_43 = arith.constant 0 : index
    %c0_44 = arith.constant 0 : index
    %c0_45 = arith.constant 0 : index
    %143 = vector.load %arg6[%c0_43, %c0_44, %c0_45] : memref<2x1x32xf32, #tpu.memory_space<vmem>>, vector<1x1x32xf32>
    %144 = vector.shape_cast %143 : vector<1x1x32xf32> to vector<1x32xf32>
    %145 = vector.broadcast %144 : vector<1x32xf32> to vector<8x32xf32>
    %146 = arith.addf %142, %145 : vector<8x32xf32>
    %147 = arith.addf %1, %146 : vector<8x32xf32>
    %c0_46 = arith.constant 0 : index
    %c0_47 = arith.constant 0 : index
    %c0_48 = arith.constant 0 : index
    %148 = vector.load %arg7[%c0_46, %c0_47, %c0_48] : memref<2x1x32xf32, #tpu.memory_space<vmem>>, vector<1x1x32xf32>
    %149 = vector.shape_cast %148 : vector<1x1x32xf32> to vector<1x32xf32>
    %c0_49 = arith.constant 0 : index
    %c0_50 = arith.constant 0 : index
    %c0_51 = arith.constant 0 : index
    %150 = vector.load %arg8[%c0_49, %c0_50, %c0_51] : memref<2x1x32xf32, #tpu.memory_space<vmem>>, vector<1x1x32xf32>
    %151 = vector.shape_cast %150 : vector<1x1x32xf32> to vector<1x32xf32>
    %cst_52 = arith.constant dense<0.000000e+00> : vector<8xf32>
    %152 = vector.multi_reduction <add>, %147, %cst_52 [1] : vector<8x32xf32> to vector<8xf32>
    %153 = vector.shape_cast %152 : vector<8xf32> to vector<8x1xf32>
    %cst_53 = arith.constant 3.200000e+01 : f32
    %154 = vector.broadcast %cst_53 : f32 to vector<8x1xf32>
    %155 = arith.divf %153, %154 : vector<8x1xf32>
    %156 = vector.broadcast %155 : vector<8x1xf32> to vector<8x32xf32>
    %157 = arith.subf %147, %156 : vector<8x32xf32>
    %158 = arith.mulf %157, %157 : vector<8x32xf32>
    %cst_54 = arith.constant dense<0.000000e+00> : vector<8xf32>
    %159 = vector.multi_reduction <add>, %158, %cst_54 [1] : vector<8x32xf32> to vector<8xf32>
    %160 = vector.shape_cast %159 : vector<8xf32> to vector<8x1xf32>
    %cst_55 = arith.constant 3.200000e+01 : f32
    %161 = vector.broadcast %cst_55 : f32 to vector<8x1xf32>
    %162 = arith.divf %160, %161 : vector<8x1xf32>
    %163 = vector.broadcast %155 : vector<8x1xf32> to vector<8x32xf32>
    %164 = arith.subf %147, %163 : vector<8x32xf32>
    %cst_56 = arith.constant 9.99999974E-6 : f32
    %165 = vector.broadcast %cst_56 : f32 to vector<8x1xf32>
    %166 = arith.addf %162, %165 : vector<8x1xf32>
    %167 = math.rsqrt %166 : vector<8x1xf32>
    %168 = vector.broadcast %167 : vector<8x1xf32> to vector<8x32xf32>
    %169 = arith.mulf %164, %168 : vector<8x32xf32>
    %170 = vector.broadcast %149 : vector<1x32xf32> to vector<8x32xf32>
    %171 = arith.mulf %169, %170 : vector<8x32xf32>
    %172 = vector.broadcast %151 : vector<1x32xf32> to vector<8x32xf32>
    %173 = arith.addf %171, %172 : vector<8x32xf32>
    %174 = arith.truncf %173 : vector<8x32xf32> to vector<8x32xbf16>
    %c0_57 = arith.constant 0 : index
    %c0_58 = arith.constant 0 : index
    %c0_59 = arith.constant 0 : index
    %175 = vector.load %arg9[%c0_57, %c0_58, %c0_59] : memref<2x32x128xbf16, #tpu.memory_space<vmem>>, vector<1x32x128xbf16>
    %176 = vector.shape_cast %175 : vector<1x32x128xbf16> to vector<32x128xbf16>
    %cst_60 = arith.constant dense<0.000000e+00> : vector<8x128xf32>
    %177 = tpu.matmul %174, %176, %cst_60 {dimension_numbers = #tpu.dot_dimension_numbers<[1], [0], [0], [1], [0, 0, 1, 1], [], []>} : vector<8x32xbf16>, vector<32x128xbf16>, vector<8x128xf32> -> vector<8x128xf32>
    %c0_61 = arith.constant 0 : index
    %c0_62 = arith.constant 0 : index
    %c0_63 = arith.constant 0 : index
    %178 = vector.load %arg10[%c0_61, %c0_62, %c0_63] : memref<2x1x128xf32, #tpu.memory_space<vmem>>, vector<1x1x128xf32>
    %179 = vector.shape_cast %178 : vector<1x1x128xf32> to vector<1x128xf32>
    %180 = vector.broadcast %179 : vector<1x128xf32> to vector<8x128xf32>
    %181 = arith.addf %177, %180 : vector<8x128xf32>
    %cst_64 = arith.constant 0.000000e+00 : f32
    %182 = vector.broadcast %cst_64 : f32 to vector<8x128xf32>
    %183 = arith.maximumf %181, %182 : vector<8x128xf32>
    %184 = arith.truncf %183 : vector<8x128xf32> to vector<8x128xbf16>
    %c0_65 = arith.constant 0 : index
    %c0_66 = arith.constant 0 : index
    %c0_67 = arith.constant 0 : index
    %185 = vector.load %arg11[%c0_65, %c0_66, %c0_67] : memref<2x128x32xbf16, #tpu.memory_space<vmem>>, vector<1x128x32xbf16>
    %186 = vector.shape_cast %185 : vector<1x128x32xbf16> to vector<128x32xbf16>
    %cst_68 = arith.constant dense<0.000000e+00> : vector<8x32xf32>
    %187 = tpu.matmul %184, %186, %cst_68 {dimension_numbers = #tpu.dot_dimension_numbers<[1], [0], [0], [1], [0, 0, 1, 1], [], []>} : vector<8x128xbf16>, vector<128x32xbf16>, vector<8x32xf32> -> vector<8x32xf32>
    %c0_69 = arith.constant 0 : index
    %c0_70 = arith.constant 0 : index
    %c0_71 = arith.constant 0 : index
    %188 = vector.load %arg12[%c0_69, %c0_70, %c0_71] : memref<2x1x32xf32, #tpu.memory_space<vmem>>, vector<1x1x32xf32>
    %189 = vector.shape_cast %188 : vector<1x1x32xf32> to vector<1x32xf32>
    %190 = vector.broadcast %189 : vector<1x32xf32> to vector<8x32xf32>
    %191 = arith.addf %187, %190 : vector<8x32xf32>
    %192 = arith.addf %147, %191 : vector<8x32xf32>
    %c1 = arith.constant 1 : index
    %c0_72 = arith.constant 0 : index
    %c0_73 = arith.constant 0 : index
    %193 = vector.load %arg2[%c1, %c0_72, %c0_73] : memref<2x1x32xf32, #tpu.memory_space<vmem>>, vector<1x1x32xf32>
    %194 = vector.shape_cast %193 : vector<1x1x32xf32> to vector<1x32xf32>
    %c1_74 = arith.constant 1 : index
    %c0_75 = arith.constant 0 : index
    %c0_76 = arith.constant 0 : index
    %195 = vector.load %arg3[%c1_74, %c0_75, %c0_76] : memref<2x1x32xf32, #tpu.memory_space<vmem>>, vector<1x1x32xf32>
    %196 = vector.shape_cast %195 : vector<1x1x32xf32> to vector<1x32xf32>
    %cst_77 = arith.constant dense<0.000000e+00> : vector<8xf32>
    %197 = vector.multi_reduction <add>, %192, %cst_77 [1] : vector<8x32xf32> to vector<8xf32>
    %198 = vector.shape_cast %197 : vector<8xf32> to vector<8x1xf32>
    %cst_78 = arith.constant 3.200000e+01 : f32
    %199 = vector.broadcast %cst_78 : f32 to vector<8x1xf32>
    %200 = arith.divf %198, %199 : vector<8x1xf32>
    %201 = vector.broadcast %200 : vector<8x1xf32> to vector<8x32xf32>
    %202 = arith.subf %192, %201 : vector<8x32xf32>
    %203 = arith.mulf %202, %202 : vector<8x32xf32>
    %cst_79 = arith.constant dense<0.000000e+00> : vector<8xf32>
    %204 = vector.multi_reduction <add>, %203, %cst_79 [1] : vector<8x32xf32> to vector<8xf32>
    %205 = vector.shape_cast %204 : vector<8xf32> to vector<8x1xf32>
    %cst_80 = arith.constant 3.200000e+01 : f32
    %206 = vector.broadcast %cst_80 : f32 to vector<8x1xf32>
    %207 = arith.divf %205, %206 : vector<8x1xf32>
    %208 = vector.broadcast %200 : vector<8x1xf32> to vector<8x32xf32>
    %209 = arith.subf %192, %208 : vector<8x32xf32>
    %cst_81 = arith.constant 9.99999974E-6 : f32
    %210 = vector.broadcast %cst_81 : f32 to vector<8x1xf32>
    %211 = arith.addf %207, %210 : vector<8x1xf32>
    %212 = math.rsqrt %211 : vector<8x1xf32>
    %213 = vector.broadcast %212 : vector<8x1xf32> to vector<8x32xf32>
    %214 = arith.mulf %209, %213 : vector<8x32xf32>
    %215 = vector.broadcast %194 : vector<1x32xf32> to vector<8x32xf32>
    %216 = arith.mulf %214, %215 : vector<8x32xf32>
    %217 = vector.broadcast %196 : vector<1x32xf32> to vector<8x32xf32>
    %218 = arith.addf %216, %217 : vector<8x32xf32>
    %219 = arith.truncf %218 : vector<8x32xf32> to vector<8x32xbf16>
    %c1_82 = arith.constant 1 : index
    %c0_83 = arith.constant 0 : index
    %c0_84 = arith.constant 0 : index
    %220 = vector.load %arg4[%c1_82, %c0_83, %c0_84] : memref<2x32x96xbf16, #tpu.memory_space<vmem>>, vector<1x32x96xbf16>
    %221 = vector.shape_cast %220 : vector<1x32x96xbf16> to vector<32x96xbf16>
    %cst_85 = arith.constant dense<0.000000e+00> : vector<8x96xf32>
    %222 = tpu.matmul %219, %221, %cst_85 {dimension_numbers = #tpu.dot_dimension_numbers<[1], [0], [0], [1], [0, 0, 1, 1], [], []>} : vector<8x32xbf16>, vector<32x96xbf16>, vector<8x96xf32> -> vector<8x96xf32>
    %223 = vector.extract_strided_slice %222 {offsets = [0, 0], sizes = [8, 32], strides = [1, 1]} : vector<8x96xf32> to vector<8x32xf32>
    %224 = vector.shape_cast %223 : vector<8x32xf32> to vector<1x8x32xf32>
    %225 = vector.extract_strided_slice %222 {offsets = [0, 32], sizes = [8, 32], strides = [1, 1]} : vector<8x96xf32> to vector<8x32xf32>
    %226 = vector.shape_cast %225 : vector<8x32xf32> to vector<1x8x32xf32>
    %227 = vector.extract_strided_slice %222 {offsets = [0, 64], sizes = [8, 32], strides = [1, 1]} : vector<8x96xf32> to vector<8x32xf32>
    %228 = vector.shape_cast %227 : vector<8x32xf32> to vector<1x8x32xf32>
    %229 = vector.extract_strided_slice %224 {offsets = [0, 0, 0], sizes = [1, 8, 8], strides = [1, 1, 1]} : vector<1x8x32xf32> to vector<1x8x8xf32>
    %230 = arith.truncf %229 : vector<1x8x8xf32> to vector<1x8x8xbf16>
    %231 = vector.extract_strided_slice %226 {offsets = [0, 0, 0], sizes = [1, 8, 8], strides = [1, 1, 1]} : vector<1x8x32xf32> to vector<1x8x8xf32>
    %232 = arith.truncf %231 : vector<1x8x8xf32> to vector<1x8x8xbf16>
    %233 = vector.extract_strided_slice %228 {offsets = [0, 0, 0], sizes = [1, 8, 8], strides = [1, 1, 1]} : vector<1x8x32xf32> to vector<1x8x8xf32>
    %234 = arith.truncf %233 : vector<1x8x8xf32> to vector<1x8x8xbf16>
    "tpu.trace_start"() <{level = 10 : i32, message = "bqd,bkd->bqk"}> : () -> ()
    %cst_86 = arith.constant dense<0.000000e+00> : vector<1x8x8xf32>
    %235 = tpu.matmul %230, %232, %cst_86 {dimension_numbers = #tpu.dot_dimension_numbers<[2], [2], [1], [1], [0, 0, 0, 1, 1, 1], [0], [0]>} : vector<1x8x8xbf16>, vector<1x8x8xbf16>, vector<1x8x8xf32> -> vector<1x8x8xf32>
    "tpu.trace_stop"() : () -> ()
    %cst_87 = arith.constant 0.353553385 : f32
    %236 = vector.broadcast %cst_87 : f32 to vector<1x8x8xf32>
    %237 = arith.mulf %235, %236 : vector<1x8x8xf32>
    %cst_88 = arith.constant -1.000000e+30 : f32
    %238 = vector.shape_cast %4 : vector<8x8xi1> to vector<1x8x8xi1>
    %239 = vector.broadcast %cst_88 : f32 to vector<1x8x8xf32>
    %240 = arith.select %238, %237, %239 : vector<1x8x8xi1>, vector<1x8x8xf32>
    %cst_89 = arith.constant dense<0xFF800000> : vector<1x8xf32>
    %241 = vector.multi_reduction <maximumf>, %240, %cst_89 [2] : vector<1x8x8xf32> to vector<1x8xf32>
    %242 = vector.shape_cast %241 : vector<1x8xf32> to vector<1x8x1xf32>
    %243 = vector.broadcast %242 : vector<1x8x1xf32> to vector<1x8x8xf32>
    %244 = arith.subf %240, %243 : vector<1x8x8xf32>
    %245 = math.exp %244 : vector<1x8x8xf32>
    %cst_90 = arith.constant dense<0.000000e+00> : vector<1x8xf32>
    %246 = vector.multi_reduction <add>, %245, %cst_90 [2] : vector<1x8x8xf32> to vector<1x8xf32>
    %247 = vector.shape_cast %246 : vector<1x8xf32> to vector<1x8x1xf32>
    %248 = tpu.reciprocal %247 {approx = true} : vector<1x8x1xf32> -> vector<1x8x1xf32>
    %249 = vector.broadcast %248 : vector<1x8x1xf32> to vector<1x8x8xf32>
    %250 = arith.mulf %245, %249 : vector<1x8x8xf32>
    %251 = arith.truncf %250 : vector<1x8x8xf32> to vector<1x8x8xbf16>
    "tpu.trace_start"() <{level = 10 : i32, message = "bqk,bkd->bqd"}> : () -> ()
    %cst_91 = arith.constant dense<0.000000e+00> : vector<1x8x8xf32>
    %252 = tpu.matmul %251, %234, %cst_91 {dimension_numbers = #tpu.dot_dimension_numbers<[2], [1], [1], [2], [0, 0, 0, 1, 1, 2], [0], [0]>} : vector<1x8x8xbf16>, vector<1x8x8xbf16>, vector<1x8x8xf32> -> vector<1x8x8xf32>
    "tpu.trace_stop"() : () -> ()
    %253 = vector.extract_strided_slice %224 {offsets = [0, 0, 8], sizes = [1, 8, 8], strides = [1, 1, 1]} : vector<1x8x32xf32> to vector<1x8x8xf32>
    %254 = arith.truncf %253 : vector<1x8x8xf32> to vector<1x8x8xbf16>
    %255 = vector.extract_strided_slice %226 {offsets = [0, 0, 8], sizes = [1, 8, 8], strides = [1, 1, 1]} : vector<1x8x32xf32> to vector<1x8x8xf32>
    %256 = arith.truncf %255 : vector<1x8x8xf32> to vector<1x8x8xbf16>
    %257 = vector.extract_strided_slice %228 {offsets = [0, 0, 8], sizes = [1, 8, 8], strides = [1, 1, 1]} : vector<1x8x32xf32> to vector<1x8x8xf32>
    %258 = arith.truncf %257 : vector<1x8x8xf32> to vector<1x8x8xbf16>
    "tpu.trace_start"() <{level = 10 : i32, message = "bqd,bkd->bqk"}> : () -> ()
    %cst_92 = arith.constant dense<0.000000e+00> : vector<1x8x8xf32>
    %259 = tpu.matmul %254, %256, %cst_92 {dimension_numbers = #tpu.dot_dimension_numbers<[2], [2], [1], [1], [0, 0, 0, 1, 1, 1], [0], [0]>} : vector<1x8x8xbf16>, vector<1x8x8xbf16>, vector<1x8x8xf32> -> vector<1x8x8xf32>
    "tpu.trace_stop"() : () -> ()
    %cst_93 = arith.constant 0.353553385 : f32
    %260 = vector.broadcast %cst_93 : f32 to vector<1x8x8xf32>
    %261 = arith.mulf %259, %260 : vector<1x8x8xf32>
    %cst_94 = arith.constant -1.000000e+30 : f32
    %262 = vector.shape_cast %4 : vector<8x8xi1> to vector<1x8x8xi1>
    %263 = vector.broadcast %cst_94 : f32 to vector<1x8x8xf32>
    %264 = arith.select %262, %261, %263 : vector<1x8x8xi1>, vector<1x8x8xf32>
    %cst_95 = arith.constant dense<0xFF800000> : vector<1x8xf32>
    %265 = vector.multi_reduction <maximumf>, %264, %cst_95 [2] : vector<1x8x8xf32> to vector<1x8xf32>
    %266 = vector.shape_cast %265 : vector<1x8xf32> to vector<1x8x1xf32>
    %267 = vector.broadcast %266 : vector<1x8x1xf32> to vector<1x8x8xf32>
    %268 = arith.subf %264, %267 : vector<1x8x8xf32>
    %269 = math.exp %268 : vector<1x8x8xf32>
    %cst_96 = arith.constant dense<0.000000e+00> : vector<1x8xf32>
    %270 = vector.multi_reduction <add>, %269, %cst_96 [2] : vector<1x8x8xf32> to vector<1x8xf32>
    %271 = vector.shape_cast %270 : vector<1x8xf32> to vector<1x8x1xf32>
    %272 = tpu.reciprocal %271 {approx = true} : vector<1x8x1xf32> -> vector<1x8x1xf32>
    %273 = vector.broadcast %272 : vector<1x8x1xf32> to vector<1x8x8xf32>
    %274 = arith.mulf %269, %273 : vector<1x8x8xf32>
    %275 = arith.truncf %274 : vector<1x8x8xf32> to vector<1x8x8xbf16>
    "tpu.trace_start"() <{level = 10 : i32, message = "bqk,bkd->bqd"}> : () -> ()
    %cst_97 = arith.constant dense<0.000000e+00> : vector<1x8x8xf32>
    %276 = tpu.matmul %275, %258, %cst_97 {dimension_numbers = #tpu.dot_dimension_numbers<[2], [1], [1], [2], [0, 0, 0, 1, 1, 2], [0], [0]>} : vector<1x8x8xbf16>, vector<1x8x8xbf16>, vector<1x8x8xf32> -> vector<1x8x8xf32>
    "tpu.trace_stop"() : () -> ()
    %277 = vector.extract_strided_slice %224 {offsets = [0, 0, 16], sizes = [1, 8, 8], strides = [1, 1, 1]} : vector<1x8x32xf32> to vector<1x8x8xf32>
    %278 = arith.truncf %277 : vector<1x8x8xf32> to vector<1x8x8xbf16>
    %279 = vector.extract_strided_slice %226 {offsets = [0, 0, 16], sizes = [1, 8, 8], strides = [1, 1, 1]} : vector<1x8x32xf32> to vector<1x8x8xf32>
    %280 = arith.truncf %279 : vector<1x8x8xf32> to vector<1x8x8xbf16>
    %281 = vector.extract_strided_slice %228 {offsets = [0, 0, 16], sizes = [1, 8, 8], strides = [1, 1, 1]} : vector<1x8x32xf32> to vector<1x8x8xf32>
    %282 = arith.truncf %281 : vector<1x8x8xf32> to vector<1x8x8xbf16>
    "tpu.trace_start"() <{level = 10 : i32, message = "bqd,bkd->bqk"}> : () -> ()
    %cst_98 = arith.constant dense<0.000000e+00> : vector<1x8x8xf32>
    %283 = tpu.matmul %278, %280, %cst_98 {dimension_numbers = #tpu.dot_dimension_numbers<[2], [2], [1], [1], [0, 0, 0, 1, 1, 1], [0], [0]>} : vector<1x8x8xbf16>, vector<1x8x8xbf16>, vector<1x8x8xf32> -> vector<1x8x8xf32>
    "tpu.trace_stop"() : () -> ()
    %cst_99 = arith.constant 0.353553385 : f32
    %284 = vector.broadcast %cst_99 : f32 to vector<1x8x8xf32>
    %285 = arith.mulf %283, %284 : vector<1x8x8xf32>
    %cst_100 = arith.constant -1.000000e+30 : f32
    %286 = vector.shape_cast %4 : vector<8x8xi1> to vector<1x8x8xi1>
    %287 = vector.broadcast %cst_100 : f32 to vector<1x8x8xf32>
    %288 = arith.select %286, %285, %287 : vector<1x8x8xi1>, vector<1x8x8xf32>
    %cst_101 = arith.constant dense<0xFF800000> : vector<1x8xf32>
    %289 = vector.multi_reduction <maximumf>, %288, %cst_101 [2] : vector<1x8x8xf32> to vector<1x8xf32>
    %290 = vector.shape_cast %289 : vector<1x8xf32> to vector<1x8x1xf32>
    %291 = vector.broadcast %290 : vector<1x8x1xf32> to vector<1x8x8xf32>
    %292 = arith.subf %288, %291 : vector<1x8x8xf32>
    %293 = math.exp %292 : vector<1x8x8xf32>
    %cst_102 = arith.constant dense<0.000000e+00> : vector<1x8xf32>
    %294 = vector.multi_reduction <add>, %293, %cst_102 [2] : vector<1x8x8xf32> to vector<1x8xf32>
    %295 = vector.shape_cast %294 : vector<1x8xf32> to vector<1x8x1xf32>
    %296 = tpu.reciprocal %295 {approx = true} : vector<1x8x1xf32> -> vector<1x8x1xf32>
    %297 = vector.broadcast %296 : vector<1x8x1xf32> to vector<1x8x8xf32>
    %298 = arith.mulf %293, %297 : vector<1x8x8xf32>
    %299 = arith.truncf %298 : vector<1x8x8xf32> to vector<1x8x8xbf16>
    "tpu.trace_start"() <{level = 10 : i32, message = "bqk,bkd->bqd"}> : () -> ()
    %cst_103 = arith.constant dense<0.000000e+00> : vector<1x8x8xf32>
    %300 = tpu.matmul %299, %282, %cst_103 {dimension_numbers = #tpu.dot_dimension_numbers<[2], [1], [1], [2], [0, 0, 0, 1, 1, 2], [0], [0]>} : vector<1x8x8xbf16>, vector<1x8x8xbf16>, vector<1x8x8xf32> -> vector<1x8x8xf32>
    "tpu.trace_stop"() : () -> ()
    %301 = vector.extract_strided_slice %224 {offsets = [0, 0, 24], sizes = [1, 8, 8], strides = [1, 1, 1]} : vector<1x8x32xf32> to vector<1x8x8xf32>
    %302 = arith.truncf %301 : vector<1x8x8xf32> to vector<1x8x8xbf16>
    %303 = vector.extract_strided_slice %226 {offsets = [0, 0, 24], sizes = [1, 8, 8], strides = [1, 1, 1]} : vector<1x8x32xf32> to vector<1x8x8xf32>
    %304 = arith.truncf %303 : vector<1x8x8xf32> to vector<1x8x8xbf16>
    %305 = vector.extract_strided_slice %228 {offsets = [0, 0, 24], sizes = [1, 8, 8], strides = [1, 1, 1]} : vector<1x8x32xf32> to vector<1x8x8xf32>
    %306 = arith.truncf %305 : vector<1x8x8xf32> to vector<1x8x8xbf16>
    "tpu.trace_start"() <{level = 10 : i32, message = "bqd,bkd->bqk"}> : () -> ()
    %cst_104 = arith.constant dense<0.000000e+00> : vector<1x8x8xf32>
    %307 = tpu.matmul %302, %304, %cst_104 {dimension_numbers = #tpu.dot_dimension_numbers<[2], [2], [1], [1], [0, 0, 0, 1, 1, 1], [0], [0]>} : vector<1x8x8xbf16>, vector<1x8x8xbf16>, vector<1x8x8xf32> -> vector<1x8x8xf32>
    "tpu.trace_stop"() : () -> ()
    %cst_105 = arith.constant 0.353553385 : f32
    %308 = vector.broadcast %cst_105 : f32 to vector<1x8x8xf32>
    %309 = arith.mulf %307, %308 : vector<1x8x8xf32>
    %cst_106 = arith.constant -1.000000e+30 : f32
    %310 = vector.shape_cast %4 : vector<8x8xi1> to vector<1x8x8xi1>
    %311 = vector.broadcast %cst_106 : f32 to vector<1x8x8xf32>
    %312 = arith.select %310, %309, %311 : vector<1x8x8xi1>, vector<1x8x8xf32>
    %cst_107 = arith.constant dense<0xFF800000> : vector<1x8xf32>
    %313 = vector.multi_reduction <maximumf>, %312, %cst_107 [2] : vector<1x8x8xf32> to vector<1x8xf32>
    %314 = vector.shape_cast %313 : vector<1x8xf32> to vector<1x8x1xf32>
    %315 = vector.broadcast %314 : vector<1x8x1xf32> to vector<1x8x8xf32>
    %316 = arith.subf %312, %315 : vector<1x8x8xf32>
    %317 = math.exp %316 : vector<1x8x8xf32>
    %cst_108 = arith.constant dense<0.000000e+00> : vector<1x8xf32>
    %318 = vector.multi_reduction <add>, %317, %cst_108 [2] : vector<1x8x8xf32> to vector<1x8xf32>
    %319 = vector.shape_cast %318 : vector<1x8xf32> to vector<1x8x1xf32>
    %320 = tpu.reciprocal %319 {approx = true} : vector<1x8x1xf32> -> vector<1x8x1xf32>
    %321 = vector.broadcast %320 : vector<1x8x1xf32> to vector<1x8x8xf32>
    %322 = arith.mulf %317, %321 : vector<1x8x8xf32>
    %323 = arith.truncf %322 : vector<1x8x8xf32> to vector<1x8x8xbf16>
    "tpu.trace_start"() <{level = 10 : i32, message = "bqk,bkd->bqd"}> : () -> ()
    %cst_109 = arith.constant dense<0.000000e+00> : vector<1x8x8xf32>
    %324 = tpu.matmul %323, %306, %cst_109 {dimension_numbers = #tpu.dot_dimension_numbers<[2], [1], [1], [2], [0, 0, 0, 1, 1, 2], [0], [0]>} : vector<1x8x8xbf16>, vector<1x8x8xbf16>, vector<1x8x8xf32> -> vector<1x8x8xf32>
    "tpu.trace_stop"() : () -> ()
    %325 = tpu.concatenate %252, %276, %300, %324 in 2 : vector<1x8x8xf32>, vector<1x8x8xf32>, vector<1x8x8xf32>, vector<1x8x8xf32> -> vector<1x8x32xf32>
    %326 = vector.shape_cast %325 : vector<1x8x32xf32> to vector<8x32xf32>
    %327 = arith.truncf %326 : vector<8x32xf32> to vector<8x32xbf16>
    %c1_110 = arith.constant 1 : index
    %c0_111 = arith.constant 0 : index
    %c0_112 = arith.constant 0 : index
    %328 = vector.load %arg5[%c1_110, %c0_111, %c0_112] : memref<2x32x32xbf16, #tpu.memory_space<vmem>>, vector<1x32x32xbf16>
    %329 = vector.shape_cast %328 : vector<1x32x32xbf16> to vector<32x32xbf16>
    %cst_113 = arith.constant dense<0.000000e+00> : vector<8x32xf32>
    %330 = tpu.matmul %327, %329, %cst_113 {dimension_numbers = #tpu.dot_dimension_numbers<[1], [0], [0], [1], [0, 0, 1, 1], [], []>} : vector<8x32xbf16>, vector<32x32xbf16>, vector<8x32xf32> -> vector<8x32xf32>
    %c1_114 = arith.constant 1 : index
    %c0_115 = arith.constant 0 : index
    %c0_116 = arith.constant 0 : index
    %331 = vector.load %arg6[%c1_114, %c0_115, %c0_116] : memref<2x1x32xf32, #tpu.memory_space<vmem>>, vector<1x1x32xf32>
    %332 = vector.shape_cast %331 : vector<1x1x32xf32> to vector<1x32xf32>
    %333 = vector.broadcast %332 : vector<1x32xf32> to vector<8x32xf32>
    %334 = arith.addf %330, %333 : vector<8x32xf32>
    %335 = arith.addf %192, %334 : vector<8x32xf32>
    %c1_117 = arith.constant 1 : index
    %c0_118 = arith.constant 0 : index
    %c0_119 = arith.constant 0 : index
    %336 = vector.load %arg7[%c1_117, %c0_118, %c0_119] : memref<2x1x32xf32, #tpu.memory_space<vmem>>, vector<1x1x32xf32>
    %337 = vector.shape_cast %336 : vector<1x1x32xf32> to vector<1x32xf32>
    %c1_120 = arith.constant 1 : index
    %c0_121 = arith.constant 0 : index
    %c0_122 = arith.constant 0 : index
    %338 = vector.load %arg8[%c1_120, %c0_121, %c0_122] : memref<2x1x32xf32, #tpu.memory_space<vmem>>, vector<1x1x32xf32>
    %339 = vector.shape_cast %338 : vector<1x1x32xf32> to vector<1x32xf32>
    %cst_123 = arith.constant dense<0.000000e+00> : vector<8xf32>
    %340 = vector.multi_reduction <add>, %335, %cst_123 [1] : vector<8x32xf32> to vector<8xf32>
    %341 = vector.shape_cast %340 : vector<8xf32> to vector<8x1xf32>
    %cst_124 = arith.constant 3.200000e+01 : f32
    %342 = vector.broadcast %cst_124 : f32 to vector<8x1xf32>
    %343 = arith.divf %341, %342 : vector<8x1xf32>
    %344 = vector.broadcast %343 : vector<8x1xf32> to vector<8x32xf32>
    %345 = arith.subf %335, %344 : vector<8x32xf32>
    %346 = arith.mulf %345, %345 : vector<8x32xf32>
    %cst_125 = arith.constant dense<0.000000e+00> : vector<8xf32>
    %347 = vector.multi_reduction <add>, %346, %cst_125 [1] : vector<8x32xf32> to vector<8xf32>
    %348 = vector.shape_cast %347 : vector<8xf32> to vector<8x1xf32>
    %cst_126 = arith.constant 3.200000e+01 : f32
    %349 = vector.broadcast %cst_126 : f32 to vector<8x1xf32>
    %350 = arith.divf %348, %349 : vector<8x1xf32>
    %351 = vector.broadcast %343 : vector<8x1xf32> to vector<8x32xf32>
    %352 = arith.subf %335, %351 : vector<8x32xf32>
    %cst_127 = arith.constant 9.99999974E-6 : f32
    %353 = vector.broadcast %cst_127 : f32 to vector<8x1xf32>
    %354 = arith.addf %350, %353 : vector<8x1xf32>
    %355 = math.rsqrt %354 : vector<8x1xf32>
    %356 = vector.broadcast %355 : vector<8x1xf32> to vector<8x32xf32>
    %357 = arith.mulf %352, %356 : vector<8x32xf32>
    %358 = vector.broadcast %337 : vector<1x32xf32> to vector<8x32xf32>
    %359 = arith.mulf %357, %358 : vector<8x32xf32>
    %360 = vector.broadcast %339 : vector<1x32xf32> to vector<8x32xf32>
    %361 = arith.addf %359, %360 : vector<8x32xf32>
    %362 = arith.truncf %361 : vector<8x32xf32> to vector<8x32xbf16>
    %c1_128 = arith.constant 1 : index
    %c0_129 = arith.constant 0 : index
    %c0_130 = arith.constant 0 : index
    %363 = vector.load %arg9[%c1_128, %c0_129, %c0_130] : memref<2x32x128xbf16, #tpu.memory_space<vmem>>, vector<1x32x128xbf16>
    %364 = vector.shape_cast %363 : vector<1x32x128xbf16> to vector<32x128xbf16>
    %cst_131 = arith.constant dense<0.000000e+00> : vector<8x128xf32>
    %365 = tpu.matmul %362, %364, %cst_131 {dimension_numbers = #tpu.dot_dimension_numbers<[1], [0], [0], [1], [0, 0, 1, 1], [], []>} : vector<8x32xbf16>, vector<32x128xbf16>, vector<8x128xf32> -> vector<8x128xf32>
    %c1_132 = arith.constant 1 : index
    %c0_133 = arith.constant 0 : index
    %c0_134 = arith.constant 0 : index
    %366 = vector.load %arg10[%c1_132, %c0_133, %c0_134] : memref<2x1x128xf32, #tpu.memory_space<vmem>>, vector<1x1x128xf32>
    %367 = vector.shape_cast %366 : vector<1x1x128xf32> to vector<1x128xf32>
    %368 = vector.broadcast %367 : vector<1x128xf32> to vector<8x128xf32>
    %369 = arith.addf %365, %368 : vector<8x128xf32>
    %cst_135 = arith.constant 0.000000e+00 : f32
    %370 = vector.broadcast %cst_135 : f32 to vector<8x128xf32>
    %371 = arith.maximumf %369, %370 : vector<8x128xf32>
    %372 = arith.truncf %371 : vector<8x128xf32> to vector<8x128xbf16>
    %c1_136 = arith.constant 1 : index
    %c0_137 = arith.constant 0 : index
    %c0_138 = arith.constant 0 : index
    %373 = vector.load %arg11[%c1_136, %c0_137, %c0_138] : memref<2x128x32xbf16, #tpu.memory_space<vmem>>, vector<1x128x32xbf16>
    %374 = vector.shape_cast %373 : vector<1x128x32xbf16> to vector<128x32xbf16>
    %cst_139 = arith.constant dense<0.000000e+00> : vector<8x32xf32>
    %375 = tpu.matmul %372, %374, %cst_139 {dimension_numbers = #tpu.dot_dimension_numbers<[1], [0], [0], [1], [0, 0, 1, 1], [], []>} : vector<8x128xbf16>, vector<128x32xbf16>, vector<8x32xf32> -> vector<8x32xf32>
    %c1_140 = arith.constant 1 : index
    %c0_141 = arith.constant 0 : index
    %c0_142 = arith.constant 0 : index
    %376 = vector.load %arg12[%c1_140, %c0_141, %c0_142] : memref<2x1x32xf32, #tpu.memory_space<vmem>>, vector<1x1x32xf32>
    %377 = vector.shape_cast %376 : vector<1x1x32xf32> to vector<1x32xf32>
    %378 = vector.broadcast %377 : vector<1x32xf32> to vector<8x32xf32>
    %379 = arith.addf %375, %378 : vector<8x32xf32>
    %380 = arith.addf %335, %379 : vector<8x32xf32>
    %c0_143 = arith.constant 0 : index
    %c0_144 = arith.constant 0 : index
    %381 = vector.load %arg13[%c0_143, %c0_144] : memref<1x32xf32, #tpu.memory_space<vmem>>, vector<1x32xf32>
    %c0_145 = arith.constant 0 : index
    %c0_146 = arith.constant 0 : index
    %382 = vector.load %arg14[%c0_145, %c0_146] : memref<1x32xf32, #tpu.memory_space<vmem>>, vector<1x32xf32>
    %cst_147 = arith.constant dense<0.000000e+00> : vector<8xf32>
    %383 = vector.multi_reduction <add>, %380, %cst_147 [1] : vector<8x32xf32> to vector<8xf32>
    %384 = vector.shape_cast %383 : vector<8xf32> to vector<8x1xf32>
    %cst_148 = arith.constant 3.200000e+01 : f32
    %385 = vector.broadcast %cst_148 : f32 to vector<8x1xf32>
    %386 = arith.divf %384, %385 : vector<8x1xf32>
    %387 = vector.broadcast %386 : vector<8x1xf32> to vector<8x32xf32>
    %388 = arith.subf %380, %387 : vector<8x32xf32>
    %389 = arith.mulf %388, %388 : vector<8x32xf32>
    %cst_149 = arith.constant dense<0.000000e+00> : vector<8xf32>
    %390 = vector.multi_reduction <add>, %389, %cst_149 [1] : vector<8x32xf32> to vector<8xf32>
    %391 = vector.shape_cast %390 : vector<8xf32> to vector<8x1xf32>
    %cst_150 = arith.constant 3.200000e+01 : f32
    %392 = vector.broadcast %cst_150 : f32 to vector<8x1xf32>
    %393 = arith.divf %391, %392 : vector<8x1xf32>
    %394 = vector.broadcast %386 : vector<8x1xf32> to vector<8x32xf32>
    %395 = arith.subf %380, %394 : vector<8x32xf32>
    %cst_151 = arith.constant 9.99999974E-6 : f32
    %396 = vector.broadcast %cst_151 : f32 to vector<8x1xf32>
    %397 = arith.addf %393, %396 : vector<8x1xf32>
    %398 = math.rsqrt %397 : vector<8x1xf32>
    %399 = vector.broadcast %398 : vector<8x1xf32> to vector<8x32xf32>
    %400 = arith.mulf %395, %399 : vector<8x32xf32>
    %401 = vector.broadcast %381 : vector<1x32xf32> to vector<8x32xf32>
    %402 = arith.mulf %400, %401 : vector<8x32xf32>
    %403 = vector.broadcast %382 : vector<1x32xf32> to vector<8x32xf32>
    %404 = arith.addf %402, %403 : vector<8x32xf32>
    %405 = arith.truncf %404 : vector<8x32xf32> to vector<8x32xbf16>
    %c0_152 = arith.constant 0 : index
    %c0_153 = arith.constant 0 : index
    %406 = vector.load %arg15[%c0_152, %c0_153] : memref<32x128xbf16, #tpu.memory_space<vmem>>, vector<32x128xbf16>
    %cst_154 = arith.constant dense<0.000000e+00> : vector<8x128xf32>
    %407 = tpu.matmul %405, %406, %cst_154 {dimension_numbers = #tpu.dot_dimension_numbers<[1], [0], [0], [1], [0, 0, 1, 1], [], []>} : vector<8x32xbf16>, vector<32x128xbf16>, vector<8x128xf32> -> vector<8x128xf32>
    %c0_155 = arith.constant 0 : index
    %c0_156 = arith.constant 0 : index
    %408 = vector.load %arg16[%c0_155, %c0_156] : memref<1x128xf32, #tpu.memory_space<vmem>>, vector<1x128xf32>
    %409 = vector.broadcast %408 : vector<1x128xf32> to vector<8x128xf32>
    %410 = arith.addf %407, %409 : vector<8x128xf32>
    %411 = arith.truncf %410 : vector<8x128xf32> to vector<8x128xbf16>
    %c0_157 = arith.constant 0 : index
    %c0_158 = arith.constant 0 : index
    %412 = vector.load %arg17[%c0_157, %c0_158] : memref<8x128xbf16, #tpu.memory_space<vmem>>, vector<8x128xbf16>
    tpu.vector_store %arg17[%c0_157, %c0_158], %411 {strides = array<i32>} : memref<8x128xbf16, #tpu.memory_space<vmem>>, vector<8x128xbf16>,
    return
  }
  func.func @transform_0(%arg0: i32) -> (i32, i32) {
    %c0_i32 = arith.constant 0 : i32
    %c0_i32_0 = arith.constant 0 : i32
    return %arg0, %c0_i32 : i32, i32
  }
  func.func @transform_1(%arg0: i32) -> (i32, i32, i32) {
    %c0_i32 = arith.constant 0 : i32
    %c0_i32_0 = arith.constant 0 : i32
    %c0_i32_1 = arith.constant 0 : i32
    %c0_i32_2 = arith.constant 0 : i32
    return %c0_i32, %c0_i32_0, %c0_i32_1 : i32, i32, i32
  }
  func.func @transform_2(%arg0: i32) -> (i32, i32, i32) {
    %c0_i32 = arith.constant 0 : i32
    %c0_i32_0 = arith.constant 0 : i32
    %c0_i32_1 = arith.constant 0 : i32
    %c0_i32_2 = arith.constant 0 : i32
    return %c0_i32, %c0_i32_0, %c0_i32_1 : i32, i32, i32
  }
  func.func @transform_3(%arg0: i32) -> (i32, i32, i32) {
    %c0_i32 = arith.constant 0 : i32
    %c0_i32_0 = arith.constant 0 : i32
    %c0_i32_1 = arith.constant 0 : i32
    %c0_i32_2 = arith.constant 0 : i32
    return %c0_i32, %c0_i32_0, %c0_i32_1 : i32, i32, i32
  }
  func.func @transform_4(%arg0: i32) -> (i32, i32, i32) {
    %c0_i32 = arith.constant 0 : i32
    %c0_i32_0 = arith.constant 0 : i32
    %c0_i32_1 = arith.constant 0 : i32
    %c0_i32_2 = arith.constant 0 : i32
    return %c0_i32, %c0_i32_0, %c0_i32_1 : i32, i32, i32
  }
  func.func @transform_5(%arg0: i32) -> (i32, i32, i32) {
    %c0_i32 = arith.constant 0 : i32
    %c0_i32_0 = arith.constant 0 : i32
    %c0_i32_1 = arith.constant 0 : i32
    %c0_i32_2 = arith.constant 0 : i32
    return %c0_i32, %c0_i32_0, %c0_i32_1 : i32, i32, i32
  }
  func.func @transform_6(%arg0: i32) -> (i32, i32, i32) {
    %c0_i32 = arith.constant 0 : i32
    %c0_i32_0 = arith.constant 0 : i32
    %c0_i32_1 = arith.constant 0 : i32
    %c0_i32_2 = arith.constant 0 : i32
    return %c0_i32, %c0_i32_0, %c0_i32_1 : i32, i32, i32
  }
  func.func @transform_7(%arg0: i32) -> (i32, i32, i32) {
    %c0_i32 = arith.constant 0 : i32
    %c0_i32_0 = arith.constant 0 : i32
    %c0_i32_1 = arith.constant 0 : i32
    %c0_i32_2 = arith.constant 0 : i32
    return %c0_i32, %c0_i32_0, %c0_i32_1 : i32, i32, i32
  }
  func.func @transform_8(%arg0: i32) -> (i32, i32, i32) {
    %c0_i32 = arith.constant 0 : i32
    %c0_i32_0 = arith.constant 0 : i32
    %c0_i32_1 = arith.constant 0 : i32
    %c0_i32_2 = arith.constant 0 : i32
    return %c0_i32, %c0_i32_0, %c0_i32_1 : i32, i32, i32
  }
  func.func @transform_9(%arg0: i32) -> (i32, i32, i32) {
    %c0_i32 = arith.constant 0 : i32
    %c0_i32_0 = arith.constant 0 : i32
    %c0_i32_1 = arith.constant 0 : i32
    %c0_i32_2 = arith.constant 0 : i32
    return %c0_i32, %c0_i32_0, %c0_i32_1 : i32, i32, i32
  }
  func.func @transform_10(%arg0: i32) -> (i32, i32, i32) {
    %c0_i32 = arith.constant 0 : i32
    %c0_i32_0 = arith.constant 0 : i32
    %c0_i32_1 = arith.constant 0 : i32
    %c0_i32_2 = arith.constant 0 : i32
    return %c0_i32, %c0_i32_0, %c0_i32_1 : i32, i32, i32
  }
  func.func @transform_11(%arg0: i32) -> (i32, i32, i32) {
    %c0_i32 = arith.constant 0 : i32
    %c0_i32_0 = arith.constant 0 : i32
    %c0_i32_1 = arith.constant 0 : i32
    %c0_i32_2 = arith.constant 0 : i32
    return %c0_i32, %c0_i32_0, %c0_i32_1 : i32, i32, i32
  }
  func.func @transform_12(%arg0: i32) -> (i32, i32) {
    %c0_i32 = arith.constant 0 : i32
    %c0_i32_0 = arith.constant 0 : i32
    %c0_i32_1 = arith.constant 0 : i32
    return %c0_i32, %c0_i32_0 : i32, i32
  }
  func.func @transform_13(%arg0: i32) -> (i32, i32) {
    %c0_i32 = arith.constant 0 : i32
    %c0_i32_0 = arith.constant 0 : i32
    %c0_i32_1 = arith.constant 0 : i32
    return %c0_i32, %c0_i32_0 : i32, i32
  }
  func.func @transform_14(%arg0: i32) -> (i32, i32) {
    %c0_i32 = arith.constant 0 : i32
    %c0_i32_0 = arith.constant 0 : i32
    %c0_i32_1 = arith.constant 0 : i32
    return %c0_i32, %c0_i32_0 : i32, i32
  }
  func.func @transform_15(%arg0: i32) -> (i32, i32) {
    %c0_i32 = arith.constant 0 : i32
    %c0_i32_0 = arith.constant 0 : i32
    %c0_i32_1 = arith.constant 0 : i32
    return %c0_i32, %c0_i32_0 : i32, i32
  }
  func.func @transform_16(%arg0: i32) -> (i32, i32) {
    %c0_i32 = arith.constant 0 : i32
    %c0_i32_0 = arith.constant 0 : i32
    return %arg0, %c0_i32 : i32, i32
  }
}

</mosaic_0001>

<llo_original>
// kernel: tpu_custom_call.1
$region0: #{tpu_custom_call.1}
  #allocation0 [shape = 'u32[]', space=smem, size = 0x4, offset = 0x4, fixed_abs, tag = 'smem constant byte address 0x4 - core index']
  #allocation1 [shape = 'u32[144,128]{1,0:T(1,128)}', space=vmem, size = 0x12000, scoped, tag = 'internal scratch']
  %s0 = inlined_call_operand.vmem [shape: bf16[16,32], index: 0, kind: input, shape index: {}]
  %s1 = inlined_call_operand.vmem [shape: f32[2,1,32], index: 1, kind: input, shape index: {}]
  %s2 = inlined_call_operand.vmem [shape: f32[2,1,32], index: 2, kind: input, shape index: {}]
  %s3 = inlined_call_operand.vmem [shape: bf16[2,32,96], index: 3, kind: input, shape index: {}]
  %s4 = inlined_call_operand.vmem [shape: bf16[2,32,32], index: 4, kind: input, shape index: {}]
  %s5 = inlined_call_operand.vmem [shape: f32[2,1,32], index: 5, kind: input, shape index: {}]
  %s6 = inlined_call_operand.vmem [shape: f32[2,1,32], index: 6, kind: input, shape index: {}]
  %s7 = inlined_call_operand.vmem [shape: f32[2,1,32], index: 7, kind: input, shape index: {}]
  %s8 = inlined_call_operand.vmem [shape: bf16[2,32,128], index: 8, kind: input, shape index: {}]
  %s9 = inlined_call_operand.vmem [shape: f32[2,1,128], index: 9, kind: input, shape index: {}]
  %s10 = inlined_call_operand.vmem [shape: bf16[2,128,32], index: 10, kind: input, shape index: {}]
  %s11 = inlined_call_operand.vmem [shape: f32[2,1,32], index: 11, kind: input, shape index: {}]
  %s12 = inlined_call_operand.vmem [shape: f32[1,32], index: 12, kind: input, shape index: {}]
  %s13 = inlined_call_operand.vmem [shape: f32[1,32], index: 13, kind: input, shape index: {}]
  %s14 = inlined_call_operand.vmem [shape: bf16[32,128], index: 14, kind: input, shape index: {}]
  %s15 = inlined_call_operand.vmem [shape: f32[1,128], index: 15, kind: input, shape index: {}]
  %s16 = inlined_call_operand.hbm [shape: bf16[16,128], index: 16, kind: output, shape index: {}]
  %s17 = sld [smem:[#allocation0]]
  $region97: #{tpu_custom_call.1} parent=0
    _
  %s19 = ssub.s32 1, %s17
  %s20 = scalar_select 0, %s19, %s17
  $region1: #{tpu_custom_call.1} parent=0
    #allocation2 [shape = 'u8[4096]{0}', space=vmem, size = 0x1000, scoped, tag = 'output window, operand 0']
    #allocation3 [shape = 's32[2]{0}', space=sflag, size = 0x8, scoped, tag = 'scoped memory for tpu_custom_call.1']
    %21 = vsyncpa [#allocation3], 0
    %s22 = scalar_lea.sflag [#allocation3], 1
    %23 = vsyncpa %s22, 0
    loop: start=0, step=1, limit=4
    $region2: #{tpu_custom_call.1} parent=1 // loop_pre_header
      _
    $region3: #{tpu_custom_call.1} parent=1 // loop_header
      %s25 = sphi 0, %s29
      %p26 = scmp.ge.s32.totalorder %s25, 4
      %s35 = sphi 0, %s37
      %s38 = sphi 0, %s35
      %s39 = sphi 0, %s38
      %s55 = sphi 0, %s39
      %s59 = sphi 0, %s59
      %s61 = sphi 0, %s59
      %s62 = sphi 0, %s61
      %s76 = sphi 0, %s62
      %s80 = sphi 0, %s80
      %s82 = sphi 0, %s80
      %s83 = sphi 0, %s82
      %s97 = sphi 0, %s83
      %s101 = sphi 0, %s101
      %s103 = sphi 0, %s101
      %s104 = sphi 0, %s103
      %s118 = sphi 0, %s104
      %s122 = sphi 0, %s122
      %s124 = sphi 0, %s122
      %s125 = sphi 0, %s124
      %s139 = sphi 0, %s125
      %s143 = sphi 0, %s143
      %s145 = sphi 0, %s143
      %s146 = sphi 0, %s145
      %s160 = sphi 0, %s146
      %s164 = sphi 0, %s164
      %s166 = sphi 0, %s164
      %s167 = sphi 0, %s166
      %s181 = sphi 0, %s167
      %s185 = sphi 0, %s185
      %s187 = sphi 0, %s185
      %s188 = sphi 0, %s187
      %s202 = sphi 0, %s188
      %s206 = sphi 0, %s206
      %s208 = sphi 0, %s206
      %s209 = sphi 0, %s208
      %s223 = sphi 0, %s209
      %s227 = sphi 0, %s227
      %s229 = sphi 0, %s227
      %s230 = sphi 0, %s229
      %s244 = sphi 0, %s230
      %s248 = sphi 0, %s248
      %s250 = sphi 0, %s248
      %s251 = sphi 0, %s250
      %s265 = sphi 0, %s251
      %s269 = sphi 0, %s269
      %s271 = sphi 0, %s269
      %s272 = sphi 0, %s271
      %s286 = sphi 0, %s272
      %s290 = sphi 0, %s290
      %s292 = sphi 0, %s290
      %s293 = sphi 0, %s292
      %s307 = sphi 0, %s293
      %s311 = sphi 0, %s311
      %s313 = sphi 0, %s311
      %s314 = sphi 0, %s313
      %s328 = sphi 0, %s314
      %s332 = sphi 0, %s332
      %s334 = sphi 0, %s332
      %s335 = sphi 0, %s334
      %s349 = sphi 0, %s335
      %s353 = sphi 0, %s353
      %s355 = sphi 0, %s353
      %s356 = sphi 0, %s355
      %s370 = sphi 0, %s356
      %s376 = sphi 0, %s378
      %s379 = sphi 0, %s376
      %s380 = sphi 0, %s379
      %s396 = sphi 0, %s380
    $region4: #{tpu_custom_call.1} parent=1 // loop_header_branch
      %28 = sbr.rel (%p26) target = $region8
    $region5: #{tpu_custom_call.1} parent=1 // loop_body
      %s30 = ssub.s32 %s25, 1
      %s31 = ssub.s32 %s25, 2
      %s32 = sadd.s32 %s25, 1
      %s33 = ssub.s32 %s25, %s32
      %p34 = scmp.eq.s32.totalorder %s33, 0
      %s36 = sadd.s32 %s35, 1
      %s37 = scalar_select %p34, %s35, %s36
      %p40 = pneg %p34
      %p41 = scmp.eq.s32.totalorder %s25, 1
      %p42 = por %p40, %p41
      %p43 = scmp.ne.s32.totalorder %s35, %s38
      %p44 = scmp.eq.s32.totalorder %s25, 0
      %p45 = por %p43, %p44
      %p46 = scmp.ne.s32.totalorder %s35, %s38
      %p47 = scmp.eq.s32.totalorder %s30, 1
      %p48 = por %p46, %p47
      %p49 = scmp.ne.s32.totalorder %s38, %s39
      %p50 = scmp.eq.s32.totalorder %s30, 0
      %p51 = por %p49, %p50
      %p52 = scmp.ne.s32.totalorder %s38, %s39
      %p53 = scmp.eq.s32.totalorder %s31, 1
      %p54 = por %p52, %p53
      %p56 = scmp.ne.s32.totalorder %s39, %s55
      %p57 = scmp.eq.s32.totalorder %s31, 0
      %p58 = por %p56, %p57
      %s60 = sadd.s32 %s59, 1
      %p63 = scmp.eq.s32.totalorder %s25, 1
      %p64 = scmp.ne.s32.totalorder %s59, %s61
      %p65 = scmp.eq.s32.totalorder %s25, 0
      %p66 = por %p64, %p65
      %p67 = scmp.ne.s32.totalorder %s59, %s61
      %p68 = scmp.eq.s32.totalorder %s30, 1
      %p69 = por %p67, %p68
      %p70 = scmp.ne.s32.totalorder %s61, %s62
      %p71 = scmp.eq.s32.totalorder %s30, 0
      %p72 = por %p70, %p71
      %p73 = scmp.ne.s32.totalorder %s61, %s62
      %p74 = scmp.eq.s32.totalorder %s31, 1
      %p75 = por %p73, %p74
      %p77 = scmp.ne.s32.totalorder %s62, %s76
      %p78 = scmp.eq.s32.totalorder %s31, 0
      %p79 = por %p77, %p78
      %s81 = sadd.s32 %s80, 1
      %p84 = scmp.eq.s32.totalorder %s25, 1
      %p85 = scmp.ne.s32.totalorder %s80, %s82
      %p86 = scmp.eq.s32.totalorder %s25, 0
      %p87 = por %p85, %p86
      %p88 = scmp.ne.s32.totalorder %s80, %s82
      %p89 = scmp.eq.s32.totalorder %s30, 1
      %p90 = por %p88, %p89
      %p91 = scmp.ne.s32.totalorder %s82, %s83
      %p92 = scmp.eq.s32.totalorder %s30, 0
      %p93 = por %p91, %p92
      %p94 = scmp.ne.s32.totalorder %s82, %s83
      %p95 = scmp.eq.s32.totalorder %s31, 1
      %p96 = por %p94, %p95
      %p98 = scmp.ne.s32.totalorder %s83, %s97
      %p99 = scmp.eq.s32.totalorder %s31, 0
      %p100 = por %p98, %p99
      %s102 = sadd.s32 %s101, 1
      %p105 = scmp.eq.s32.totalorder %s25, 1
      %p106 = scmp.ne.s32.totalorder %s101, %s103
      %p107 = scmp.eq.s32.totalorder %s25, 0
      %p108 = por %p106, %p107
      %p109 = scmp.ne.s32.totalorder %s101, %s103
      %p110 = scmp.eq.s32.totalorder %s30, 1
      %p111 = por %p109, %p110
      %p112 = scmp.ne.s32.totalorder %s103, %s104
      %p113 = scmp.eq.s32.totalorder %s30, 0
      %p114 = por %p112, %p113
      %p115 = scmp.ne.s32.totalorder %s103, %s104
      %p116 = scmp.eq.s32.totalorder %s31, 1
      %p117 = por %p115, %p116
      %p119 = scmp.ne.s32.totalorder %s104, %s118
      %p120 = scmp.eq.s32.totalorder %s31, 0
      %p121 = por %p119, %p120
      %s123 = sadd.s32 %s122, 1
      %p126 = scmp.eq.s32.totalorder %s25, 1
      %p127 = scmp.ne.s32.totalorder %s122, %s124
      %p128 = scmp.eq.s32.totalorder %s25, 0
      %p129 = por %p127, %p128
      %p130 = scmp.ne.s32.totalorder %s122, %s124
      %p131 = scmp.eq.s32.totalorder %s30, 1
      %p132 = por %p130, %p131
      %p133 = scmp.ne.s32.totalorder %s124, %s125
      %p134 = scmp.eq.s32.totalorder %s30, 0
      %p135 = por %p133, %p134
      %p136 = scmp.ne.s32.totalorder %s124, %s125
      %p137 = scmp.eq.s32.totalorder %s31, 1
      %p138 = por %p136, %p137
      %p140 = scmp.ne.s32.totalorder %s125, %s139
      %p141 = scmp.eq.s32.totalorder %s31, 0
      %p142 = por %p140, %p141
      %s144 = sadd.s32 %s143, 1
      %p147 = scmp.eq.s32.totalorder %s25, 1
      %p148 = scmp.ne.s32.totalorder %s143, %s145
      %p149 = scmp.eq.s32.totalorder %s25, 0
      %p150 = por %p148, %p149
      %p151 = scmp.ne.s32.totalorder %s143, %s145
      %p152 = scmp.eq.s32.totalorder %s30, 1
      %p153 = por %p151, %p152
      %p154 = scmp.ne.s32.totalorder %s145, %s146
      %p155 = scmp.eq.s32.totalorder %s30, 0
      %p156 = por %p154, %p155
      %p157 = scmp.ne.s32.totalorder %s145, %s146
      %p158 = scmp.eq.s32.totalorder %s31, 1
      %p159 = por %p157, %p158
      %p161 = scmp.ne.s32.totalorder %s146, %s160
      %p162 = scmp.eq.s32.totalorder %s31, 0
      %p163 = por %p161, %p162
      %s165 = sadd.s32 %s164, 1
      %p168 = scmp.eq.s32.totalorder %s25, 1
      %p169 = scmp.ne.s32.totalorder %s164, %s166
      %p170 = scmp.eq.s32.totalorder %s25, 0
      %p171 = por %p169, %p170
      %p172 = scmp.ne.s32.totalorder %s164, %s166
      %p173 = scmp.eq.s32.totalorder %s30, 1
      %p174 = por %p172, %p173
      %p175 = scmp.ne.s32.totalorder %s166, %s167
      %p176 = scmp.eq.s32.totalorder %s30, 0
      %p177 = por %p175, %p176
      %p178 = scmp.ne.s32.totalorder %s166, %s167
      %p179 = scmp.eq.s32.totalorder %s31, 1
      %p180 = por %p178, %p179
      %p182 = scmp.ne.s32.totalorder %s167, %s181
      %p183 = scmp.eq.s32.totalorder %s31, 0
      %p184 = por %p182, %p183
      %s186 = sadd.s32 %s185, 1
      %p189 = scmp.eq.s32.totalorder %s25, 1
      %p190 = scmp.ne.s32.totalorder %s185, %s187
      %p191 = scmp.eq.s32.totalorder %s25, 0
      %p192 = por %p190, %p191
      %p193 = scmp.ne.s32.totalorder %s185, %s187
      %p194 = scmp.eq.s32.totalorder %s30, 1
      %p195 = por %p193, %p194
      %p196 = scmp.ne.s32.totalorder %s187, %s188
      %p197 = scmp.eq.s32.totalorder %s30, 0
      %p198 = por %p196, %p197
      %p199 = scmp.ne.s32.totalorder %s187, %s188
      %p200 = scmp.eq.s32.totalorder %s31, 1
      %p201 = por %p199, %p200
      %p203 = scmp.ne.s32.totalorder %s188, %s202
      %p204 = scmp.eq.s32.totalorder %s31, 0
      %p205 = por %p203, %p204
      %s207 = sadd.s32 %s206, 1
      %p210 = scmp.eq.s32.totalorder %s25, 1
      %p211 = scmp.ne.s32.totalorder %s206, %s208
      %p212 = scmp.eq.s32.totalorder %s25, 0
      %p213 = por %p211, %p212
      %p214 = scmp.ne.s32.totalorder %s206, %s208
      %p215 = scmp.eq.s32.totalorder %s30, 1
      %p216 = por %p214, %p215
      %p217 = scmp.ne.s32.totalorder %s208, %s209
      %p218 = scmp.eq.s32.totalorder %s30, 0
      %p219 = por %p217, %p218
      %p220 = scmp.ne.s32.totalorder %s208, %s209
      %p221 = scmp.eq.s32.totalorder %s31, 1
      %p222 = por %p220, %p221
      %p224 = scmp.ne.s32.totalorder %s209, %s223
      %p225 = scmp.eq.s32.totalorder %s31, 0
      %p226 = por %p224, %p225
      %s228 = sadd.s32 %s227, 1
      %p231 = scmp.eq.s32.totalorder %s25, 1
      %p232 = scmp.ne.s32.totalorder %s227, %s229
      %p233 = scmp.eq.s32.totalorder %s25, 0
      %p234 = por %p232, %p233
      %p235 = scmp.ne.s32.totalorder %s227, %s229
      %p236 = scmp.eq.s32.totalorder %s30, 1
      %p237 = por %p235, %p236
      %p238 = scmp.ne.s32.totalorder %s229, %s230
      %p239 = scmp.eq.s32.totalorder %s30, 0
      %p240 = por %p238, %p239
      %p241 = scmp.ne.s32.totalorder %s229, %s230
      %p242 = scmp.eq.s32.totalorder %s31, 1
      %p243 = por %p241, %p242
      %p245 = scmp.ne.s32.totalorder %s230, %s244
      %p246 = scmp.eq.s32.totalorder %s31, 0
      %p247 = por %p245, %p246
      %s249 = sadd.s32 %s248, 1
      %p252 = scmp.eq.s32.totalorder %s25, 1
      %p253 = scmp.ne.s32.totalorder %s248, %s250
      %p254 = scmp.eq.s32.totalorder %s25, 0
      %p255 = por %p253, %p254
      %p256 = scmp.ne.s32.totalorder %s248, %s250
      %p257 = scmp.eq.s32.totalorder %s30, 1
      %p258 = por %p256, %p257
      %p259 = scmp.ne.s32.totalorder %s250, %s251
      %p260 = scmp.eq.s32.totalorder %s30, 0
      %p261 = por %p259, %p260
      %p262 = scmp.ne.s32.totalorder %s250, %s251
      %p263 = scmp.eq.s32.totalorder %s31, 1
      %p264 = por %p262, %p263
      %p266 = scmp.ne.s32.totalorder %s251, %s265
      %p267 = scmp.eq.s32.totalorder %s31, 0
      %p268 = por %p266, %p267
      %s270 = sadd.s32 %s269, 1
      %p273 = scmp.eq.s32.totalorder %s25, 1
      %p274 = scmp.ne.s32.totalorder %s269, %s271
      %p275 = scmp.eq.s32.totalorder %s25, 0
      %p276 = por %p274, %p275
      %p277 = scmp.ne.s32.totalorder %s269, %s271
      %p278 = scmp.eq.s32.totalorder %s30, 1
      %p279 = por %p277, %p278
      %p280 = scmp.ne.s32.totalorder %s271, %s272
      %p281 = scmp.eq.s32.totalorder %s30, 0
      %p282 = por %p280, %p281
      %p283 = scmp.ne.s32.totalorder %s271, %s272
      %p284 = scmp.eq.s32.totalorder %s31, 1
      %p285 = por %p283, %p284
      %p287 = scmp.ne.s32.totalorder %s272, %s286
      %p288 = scmp.eq.s32.totalorder %s31, 0
      %p289 = por %p287, %p288
      %s291 = sadd.s32 %s290, 1
      %p294 = scmp.eq.s32.totalorder %s25, 1
      %p295 = scmp.ne.s32.totalorder %s290, %s292
      %p296 = scmp.eq.s32.totalorder %s25, 0
      %p297 = por %p295, %p296
      %p298 = scmp.ne.s32.totalorder %s290, %s292
      %p299 = scmp.eq.s32.totalorder %s30, 1
      %p300 = por %p298, %p299
      %p301 = scmp.ne.s32.totalorder %s292, %s293
      %p302 = scmp.eq.s32.totalorder %s30, 0
      %p303 = por %p301, %p302
      %p304 = scmp.ne.s32.totalorder %s292, %s293
      %p305 = scmp.eq.s32.totalorder %s31, 1
      %p306 = por %p304, %p305
      %p308 = scmp.ne.s32.totalorder %s293, %s307
      %p309 = scmp.eq.s32.totalorder %s31, 0
      %p310 = por %p308, %p309
      %s312 = sadd.s32 %s311, 1
      %p315 = scmp.eq.s32.totalorder %s25, 1
      %p316 = scmp.ne.s32.totalorder %s311, %s313
      %p317 = scmp.eq.s32.totalorder %s25, 0
      %p318 = por %p316, %p317
      %p319 = scmp.ne.s32.totalorder %s311, %s313
      %p320 = scmp.eq.s32.totalorder %s30, 1
      %p321 = por %p319, %p320
      %p322 = scmp.ne.s32.totalorder %s313, %s314
      %p323 = scmp.eq.s32.totalorder %s30, 0
      %p324 = por %p322, %p323
      %p325 = scmp.ne.s32.totalorder %s313, %s314
      %p326 = scmp.eq.s32.totalorder %s31, 1
      %p327 = por %p325, %p326
      %p329 = scmp.ne.s32.totalorder %s314, %s328
      %p330 = scmp.eq.s32.totalorder %s31, 0
      %p331 = por %p329, %p330
      %s333 = sadd.s32 %s332, 1
      %p336 = scmp.eq.s32.totalorder %s25, 1
      %p337 = scmp.ne.s32.totalorder %s332, %s334
      %p338 = scmp.eq.s32.totalorder %s25, 0
      %p339 = por %p337, %p338
      %p340 = scmp.ne.s32.totalorder %s332, %s334
      %p341 = scmp.eq.s32.totalorder %s30, 1
      %p342 = por %p340, %p341
      %p343 = scmp.ne.s32.totalorder %s334, %s335
      %p344 = scmp.eq.s32.totalorder %s30, 0
      %p345 = por %p343, %p344
      %p346 = scmp.ne.s32.totalorder %s334, %s335
      %p347 = scmp.eq.s32.totalorder %s31, 1
      %p348 = por %p346, %p347
      %p350 = scmp.ne.s32.totalorder %s335, %s349
      %p351 = scmp.eq.s32.totalorder %s31, 0
      %p352 = por %p350, %p351
      %s354 = sadd.s32 %s353, 1
      %p357 = scmp.eq.s32.totalorder %s25, 1
      %p358 = scmp.ne.s32.totalorder %s353, %s355
      %p359 = scmp.eq.s32.totalorder %s25, 0
      %p360 = por %p358, %p359
      %p361 = scmp.ne.s32.totalorder %s353, %s355
      %p362 = scmp.eq.s32.totalorder %s30, 1
      %p363 = por %p361, %p362
      %p364 = scmp.ne.s32.totalorder %s355, %s356
      %p365 = scmp.eq.s32.totalorder %s30, 0
      %p366 = por %p364, %p365
      %p367 = scmp.ne.s32.totalorder %s355, %s356
      %p368 = scmp.eq.s32.totalorder %s31, 1
      %p369 = por %p367, %p368
      %p371 = scmp.ne.s32.totalorder %s356, %s370
      %p372 = scmp.eq.s32.totalorder %s31, 0
      %p373 = por %p371, %p372
      %s374 = ssub.s32 %s25, %s32
      %p375 = scmp.eq.s32.totalorder %s374, 0
      %s377 = sadd.s32 %s376, 1
      %s378 = scalar_select %p375, %s376, %s377
      %p381 = pneg %p375
      %p382 = scmp.eq.s32.totalorder %s25, 1
      %p383 = por %p381, %p382
      %p384 = scmp.ne.s32.totalorder %s376, %s379
      %p385 = scmp.eq.s32.totalorder %s25, 0
      %p386 = por %p384, %p385
      %p387 = scmp.ne.s32.totalorder %s376, %s379
      %p388 = scmp.eq.s32.totalorder %s30, 1
      %p389 = por %p387, %p388
      %p390 = scmp.ne.s32.totalorder %s379, %s380
      %p391 = scmp.eq.s32.totalorder %s30, 0
      %p392 = por %p390, %p391
      %p393 = scmp.ne.s32.totalorder %s379, %s380
      %p394 = scmp.eq.s32.totalorder %s31, 1
      %p395 = por %p393, %p394
      %p397 = scmp.ne.s32.totalorder %s380, %s396
      %p398 = scmp.eq.s32.totalorder %s31, 0
      %p399 = por %p397, %p398
      %p400 = scmp.le.s32.totalorder 1, %s25
      %p401 = scmp.lt.s32.totalorder %s25, 3
      %p402 = pnand %p400, %p401
      %p403 = pneg %p402
      // Predicated region
      $region9: #{tpu_custom_call.1} parent=5 // pred_check
        _
      $region10: #{tpu_custom_call.1} parent=5 // pred_check_branch
        %405 = sbr.rel (%p402) target = $region12
      $region11: #{tpu_custom_call.1} parent=5 // pred_region
        %s406 = ssub.s32 %s25, 1
        // Predicated region
        $region13: #{tpu_custom_call.1} parent=11 // pred_check
          %p407 = pneg %p72
        $region14: #{tpu_custom_call.1} parent=11 // pred_check_branch
          %409 = sbr.rel (%p407) target = $region16
        $region15: #{tpu_custom_call.1} parent=11 // pred_region
          _
        $region16: #{tpu_custom_call.1} parent=11 // pred_fallthru
          _
        // Predicated region
        $region17: #{tpu_custom_call.1} parent=11 // pred_check
          %p410 = pneg %p93
        $region18: #{tpu_custom_call.1} parent=11 // pred_check_branch
          %412 = sbr.rel (%p410) target = $region20
        $region19: #{tpu_custom_call.1} parent=11 // pred_region
          _
        $region20: #{tpu_custom_call.1} parent=11 // pred_fallthru
          _
        // Predicated region
        $region21: #{tpu_custom_call.1} parent=11 // pred_check
          %p413 = pneg %p114
        $region22: #{tpu_custom_call.1} parent=11 // pred_check_branch
          %415 = sbr.rel (%p413) target = $region24
        $region23: #{tpu_custom_call.1} parent=11 // pred_region
          _
        $region24: #{tpu_custom_call.1} parent=11 // pred_fallthru
          _
        // Predicated region
        $region25: #{tpu_custom_call.1} parent=11 // pred_check
          %p416 = pneg %p135
        $region26: #{tpu_custom_call.1} parent=11 // pred_check_branch
          %418 = sbr.rel (%p416) target = $region28
        $region27: #{tpu_custom_call.1} parent=11 // pred_region
          _
        $region28: #{tpu_custom_call.1} parent=11 // pred_fallthru
          _
        // Predicated region
        $region29: #{tpu_custom_call.1} parent=11 // pred_check
          %p419 = pneg %p156
        $region30: #{tpu_custom_call.1} parent=11 // pred_check_branch
          %421 = sbr.rel (%p419) target = $region32
        $region31: #{tpu_custom_call.1} parent=11 // pred_region
          _
        $region32: #{tpu_custom_call.1} parent=11 // pred_fallthru
          _
        // Predicated region
        $region33: #{tpu_custom_call.1} parent=11 // pred_check
          %p422 = pneg %p177
        $region34: #{tpu_custom_call.1} parent=11 // pred_check_branch
          %424 = sbr.rel (%p422) target = $region36
        $region35: #{tpu_custom_call.1} parent=11 // pred_region
          _
        $region36: #{tpu_custom_call.1} parent=11 // pred_fallthru
          _
        // Predicated region
        $region37: #{tpu_custom_call.1} parent=11 // pred_check
          %p425 = pneg %p198
        $region38: #{tpu_custom_call.1} parent=11 // pred_check_branch
          %427 = sbr.rel (%p425) target = $region40
        $region39: #{tpu_custom_call.1} parent=11 // pred_region
          _
        $region40: #{tpu_custom_call.1} parent=11 // pred_fallthru
          _
        // Predicated region
        $region41: #{tpu_custom_call.1} parent=11 // pred_check
          %p428 = pneg %p219
        $region42: #{tpu_custom_call.1} parent=11 // pred_check_branch
          %430 = sbr.rel (%p428) target = $region44
        $region43: #{tpu_custom_call.1} parent=11 // pred_region
          _
        $region44: #{tpu_custom_call.1} parent=11 // pred_fallthru
          _
        // Predicated region
        $region45: #{tpu_custom_call.1} parent=11 // pred_check
          %p431 = pneg %p240
        $region46: #{tpu_custom_call.1} parent=11 // pred_check_branch
          %433 = sbr.rel (%p431) target = $region48
        $region47: #{tpu_custom_call.1} parent=11 // pred_region
          _
        $region48: #{tpu_custom_call.1} parent=11 // pred_fallthru
          _
        // Predicated region
        $region49: #{tpu_custom_call.1} parent=11 // pred_check
          %p434 = pneg %p261
        $region50: #{tpu_custom_call.1} parent=11 // pred_check_branch
          %436 = sbr.rel (%p434) target = $region52
        $region51: #{tpu_custom_call.1} parent=11 // pred_region
          _
        $region52: #{tpu_custom_call.1} parent=11 // pred_fallthru
          _
        // Predicated region
        $region53: #{tpu_custom_call.1} parent=11 // pred_check
          %p437 = pneg %p282
        $region54: #{tpu_custom_call.1} parent=11 // pred_check_branch
          %439 = sbr.rel (%p437) target = $region56
        $region55: #{tpu_custom_call.1} parent=11 // pred_region
          _
        $region56: #{tpu_custom_call.1} parent=11 // pred_fallthru
          _
        // Predicated region
        $region57: #{tpu_custom_call.1} parent=11 // pred_check
          %p440 = pneg %p303
        $region58: #{tpu_custom_call.1} parent=11 // pred_check_branch
          %442 = sbr.rel (%p440) target = $region60
        $region59: #{tpu_custom_call.1} parent=11 // pred_region
          _
        $region60: #{tpu_custom_call.1} parent=11 // pred_fallthru
          _
        // Predicated region
        $region61: #{tpu_custom_call.1} parent=11 // pred_check
          %p443 = pneg %p324
        $region62: #{tpu_custom_call.1} parent=11 // pred_check_branch
          %445 = sbr.rel (%p443) target = $region64
        $region63: #{tpu_custom_call.1} parent=11 // pred_region
          _
        $region64: #{tpu_custom_call.1} parent=11 // pred_fallthru
          _
        // Predicated region
        $region65: #{tpu_custom_call.1} parent=11 // pred_check
          %p446 = pneg %p345
        $region66: #{tpu_custom_call.1} parent=11 // pred_check_branch
          %448 = sbr.rel (%p446) target = $region68
        $region67: #{tpu_custom_call.1} parent=11 // pred_region
          _
        $region68: #{tpu_custom_call.1} parent=11 // pred_fallthru
          _
        // Predicated region
        $region69: #{tpu_custom_call.1} parent=11 // pred_check
          %p449 = pneg %p366
        $region70: #{tpu_custom_call.1} parent=11 // pred_check_branch
          %451 = sbr.rel (%p449) target = $region72
        $region71: #{tpu_custom_call.1} parent=11 // pred_region
          _
        $region72: #{tpu_custom_call.1} parent=11 // pred_fallthru
          _
      $region12: #{tpu_custom_call.1} parent=5 // pred_fallthru
        _
      %p452 = scmp.lt.s32.totalorder %s25, 2
      // Predicated region
      $region73: #{tpu_custom_call.1} parent=5 // pred_check
        %p453 = pneg %p452
      $region74: #{tpu_custom_call.1} parent=5 // pred_check_branch
        %455 = sbr.rel (%p453) target = $region76
      $region75: #{tpu_custom_call.1} parent=5 // pred_region
        // Predicated region
        $region77: #{tpu_custom_call.1} parent=75 // pred_check
          %p456 = pneg %p45
        $region78: #{tpu_custom_call.1} parent=75 // pred_check_branch
          %458 = sbr.rel (%p456) target = $region80
        $region79: #{tpu_custom_call.1} parent=75 // pred_region
          %p459 = scmp.lt.s32.totalorder %s25, 1
          %s460 = scalar_select %p459, %s25, 1
          %s461 = smul.addr %s460, 4
          %s462 = scalar_lea.vmem %s0, %s461
        $region80: #{tpu_custom_call.1} parent=75 // pred_fallthru
          _
      $region76: #{tpu_custom_call.1} parent=5 // pred_fallthru
        _
      %p463 = scmp.le.s32.totalorder 1, %s25
      %p464 = scmp.lt.s32.totalorder %s25, 3
      %p465 = pnand %p463, %p464
      %p466 = pneg %p465
      // Predicated region
      $region81: #{tpu_custom_call.1} parent=5 // pred_check
        _
      $region82: #{tpu_custom_call.1} parent=5 // pred_check_branch
        %468 = sbr.rel (%p465) target = $region84
      $region83: #{tpu_custom_call.1} parent=5 // pred_region
        %s469 = ssub.s32 %s25, 1
        %p470 = scmp.lt.s32.totalorder %s30, 1
        %s471 = scalar_select %p470, %s30, 1
        %s472 = smul.addr %s471, 4
        %s473 = scalar_lea.vmem %s0, %s472
        %p474 = pneg %p51
        %p475 = pneg %p48
        %p476 = pneg %p72
        %p477 = pneg %p69
        %p478 = pneg %p93
        %p479 = pneg %p90
        %p480 = pneg %p114
        %p481 = pneg %p111
        %p482 = pneg %p135
        %p483 = pneg %p132
        %p484 = pneg %p156
        %p485 = pneg %p153
        %p486 = pneg %p177
        %p487 = pneg %p174
        %p488 = pneg %p198
        %p489 = pneg %p195
        %p490 = pneg %p219
        %p491 = pneg %p216
        %p492 = pneg %p240
        %p493 = pneg %p237
        %p494 = pneg %p261
        %p495 = pneg %p258
        %p496 = pneg %p282
        %p497 = pneg %p279
        %p498 = pneg %p303
        %p499 = pneg %p300
        %p500 = pneg %p324
        %p501 = pneg %p321
        %p502 = pneg %p345
        %p503 = pneg %p342
        %p504 = pneg %p366
        %p505 = pneg %p363
        %p506 = pneg %p392
        %p507 = pneg %p389
        %s508 = sand.u32 %s379, 1
        %s509 = scalar_lea.sflag [#allocation3], %s508
        %s510 = sand.u32 %s379, 1
        %s511 = smul.addr %s510, 4
        %s512 = scalar_lea.vmem [#allocation2], %s511
        %p513 = scmp.lt.s32.totalorder %s30, 1
        %s514 = scalar_select %p513, %s30, 1
        %s515 = smul.addr %s514, 4
        %s516 = scalar_lea.vmem %s0, %s515
        %v518 = vld [vmem:[%s516] sm:$0xf]
        %v519 = vunpack.c.l.bf16 %v518
        %v520 = vlaneseq
        %v521 = vshrl.u32 %v520, 7
        %v522 = vlaneseq
        %v523 = vand.u32 %v522, 127
        %vm524 = vcmp.ge.s32.totalorder %v521, %v523
        %v525 = vld [vmem:[%s1] sm:$0x1]
        %v526 = vld [vmem:[%s2] sm:$0x1]
        %vm527 = vcmask 261120
        %v528 = vsel %vm527, %v519, 0.0
        %529 = vadd.xlane.f32.xlu0 %v528
        %v530 = vpop.xlane.xlu0 %529
        %v531 = vrcp.pop 32.0
        %v532 = vmul.f32 %v530, %v531
        %v533 = vsub.f32 %v519, %v532
        %v534 = vmul.f32 %v533, %v533
        %v535 = vsel %vm527, %v534, 0.0
        %536 = vadd.xlane.f32.xlu0 %v535
        %v537 = vpop.xlane.xlu0 %536
        %v538 = vmul.f32 %v537, %v531
        %v539 = vadd.f32 %v538, 1e-05
        %v540 = vrsqrt.pop %v539
        %v541 = vmul.f32 %v533, %v540
        %v543 = vlaneseq
        %v544 = vshrl.u32 %v543, 7
        %v545 = vsub.s32 0, %v544
        %v546 = vrot.slane %v525, %v545
        %v548 = vmul.f32 %v541, %v546
        %v550 = vlaneseq
        %v551 = vshrl.u32 %v550, 7
        %v552 = vsub.s32 0, %v551
        %v553 = vrot.slane %v526, %v552
        %v555 = vadd.f32 %v548, %v553
        %v556 = vpack.c.bf16 %v555, %v555
        %v557 = vld [vmem:[%s3] sm:$0xf]
        %v558 = vld [vmem:[%s3 + $0x4] sm:$0xf]
        %v559 = vld [vmem:[%s3 + $0x8] sm:$0xf]
        %v560 = vld [vmem:[%s3 + $0xc] sm:$0xf]
        %v565 = vunpack.c.l.b16 %v557
        %v566 = vunpack.c.l.b16 %v558
        %v567 = vunpack.c.l.b16 %v559
        %v568 = vunpack.c.l.b16 %v560
        %v569 = vpack.c.b16 %v566, %v565
        %v570 = vpack.c.b16 %v568, %v567
        %v574 = vsel %vm527, %v556, 0
        %576 = vmatprep.subr.bf16.mxu0 0
        %577 = vmatpush1.bf16.msra.mxu0 %v569
        %578 = vmatprep.subr.bf16.mxu0 0
        %579 = vmatpush1.bf16.msra.mxu0 %v570
        %580 = vmatprep.subr.bf16.mxu0 0
        %581 = vmatpush1.bf16.msra.mxu0 0
        %582 = vmatprep.subr.bf16.mxu0 0
        %583 = vmatpush1.bf16.msra.mxu0 0
        %584 = vmatprep.subr.bf16.mxu0 0
        %585 = vmatpush1.bf16.msra.mxu0 0
        %586 = vmatprep.subr.bf16.mxu0 0
        %587 = vmatpush1.bf16.msra.mxu0 0
        %588 = vmatprep.subr.bf16.mxu0 0
        %589 = vmatpush1.bf16.msra.mxu0 0
        %590 = vmatprep.subr.bf16.mxu0 0
        %591 = vmatpush1.bf16.msra.mxu0 0
        %592 = vmatprep.subr.bf16.mxu0 0
        %593 = vmatpush1.bf16.msra.mxu0 0
        %594 = vmatprep.subr.bf16.mxu0 0
        %595 = vmatpush1.bf16.msra.mxu0 0
        %596 = vmatprep.subr.bf16.mxu0 0
        %597 = vmatpush1.bf16.msra.mxu0 0
        %598 = vmatprep.subr.bf16.mxu0 0
        %599 = vmatpush1.bf16.msra.mxu0 0
        %600 = vmatprep.subr.bf16.mxu0 0
        %601 = vmatpush1.bf16.msra.mxu0 0
        %602 = vmatprep.subr.bf16.mxu0 0
        %603 = vmatpush1.bf16.msra.mxu0 0
        %604 = vmatprep.subr.bf16.mxu0 0
        %605 = vmatpush1.bf16.msra.mxu0 0
        %606 = vmatprep.subr.bf16.mxu0 0
        %607 = vmatpush1.bf16.msra.mxu0 0
        %608 = vmatprep.mubr.bf16.mxu0 0
        %609 = vmatmul.mubr.bf16.gmra.mrb[0].mxu0 %v574
        %v610 = vpop.f32.mrb[0].mxu0
        %v611 = vadd.f32 0.0, %v610
        %v612 = vpop.f32.mrb[0].mxu0
        %v613 = vpop.f32.mrb[0].mxu0
        %v614 = vpop.f32.mrb[0].mxu0
        %615 = vdwg.mxu0
        %v616 = vpack.c.bf16 %v611, %v611
        %618 = vrot.lane.b32.xlu0 %v616, 96
        %v619 = vpop.permute.xlu0 %618
        %vm620 = vcmask 64512
        %v622 = vsel %vm620, %v616, 0
        %v625 = vsel %vm620, %v619, 0
        %627 = vmatprep.subr.bf16.mxu0 0
        %628 = vmatpush1.bf16.xpose.msra.mxu0 %v625
        %629 = vmatprep.subr.bf16.mxu0 0
        %630 = vmatpush1.bf16.xpose.msra.mxu0 0
        %631 = vmatprep.subr.bf16.mxu0 0
        %632 = vmatpush1.bf16.xpose.msra.mxu0 0
        %633 = vmatprep.subr.bf16.mxu0 0
        %634 = vmatpush1.bf16.xpose.msra.mxu0 0
        %635 = vmatprep.subr.bf16.mxu0 0
        %636 = vmatpush1.bf16.xpose.msra.mxu0 0
        %637 = vmatprep.subr.bf16.mxu0 0
        %638 = vmatpush1.bf16.xpose.msra.mxu0 0
        %639 = vmatprep.subr.bf16.mxu0 0
        %640 = vmatpush1.bf16.xpose.msra.mxu0 0
        %641 = vmatprep.subr.bf16.mxu0 0
        %642 = vmatpush1.bf16.xpose.msra.mxu0 0
        %643 = vmatprep.subr.bf16.mxu0 0
        %644 = vmatpush1.bf16.xpose.msra.mxu0 0
        %645 = vmatprep.subr.bf16.mxu0 0
        %646 = vmatpush1.bf16.xpose.msra.mxu0 0
        %647 = vmatprep.subr.bf16.mxu0 0
        %648 = vmatpush1.bf16.xpose.msra.mxu0 0
        %649 = vmatprep.subr.bf16.mxu0 0
        %650 = vmatpush1.bf16.xpose.msra.mxu0 0
        %651 = vmatprep.subr.bf16.mxu0 0
        %652 = vmatpush1.bf16.xpose.msra.mxu0 0
        %653 = vmatprep.subr.bf16.mxu0 0
        %654 = vmatpush1.bf16.xpose.msra.mxu0 0
        %655 = vmatprep.subr.bf16.mxu0 0
        %656 = vmatpush1.bf16.xpose.msra.mxu0 0
        %657 = vmatprep.subr.bf16.mxu0 0
        %658 = vmatpush1.bf16.xpose.msra.mxu0 0
        %659 = vmatprep.mubr.bf16.mxu0 0
        %660 = vmatmul.mubr.bf16.gmra.mrb[0].mxu0 %v622
        %v661 = vpop.f32.mrb[0].mxu0
        %v662 = vadd.f32 0.0, %v661
        %v663 = vpop.f32.mrb[0].mxu0
        %v664 = vpop.f32.mrb[0].mxu0
        %v665 = vpop.f32.mrb[0].mxu0
        %666 = vdwg.mxu0
        %v667 = vmul.f32 %v662, 0.35355338
        %v668 = vsel %vm524, %v667, -1e+30
        %v669 = vsel %vm620, %v668, -inf
        %670 = vmax.xlane.f32.xlu0 %v669
        %v671 = vpop.xlane.xlu0 %670
        %v672 = vsub.f32 %v668, %v671
        %v673 = vmul.f32 %v672, 1.442695
        %v674 = vpow.pop %v673
        %v675 = vsel %vm620, %v674, 0.0
        %676 = vadd.xlane.f32.xlu0 %v675
        %v677 = vpop.xlane.xlu0 %676
        %v678 = vrcp.pop %v677
        %v679 = vmul.f32 %v674, %v678
        %v680 = vpack.c.bf16 %v679, %v679
        %681 = vrot.lane.b32.xlu0 %v616, 64
        %v682 = vpop.permute.xlu0 %681
        %v684 = vsel %vm620, %v680, 0
        %vm686 = vcmask 1043456
        %v688 = vsel %vm686, %v682, 0
        %690 = vmatprep.subr.bf16.mxu0 0
        %691 = vmatpush1.bf16.msra.mxu0 %v688
        %692 = vmatprep.subr.bf16.mxu0 0
        %693 = vmatpush1.bf16.msra.mxu0 0
        %694 = vmatprep.subr.bf16.mxu0 0
        %695 = vmatpush1.bf16.msra.mxu0 0
        %696 = vmatprep.subr.bf16.mxu0 0
        %697 = vmatpush1.bf16.msra.mxu0 0
        %698 = vmatprep.subr.bf16.mxu0 0
        %699 = vmatpush1.bf16.msra.mxu0 0
        %700 = vmatprep.subr.bf16.mxu0 0
        %701 = vmatpush1.bf16.msra.mxu0 0
        %702 = vmatprep.subr.bf16.mxu0 0
        %703 = vmatpush1.bf16.msra.mxu0 0
        %704 = vmatprep.subr.bf16.mxu0 0
        %705 = vmatpush1.bf16.msra.mxu0 0
        %706 = vmatprep.subr.bf16.mxu0 0
        %707 = vmatpush1.bf16.msra.mxu0 0
        %708 = vmatprep.subr.bf16.mxu0 0
        %709 = vmatpush1.bf16.msra.mxu0 0
        %710 = vmatprep.subr.bf16.mxu0 0
        %711 = vmatpush1.bf16.msra.mxu0 0
        %712 = vmatprep.subr.bf16.mxu0 0
        %713 = vmatpush1.bf16.msra.mxu0 0
        %714 = vmatprep.subr.bf16.mxu0 0
        %715 = vmatpush1.bf16.msra.mxu0 0
        %716 = vmatprep.subr.bf16.mxu0 0
        %717 = vmatpush1.bf16.msra.mxu0 0
        %718 = vmatprep.subr.bf16.mxu0 0
        %719 = vmatpush1.bf16.msra.mxu0 0
        %720 = vmatprep.subr.bf16.mxu0 0
        %721 = vmatpush1.bf16.msra.mxu0 0
        %722 = vmatprep.mubr.bf16.mxu0 0
        %723 = vmatmul.mubr.bf16.gmra.mrb[0].mxu0 %v684
        %v724 = vpop.f32.mrb[0].mxu0
        %v725 = vadd.f32 0.0, %v724
        %v726 = vpop.f32.mrb[0].mxu0
        %v727 = vpop.f32.mrb[0].mxu0
        %v728 = vpop.f32.mrb[0].mxu0
        %729 = vdwg.mxu0
        %730 = vrot.lane.b32.xlu0 %v616, 120
        %v731 = vpop.permute.xlu0 %730
        %732 = vrot.lane.b32.xlu0 %v616, 88
        %v733 = vpop.permute.xlu0 %732
        %v735 = vsel %vm620, %v731, 0
        %v738 = vsel %vm620, %v733, 0
        %740 = vmatprep.subr.bf16.mxu0 0
        %741 = vmatpush1.bf16.xpose.msra.mxu0 %v738
        %742 = vmatprep.subr.bf16.mxu0 0
        %743 = vmatpush1.bf16.xpose.msra.mxu0 0
        %744 = vmatprep.subr.bf16.mxu0 0
        %745 = vmatpush1.bf16.xpose.msra.mxu0 0
        %746 = vmatprep.subr.bf16.mxu0 0
        %747 = vmatpush1.bf16.xpose.msra.mxu0 0
        %748 = vmatprep.subr.bf16.mxu0 0
        %749 = vmatpush1.bf16.xpose.msra.mxu0 0
        %750 = vmatprep.subr.bf16.mxu0 0
        %751 = vmatpush1.bf16.xpose.msra.mxu0 0
        %752 = vmatprep.subr.bf16.mxu0 0
        %753 = vmatpush1.bf16.xpose.msra.mxu0 0
        %754 = vmatprep.subr.bf16.mxu0 0
        %755 = vmatpush1.bf16.xpose.msra.mxu0 0
        %756 = vmatprep.subr.bf16.mxu0 0
        %757 = vmatpush1.bf16.xpose.msra.mxu0 0
        %758 = vmatprep.subr.bf16.mxu0 0
        %759 = vmatpush1.bf16.xpose.msra.mxu0 0
        %760 = vmatprep.subr.bf16.mxu0 0
        %761 = vmatpush1.bf16.xpose.msra.mxu0 0
        %762 = vmatprep.subr.bf16.mxu0 0
        %763 = vmatpush1.bf16.xpose.msra.mxu0 0
        %764 = vmatprep.subr.bf16.mxu0 0
        %765 = vmatpush1.bf16.xpose.msra.mxu0 0
        %766 = vmatprep.subr.bf16.mxu0 0
        %767 = vmatpush1.bf16.xpose.msra.mxu0 0
        %768 = vmatprep.subr.bf16.mxu0 0
        %769 = vmatpush1.bf16.xpose.msra.mxu0 0
        %770 = vmatprep.subr.bf16.mxu0 0
        %771 = vmatpush1.bf16.xpose.msra.mxu0 0
        %772 = vmatprep.mubr.bf16.mxu0 0
        %773 = vmatmul.mubr.bf16.gmra.mrb[0].mxu0 %v735
        %v774 = vpop.f32.mrb[0].mxu0
        %v775 = vadd.f32 0.0, %v774
        %v776 = vpop.f32.mrb[0].mxu0
        %v777 = vpop.f32.mrb[0].mxu0
        %v778 = vpop.f32.mrb[0].mxu0
        %779 = vdwg.mxu0
        %v780 = vmul.f32 %v775, 0.35355338
        %v781 = vsel %vm524, %v780, -1e+30
        %v782 = vsel %vm620, %v781, -inf
        %783 = vmax.xlane.f32.xlu0 %v782
        %v784 = vpop.xlane.xlu0 %783
        %v785 = vsub.f32 %v781, %v784
        %v786 = vmul.f32 %v785, 1.442695
        %v787 = vpow.pop %v786
        %v788 = vsel %vm620, %v787, 0.0
        %789 = vadd.xlane.f32.xlu0 %v788
        %v790 = vpop.xlane.xlu0 %789
        %v791 = vrcp.pop %v790
        %v792 = vmul.f32 %v787, %v791
        %v793 = vpack.c.bf16 %v792, %v792
        %794 = vrot.lane.b32.xlu0 %v616, 56
        %v795 = vpop.permute.xlu0 %794
        %v797 = vsel %vm620, %v793, 0
        %v800 = vsel %vm686, %v795, 0
        %802 = vmatprep.subr.bf16.mxu0 0
        %803 = vmatpush1.bf16.msra.mxu0 %v800
        %804 = vmatprep.subr.bf16.mxu0 0
        %805 = vmatpush1.bf16.msra.mxu0 0
        %806 = vmatprep.subr.bf16.mxu0 0
        %807 = vmatpush1.bf16.msra.mxu0 0
        %808 = vmatprep.subr.bf16.mxu0 0
        %809 = vmatpush1.bf16.msra.mxu0 0
        %810 = vmatprep.subr.bf16.mxu0 0
        %811 = vmatpush1.bf16.msra.mxu0 0
        %812 = vmatprep.subr.bf16.mxu0 0
        %813 = vmatpush1.bf16.msra.mxu0 0
        %814 = vmatprep.subr.bf16.mxu0 0
        %815 = vmatpush1.bf16.msra.mxu0 0
        %816 = vmatprep.subr.bf16.mxu0 0
        %817 = vmatpush1.bf16.msra.mxu0 0
        %818 = vmatprep.subr.bf16.mxu0 0
        %819 = vmatpush1.bf16.msra.mxu0 0
        %820 = vmatprep.subr.bf16.mxu0 0
        %821 = vmatpush1.bf16.msra.mxu0 0
        %822 = vmatprep.subr.bf16.mxu0 0
        %823 = vmatpush1.bf16.msra.mxu0 0
        %824 = vmatprep.subr.bf16.mxu0 0
        %825 = vmatpush1.bf16.msra.mxu0 0
        %826 = vmatprep.subr.bf16.mxu0 0
        %827 = vmatpush1.bf16.msra.mxu0 0
        %828 = vmatprep.subr.bf16.mxu0 0
        %829 = vmatpush1.bf16.msra.mxu0 0
        %830 = vmatprep.subr.bf16.mxu0 0
        %831 = vmatpush1.bf16.msra.mxu0 0
        %832 = vmatprep.subr.bf16.mxu0 0
        %833 = vmatpush1.bf16.msra.mxu0 0
        %834 = vmatprep.mubr.bf16.mxu0 0
        %835 = vmatmul.mubr.bf16.gmra.mrb[0].mxu0 %v797
        %v836 = vpop.f32.mrb[0].mxu0
        %v837 = vadd.f32 0.0, %v836
        %v838 = vpop.f32.mrb[0].mxu0
        %v839 = vpop.f32.mrb[0].mxu0
        %v840 = vpop.f32.mrb[0].mxu0
        %841 = vdwg.mxu0
        %842 = vrot.lane.b32.xlu0 %v616, 112
        %v843 = vpop.permute.xlu0 %842
        %844 = vrot.lane.b32.xlu0 %v616, 80
        %v845 = vpop.permute.xlu0 %844
        %v847 = vsel %vm620, %v843, 0
        %v850 = vsel %vm620, %v845, 0
        %852 = vmatprep.subr.bf16.mxu0 0
        %853 = vmatpush1.bf16.xpose.msra.mxu0 %v850
        %854 = vmatprep.subr.bf16.mxu0 0
        %855 = vmatpush1.bf16.xpose.msra.mxu0 0
        %856 = vmatprep.subr.bf16.mxu0 0
        %857 = vmatpush1.bf16.xpose.msra.mxu0 0
        %858 = vmatprep.subr.bf16.mxu0 0
        %859 = vmatpush1.bf16.xpose.msra.mxu0 0
        %860 = vmatprep.subr.bf16.mxu0 0
        %861 = vmatpush1.bf16.xpose.msra.mxu0 0
        %862 = vmatprep.subr.bf16.mxu0 0
        %863 = vmatpush1.bf16.xpose.msra.mxu0 0
        %864 = vmatprep.subr.bf16.mxu0 0
        %865 = vmatpush1.bf16.xpose.msra.mxu0 0
        %866 = vmatprep.subr.bf16.mxu0 0
        %867 = vmatpush1.bf16.xpose.msra.mxu0 0
        %868 = vmatprep.subr.bf16.mxu0 0
        %869 = vmatpush1.bf16.xpose.msra.mxu0 0
        %870 = vmatprep.subr.bf16.mxu0 0
        %871 = vmatpush1.bf16.xpose.msra.mxu0 0
        %872 = vmatprep.subr.bf16.mxu0 0
        %873 = vmatpush1.bf16.xpose.msra.mxu0 0
        %874 = vmatprep.subr.bf16.mxu0 0
        %875 = vmatpush1.bf16.xpose.msra.mxu0 0
        %876 = vmatprep.subr.bf16.mxu0 0
        %877 = vmatpush1.bf16.xpose.msra.mxu0 0
        %878 = vmatprep.subr.bf16.mxu0 0
        %879 = vmatpush1.bf16.xpose.msra.mxu0 0
        %880 = vmatprep.subr.bf16.mxu0 0
        %881 = vmatpush1.bf16.xpose.msra.mxu0 0
        %882 = vmatprep.subr.bf16.mxu0 0
        %883 = vmatpush1.bf16.xpose.msra.mxu0 0
        %884 = vmatprep.mubr.bf16.mxu0 0
        %885 = vmatmul.mubr.bf16.gmra.mrb[0].mxu0 %v847
        %v886 = vpop.f32.mrb[0].mxu0
        %v887 = vadd.f32 0.0, %v886
        %v888 = vpop.f32.mrb[0].mxu0
        %v889 = vpop.f32.mrb[0].mxu0
        %v890 = vpop.f32.mrb[0].mxu0
        %891 = vdwg.mxu0
        %v892 = vmul.f32 %v887, 0.35355338
        %v893 = vsel %vm524, %v892, -1e+30
        %v894 = vsel %vm620, %v893, -inf
        %895 = vmax.xlane.f32.xlu0 %v894
        %v896 = vpop.xlane.xlu0 %895
        %v897 = vsub.f32 %v893, %v896
        %v898 = vmul.f32 %v897, 1.442695
        %v899 = vpow.pop %v898
        %v900 = vsel %vm620, %v899, 0.0
        %901 = vadd.xlane.f32.xlu0 %v900
        %v902 = vpop.xlane.xlu0 %901
        %v903 = vrcp.pop %v902
        %v904 = vmul.f32 %v899, %v903
        %v905 = vpack.c.bf16 %v904, %v904
        %906 = vrot.lane.b32.xlu0 %v616, 48
        %v907 = vpop.permute.xlu0 %906
        %v909 = vsel %vm620, %v905, 0
        %v912 = vsel %vm686, %v907, 0
        %914 = vmatprep.subr.bf16.mxu0 0
        %915 = vmatpush1.bf16.msra.mxu0 %v912
        %916 = vmatprep.subr.bf16.mxu0 0
        %917 = vmatpush1.bf16.msra.mxu0 0
        %918 = vmatprep.subr.bf16.mxu0 0
        %919 = vmatpush1.bf16.msra.mxu0 0
        %920 = vmatprep.subr.bf16.mxu0 0
        %921 = vmatpush1.bf16.msra.mxu0 0
        %922 = vmatprep.subr.bf16.mxu0 0
        %923 = vmatpush1.bf16.msra.mxu0 0
        %924 = vmatprep.subr.bf16.mxu0 0
        %925 = vmatpush1.bf16.msra.mxu0 0
        %926 = vmatprep.subr.bf16.mxu0 0
        %927 = vmatpush1.bf16.msra.mxu0 0
        %928 = vmatprep.subr.bf16.mxu0 0
        %929 = vmatpush1.bf16.msra.mxu0 0
        %930 = vmatprep.subr.bf16.mxu0 0
        %931 = vmatpush1.bf16.msra.mxu0 0
        %932 = vmatprep.subr.bf16.mxu0 0
        %933 = vmatpush1.bf16.msra.mxu0 0
        %934 = vmatprep.subr.bf16.mxu0 0
        %935 = vmatpush1.bf16.msra.mxu0 0
        %936 = vmatprep.subr.bf16.mxu0 0
        %937 = vmatpush1.bf16.msra.mxu0 0
        %938 = vmatprep.subr.bf16.mxu0 0
        %939 = vmatpush1.bf16.msra.mxu0 0
        %940 = vmatprep.subr.bf16.mxu0 0
        %941 = vmatpush1.bf16.msra.mxu0 0
        %942 = vmatprep.subr.bf16.mxu0 0
        %943 = vmatpush1.bf16.msra.mxu0 0
        %944 = vmatprep.subr.bf16.mxu0 0
        %945 = vmatpush1.bf16.msra.mxu0 0
        %946 = vmatprep.mubr.bf16.mxu0 0
        %947 = vmatmul.mubr.bf16.gmra.mrb[0].mxu0 %v909
        %v948 = vpop.f32.mrb[0].mxu0
        %v949 = vadd.f32 0.0, %v948
        %v950 = vpop.f32.mrb[0].mxu0
        %v951 = vpop.f32.mrb[0].mxu0
        %v952 = vpop.f32.mrb[0].mxu0
        %953 = vdwg.mxu0
        %954 = vrot.lane.b32.xlu0 %v616, 104
        %v955 = vpop.permute.xlu0 %954
        %956 = vrot.lane.b32.xlu0 %v616, 72
        %v957 = vpop.permute.xlu0 %956
        %v959 = vsel %vm620, %v955, 0
        %v962 = vsel %vm620, %v957, 0
        %964 = vmatprep.subr.bf16.mxu0 0
        %965 = vmatpush1.bf16.xpose.msra.mxu0 %v962
        %966 = vmatprep.subr.bf16.mxu0 0
        %967 = vmatpush1.bf16.xpose.msra.mxu0 0
        %968 = vmatprep.subr.bf16.mxu0 0
        %969 = vmatpush1.bf16.xpose.msra.mxu0 0
        %970 = vmatprep.subr.bf16.mxu0 0
        %971 = vmatpush1.bf16.xpose.msra.mxu0 0
        %972 = vmatprep.subr.bf16.mxu0 0
        %973 = vmatpush1.bf16.xpose.msra.mxu0 0
        %974 = vmatprep.subr.bf16.mxu0 0
        %975 = vmatpush1.bf16.xpose.msra.mxu0 0
        %976 = vmatprep.subr.bf16.mxu0 0
        %977 = vmatpush1.bf16.xpose.msra.mxu0 0
        %978 = vmatprep.subr.bf16.mxu0 0
        %979 = vmatpush1.bf16.xpose.msra.mxu0 0
        %980 = vmatprep.subr.bf16.mxu0 0
        %981 = vmatpush1.bf16.xpose.msra.mxu0 0
        %982 = vmatprep.subr.bf16.mxu0 0
        %983 = vmatpush1.bf16.xpose.msra.mxu0 0
        %984 = vmatprep.subr.bf16.mxu0 0
        %985 = vmatpush1.bf16.xpose.msra.mxu0 0
        %986 = vmatprep.subr.bf16.mxu0 0
        %987 = vmatpush1.bf16.xpose.msra.mxu0 0
        %988 = vmatprep.subr.bf16.mxu0 0
        %989 = vmatpush1.bf16.xpose.msra.mxu0 0
        %990 = vmatprep.subr.bf16.mxu0 0
        %991 = vmatpush1.bf16.xpose.msra.mxu0 0
        %992 = vmatprep.subr.bf16.mxu0 0
        %993 = vmatpush1.bf16.xpose.msra.mxu0 0
        %994 = vmatprep.subr.bf16.mxu0 0
        %995 = vmatpush1.bf16.xpose.msra.mxu0 0
        %996 = vmatprep.mubr.bf16.mxu0 0
        %997 = vmatmul.mubr.bf16.gmra.mrb[0].mxu0 %v959
        %v998 = vpop.f32.mrb[0].mxu0
        %v999 = vadd.f32 0.0, %v998
        %v1000 = vpop.f32.mrb[0].mxu0
        %v1001 = vpop.f32.mrb[0].mxu0
        %v1002 = vpop.f32.mrb[0].mxu0
        %1003 = vdwg.mxu0
        %v1004 = vmul.f32 %v999, 0.35355338
        %v1005 = vsel %vm524, %v1004, -1e+30
        %v1006 = vsel %vm620, %v1005, -inf
        %1007 = vmax.xlane.f32.xlu0 %v1006
        %v1008 = vpop.xlane.xlu0 %1007
        %v1009 = vsub.f32 %v1005, %v1008
        %v1010 = vmul.f32 %v1009, 1.442695
        %v1011 = vpow.pop %v1010
        %v1012 = vsel %vm620, %v1011, 0.0
        %1013 = vadd.xlane.f32.xlu0 %v1012
        %v1014 = vpop.xlane.xlu0 %1013
        %v1015 = vrcp.pop %v1014
        %v1016 = vmul.f32 %v1011, %v1015
        %v1017 = vpack.c.bf16 %v1016, %v1016
        %1018 = vrot.lane.b32.xlu0 %v616, 40
        %v1019 = vpop.permute.xlu0 %1018
        %v1021 = vsel %vm620, %v1017, 0
        %v1024 = vsel %vm686, %v1019, 0
        %1026 = vmatprep.subr.bf16.mxu0 0
        %1027 = vmatpush1.bf16.msra.mxu0 %v1024
        %1028 = vmatprep.subr.bf16.mxu0 0
        %1029 = vmatpush1.bf16.msra.mxu0 0
        %1030 = vmatprep.subr.bf16.mxu0 0
        %1031 = vmatpush1.bf16.msra.mxu0 0
        %1032 = vmatprep.subr.bf16.mxu0 0
        %1033 = vmatpush1.bf16.msra.mxu0 0
        %1034 = vmatprep.subr.bf16.mxu0 0
        %1035 = vmatpush1.bf16.msra.mxu0 0
        %1036 = vmatprep.subr.bf16.mxu0 0
        %1037 = vmatpush1.bf16.msra.mxu0 0
        %1038 = vmatprep.subr.bf16.mxu0 0
        %1039 = vmatpush1.bf16.msra.mxu0 0
        %1040 = vmatprep.subr.bf16.mxu0 0
        %1041 = vmatpush1.bf16.msra.mxu0 0
        %1042 = vmatprep.subr.bf16.mxu0 0
        %1043 = vmatpush1.bf16.msra.mxu0 0
        %1044 = vmatprep.subr.bf16.mxu0 0
        %1045 = vmatpush1.bf16.msra.mxu0 0
        %1046 = vmatprep.subr.bf16.mxu0 0
        %1047 = vmatpush1.bf16.msra.mxu0 0
        %1048 = vmatprep.subr.bf16.mxu0 0
        %1049 = vmatpush1.bf16.msra.mxu0 0
        %1050 = vmatprep.subr.bf16.mxu0 0
        %1051 = vmatpush1.bf16.msra.mxu0 0
        %1052 = vmatprep.subr.bf16.mxu0 0
        %1053 = vmatpush1.bf16.msra.mxu0 0
        %1054 = vmatprep.subr.bf16.mxu0 0
        %1055 = vmatpush1.bf16.msra.mxu0 0
        %1056 = vmatprep.subr.bf16.mxu0 0
        %1057 = vmatpush1.bf16.msra.mxu0 0
        %1058 = vmatprep.mubr.bf16.mxu0 0
        %1059 = vmatmul.mubr.bf16.gmra.mrb[0].mxu0 %v1021
        %v1060 = vpop.f32.mrb[0].mxu0
        %v1061 = vadd.f32 0.0, %v1060
        %v1062 = vpop.f32.mrb[0].mxu0
        %v1063 = vpop.f32.mrb[0].mxu0
        %v1064 = vpop.f32.mrb[0].mxu0
        %1065 = vdwg.mxu0
        %1067 = vrot.lane.b32.xlu0 %v837, 8
        %v1068 = vpop.permute.xlu0 %1067
        %1071 = vrot.lane.b32.xlu0 %v949, 16
        %v1072 = vpop.permute.xlu0 %1071
        %1075 = vrot.lane.b32.xlu0 %v1061, 24
        %v1076 = vpop.permute.xlu0 %1075
        %v1078 = vsel %vm620, %v725, %v1068
        %vm1079 = vcmask 130048
        %v1080 = vsel %vm1079, %v1078, %v1072
        %vm1081 = vcmask 195584
        %v1082 = vsel %vm1081, %v1080, %v1076
        %v1083 = vpack.c.bf16 %v1082, %v1082
        %v1084 = vld [vmem:[%s4] sm:$0xf]
        %v1085 = vld [vmem:[%s4 + $0x4] sm:$0xf]
        %v1086 = vld [vmem:[%s4 + $0x8] sm:$0xf]
        %v1087 = vld [vmem:[%s4 + $0xc] sm:$0xf]
        %v1088 = vld [vmem:[%s5] sm:$0x1]
        %v1090 = vlaneseq
        %v1091 = vshrl.u32 %v1090, 7
        %v1092 = vsub.s32 0, %v1091
        %v1093 = vrot.slane %v1088, %v1092
        %v1099 = vunpack.c.l.b16 %v1084
        %v1100 = vunpack.c.l.b16 %v1085
        %v1101 = vunpack.c.l.b16 %v1086
        %v1102 = vunpack.c.l.b16 %v1087
        %v1103 = vpack.c.b16 %v1100, %v1099
        %v1104 = vpack.c.b16 %v1102, %v1101
        %v1108 = vsel %vm527, %v1083, 0
        %1110 = vmatprep.subr.bf16.mxu0 0
        %1111 = vmatpush1.bf16.msra.mxu0 %v1103
        %1112 = vmatprep.subr.bf16.mxu0 0
        %1113 = vmatpush1.bf16.msra.mxu0 %v1104
        %1114 = vmatprep.subr.bf16.mxu0 0
        %1115 = vmatpush1.bf16.msra.mxu0 0
        %1116 = vmatprep.subr.bf16.mxu0 0
        %1117 = vmatpush1.bf16.msra.mxu0 0
        %1118 = vmatprep.subr.bf16.mxu0 0
        %1119 = vmatpush1.bf16.msra.mxu0 0
        %1120 = vmatprep.subr.bf16.mxu0 0
        %1121 = vmatpush1.bf16.msra.mxu0 0
        %1122 = vmatprep.subr.bf16.mxu0 0
        %1123 = vmatpush1.bf16.msra.mxu0 0
        %1124 = vmatprep.subr.bf16.mxu0 0
        %1125 = vmatpush1.bf16.msra.mxu0 0
        %1126 = vmatprep.subr.bf16.mxu0 0
        %1127 = vmatpush1.bf16.msra.mxu0 0
        %1128 = vmatprep.subr.bf16.mxu0 0
        %1129 = vmatpush1.bf16.msra.mxu0 0
        %1130 = vmatprep.subr.bf16.mxu0 0
        %1131 = vmatpush1.bf16.msra.mxu0 0
        %1132 = vmatprep.subr.bf16.mxu0 0
        %1133 = vmatpush1.bf16.msra.mxu0 0
        %1134 = vmatprep.subr.bf16.mxu0 0
        %1135 = vmatpush1.bf16.msra.mxu0 0
        %1136 = vmatprep.subr.bf16.mxu0 0
        %1137 = vmatpush1.bf16.msra.mxu0 0
        %1138 = vmatprep.subr.bf16.mxu0 0
        %1139 = vmatpush1.bf16.msra.mxu0 0
        %1140 = vmatprep.subr.bf16.mxu0 0
        %1141 = vmatpush1.bf16.msra.mxu0 0
        %1142 = vmatprep.mubr.bf16.mxu0 0
        %1143 = vmatmul.mubr.bf16.gmra.mrb[0].mxu0 %v1108
        %v1144 = vpop.f32.mrb[0].mxu0
        %v1145 = vadd.f32 %v1093, %v1144
        %v1146 = vpop.f32.mrb[0].mxu0
        %v1147 = vpop.f32.mrb[0].mxu0
        %v1148 = vpop.f32.mrb[0].mxu0
        %1149 = vdwg.mxu0
        %v1150 = vadd.f32 %v519, %v1145
        %v1151 = vld [vmem:[%s6] sm:$0x1]
        %v1152 = vld [vmem:[%s7] sm:$0x1]
        %v1153 = vsel %vm527, %v1150, 0.0
        %1154 = vadd.xlane.f32.xlu0 %v1153
        %v1155 = vpop.xlane.xlu0 %1154
        %v1156 = vmul.f32 %v1155, %v531
        %v1157 = vsub.f32 %v1150, %v1156
        %v1158 = vmul.f32 %v1157, %v1157
        %v1159 = vsel %vm527, %v1158, 0.0
        %1160 = vadd.xlane.f32.xlu0 %v1159
        %v1161 = vpop.xlane.xlu0 %1160
        %v1162 = vmul.f32 %v1161, %v531
        %v1163 = vadd.f32 %v1162, 1e-05
        %v1164 = vrsqrt.pop %v1163
        %v1165 = vmul.f32 %v1157, %v1164
        %v1167 = vlaneseq
        %v1168 = vshrl.u32 %v1167, 7
        %v1169 = vsub.s32 0, %v1168
        %v1170 = vrot.slane %v1151, %v1169
        %v1172 = vmul.f32 %v1165, %v1170
        %v1174 = vlaneseq
        %v1175 = vshrl.u32 %v1174, 7
        %v1176 = vsub.s32 0, %v1175
        %v1177 = vrot.slane %v1152, %v1176
        %v1179 = vadd.f32 %v1172, %v1177
        %v1180 = vpack.c.bf16 %v1179, %v1179
        %v1181 = vld [vmem:[%s8] sm:$0xf]
        %v1182 = vld [vmem:[%s8 + $0x4] sm:$0xf]
        %v1183 = vld [vmem:[%s8 + $0x8] sm:$0xf]
        %v1184 = vld [vmem:[%s8 + $0xc] sm:$0xf]
        %v1185 = vld [vmem:[%s9] sm:$0x1]
        %v1187 = vlaneseq
        %v1188 = vshrl.u32 %v1187, 7
        %v1189 = vsub.s32 0, %v1188
        %v1190 = vrot.slane %v1185, %v1189
        %v1196 = vunpack.c.l.b16 %v1181
        %v1197 = vunpack.c.l.b16 %v1182
        %v1198 = vunpack.c.l.b16 %v1183
        %v1199 = vunpack.c.l.b16 %v1184
        %v1200 = vpack.c.b16 %v1197, %v1196
        %v1201 = vpack.c.b16 %v1199, %v1198
        %v1205 = vsel %vm527, %v1180, 0
        %1207 = vmatprep.subr.bf16.mxu0 0
        %1208 = vmatpush1.bf16.msra.mxu0 %v1200
        %1209 = vmatprep.subr.bf16.mxu0 0
        %1210 = vmatpush1.bf16.msra.mxu0 %v1201
        %1211 = vmatprep.subr.bf16.mxu0 0
        %1212 = vmatpush1.bf16.msra.mxu0 0
        %1213 = vmatprep.subr.bf16.mxu0 0
        %1214 = vmatpush1.bf16.msra.mxu0 0
        %1215 = vmatprep.subr.bf16.mxu0 0
        %1216 = vmatpush1.bf16.msra.mxu0 0
        %1217 = vmatprep.subr.bf16.mxu0 0
        %1218 = vmatpush1.bf16.msra.mxu0 0
        %1219 = vmatprep.subr.bf16.mxu0 0
        %1220 = vmatpush1.bf16.msra.mxu0 0
        %1221 = vmatprep.subr.bf16.mxu0 0
        %1222 = vmatpush1.bf16.msra.mxu0 0
        %1223 = vmatprep.subr.bf16.mxu0 0
        %1224 = vmatpush1.bf16.msra.mxu0 0
        %1225 = vmatprep.subr.bf16.mxu0 0
        %1226 = vmatpush1.bf16.msra.mxu0 0
        %1227 = vmatprep.subr.bf16.mxu0 0
        %1228 = vmatpush1.bf16.msra.mxu0 0
        %1229 = vmatprep.subr.bf16.mxu0 0
        %1230 = vmatpush1.bf16.msra.mxu0 0
        %1231 = vmatprep.subr.bf16.mxu0 0
        %1232 = vmatpush1.bf16.msra.mxu0 0
        %1233 = vmatprep.subr.bf16.mxu0 0
        %1234 = vmatpush1.bf16.msra.mxu0 0
        %1235 = vmatprep.subr.bf16.mxu0 0
        %1236 = vmatpush1.bf16.msra.mxu0 0
        %1237 = vmatprep.subr.bf16.mxu0 0
        %1238 = vmatpush1.bf16.msra.mxu0 0
        %1239 = vmatprep.mubr.bf16.mxu0 0
        %1240 = vmatmul.mubr.bf16.gmra.mrb[0].mxu0 %v1205
        %v1241 = vpop.f32.mrb[0].mxu0
        %v1242 = vadd.f32 %v1190, %v1241
        %v1243 = vpop.f32.mrb[0].mxu0
        %v1244 = vpop.f32.mrb[0].mxu0
        %v1245 = vpop.f32.mrb[0].mxu0
        %1246 = vdwg.mxu0
        %v1247 = vmax.f32 %v1242, 0.0
        %v1248 = vpack.c.bf16 %v1247, %v1247
        %v1249 = vld [vmem:[%s10] sm:$0xf]
        %v1250 = vld [vmem:[%s10 + $0x4] sm:$0xf]
        %v1251 = vld [vmem:[%s10 + $0x8] sm:$0xf]
        %v1252 = vld [vmem:[%s10 + $0xc] sm:$0xf]
        %v1253 = vld [vmem:[%s10 + $0x10] sm:$0xf]
        %v1254 = vld [vmem:[%s10 + $0x14] sm:$0xf]
        %v1255 = vld [vmem:[%s10 + $0x18] sm:$0xf]
        %v1256 = vld [vmem:[%s10 + $0x1c] sm:$0xf]
        %v1257 = vld [vmem:[%s10 + $0x20] sm:$0xf]
        %v1258 = vld [vmem:[%s10 + $0x24] sm:$0xf]
        %v1259 = vld [vmem:[%s10 + $0x28] sm:$0xf]
        %v1260 = vld [vmem:[%s10 + $0x2c] sm:$0xf]
        %v1261 = vld [vmem:[%s10 + $0x30] sm:$0xf]
        %v1262 = vld [vmem:[%s10 + $0x34] sm:$0xf]
        %v1263 = vld [vmem:[%s10 + $0x38] sm:$0xf]
        %v1264 = vld [vmem:[%s10 + $0x3c] sm:$0xf]
        %v1265 = vld [vmem:[%s11] sm:$0x1]
        %v1267 = vlaneseq
        %v1268 = vshrl.u32 %v1267, 7
        %v1269 = vsub.s32 0, %v1268
        %v1270 = vrot.slane %v1265, %v1269
        %v1288 = vunpack.c.l.b16 %v1249
        %v1289 = vunpack.c.l.b16 %v1250
        %v1290 = vunpack.c.l.b16 %v1251
        %v1291 = vunpack.c.l.b16 %v1252
        %v1292 = vunpack.c.l.b16 %v1253
        %v1293 = vunpack.c.l.b16 %v1254
        %v1294 = vunpack.c.l.b16 %v1255
        %v1295 = vunpack.c.l.b16 %v1256
        %v1296 = vunpack.c.l.b16 %v1257
        %v1297 = vunpack.c.l.b16 %v1258
        %v1298 = vunpack.c.l.b16 %v1259
        %v1299 = vunpack.c.l.b16 %v1260
        %v1300 = vunpack.c.l.b16 %v1261
        %v1301 = vunpack.c.l.b16 %v1262
        %v1302 = vunpack.c.l.b16 %v1263
        %v1303 = vunpack.c.l.b16 %v1264
        %v1304 = vpack.c.b16 %v1289, %v1288
        %v1305 = vpack.c.b16 %v1291, %v1290
        %v1306 = vpack.c.b16 %v1293, %v1292
        %v1307 = vpack.c.b16 %v1295, %v1294
        %v1308 = vpack.c.b16 %v1297, %v1296
        %v1309 = vpack.c.b16 %v1299, %v1298
        %v1310 = vpack.c.b16 %v1301, %v1300
        %v1311 = vpack.c.b16 %v1303, %v1302
        %1320 = vmatprep.subr.bf16.mxu0 0
        %1321 = vmatpush1.bf16.msra.mxu0 %v1304
        %1322 = vmatprep.subr.bf16.mxu0 0
        %1323 = vmatpush1.bf16.msra.mxu0 %v1305
        %1324 = vmatprep.subr.bf16.mxu0 0
        %1325 = vmatpush1.bf16.msra.mxu0 %v1306
        %1326 = vmatprep.subr.bf16.mxu0 0
        %1327 = vmatpush1.bf16.msra.mxu0 %v1307
        %1328 = vmatprep.subr.bf16.mxu0 0
        %1329 = vmatpush1.bf16.msra.mxu0 %v1308
        %1330 = vmatprep.subr.bf16.mxu0 0
        %1331 = vmatpush1.bf16.msra.mxu0 %v1309
        %1332 = vmatprep.subr.bf16.mxu0 0
        %1333 = vmatpush1.bf16.msra.mxu0 %v1310
        %1334 = vmatprep.subr.bf16.mxu0 0
        %1335 = vmatpush1.bf16.msra.mxu0 %v1311
        %1336 = vmatprep.subr.bf16.mxu0 0
        %1337 = vmatpush1.bf16.msra.mxu0 0
        %1338 = vmatprep.subr.bf16.mxu0 0
        %1339 = vmatpush1.bf16.msra.mxu0 0
        %1340 = vmatprep.subr.bf16.mxu0 0
        %1341 = vmatpush1.bf16.msra.mxu0 0
        %1342 = vmatprep.subr.bf16.mxu0 0
        %1343 = vmatpush1.bf16.msra.mxu0 0
        %1344 = vmatprep.subr.bf16.mxu0 0
        %1345 = vmatpush1.bf16.msra.mxu0 0
        %1346 = vmatprep.subr.bf16.mxu0 0
        %1347 = vmatpush1.bf16.msra.mxu0 0
        %1348 = vmatprep.subr.bf16.mxu0 0
        %1349 = vmatpush1.bf16.msra.mxu0 0
        %1350 = vmatprep.subr.bf16.mxu0 0
        %1351 = vmatpush1.bf16.msra.mxu0 0
        %1352 = vmatprep.mubr.bf16.mxu0 0
        %1353 = vmatmul.mubr.bf16.gmra.mrb[0].mxu0 %v1248
        %v1354 = vpop.f32.mrb[0].mxu0
        %v1355 = vadd.f32 %v1270, %v1354
        %v1356 = vpop.f32.mrb[0].mxu0
        %v1357 = vpop.f32.mrb[0].mxu0
        %v1358 = vpop.f32.mrb[0].mxu0
        %1359 = vdwg.mxu0
        %v1360 = vadd.f32 %v1150, %v1355
        %s1361 = scalar_lea.vmem %s1, 1
        %v1362 = vld [vmem:[%s1361] sm:$0x1]
        %s1363 = scalar_lea.vmem %s2, 1
        %v1364 = vld [vmem:[%s1363] sm:$0x1]
        %v1365 = vsel %vm527, %v1360, 0.0
        %1366 = vadd.xlane.f32.xlu0 %v1365
        %v1367 = vpop.xlane.xlu0 %1366
        %v1368 = vmul.f32 %v1367, %v531
        %v1369 = vsub.f32 %v1360, %v1368
        %v1370 = vmul.f32 %v1369, %v1369
        %v1371 = vsel %vm527, %v1370, 0.0
        %1372 = vadd.xlane.f32.xlu0 %v1371
        %v1373 = vpop.xlane.xlu0 %1372
        %v1374 = vmul.f32 %v1373, %v531
        %v1375 = vadd.f32 %v1374, 1e-05
        %v1376 = vrsqrt.pop %v1375
        %v1377 = vmul.f32 %v1369, %v1376
        %v1379 = vlaneseq
        %v1380 = vshrl.u32 %v1379, 7
        %v1381 = vsub.s32 0, %v1380
        %v1382 = vrot.slane %v1362, %v1381
        %v1384 = vmul.f32 %v1377, %v1382
        %v1386 = vlaneseq
        %v1387 = vshrl.u32 %v1386, 7
        %v1388 = vsub.s32 0, %v1387
        %v1389 = vrot.slane %v1364, %v1388
        %v1391 = vadd.f32 %v1384, %v1389
        %v1392 = vpack.c.bf16 %v1391, %v1391
        %s1393 = scalar_lea.vmem %s3, 16
        %v1394 = vld [vmem:[%s1393] sm:$0xf]
        %v1395 = vld [vmem:[%s1393 + $0x4] sm:$0xf]
        %v1396 = vld [vmem:[%s1393 + $0x8] sm:$0xf]
        %v1397 = vld [vmem:[%s1393 + $0xc] sm:$0xf]
        %v1402 = vunpack.c.l.b16 %v1394
        %v1403 = vunpack.c.l.b16 %v1395
        %v1404 = vunpack.c.l.b16 %v1396
        %v1405 = vunpack.c.l.b16 %v1397
        %v1406 = vpack.c.b16 %v1403, %v1402
        %v1407 = vpack.c.b16 %v1405, %v1404
        %v1411 = vsel %vm527, %v1392, 0
        %1413 = vmatprep.subr.bf16.mxu0 0
        %1414 = vmatpush1.bf16.msra.mxu0 %v1406
        %1415 = vmatprep.subr.bf16.mxu0 0
        %1416 = vmatpush1.bf16.msra.mxu0 %v1407
        %1417 = vmatprep.subr.bf16.mxu0 0
        %1418 = vmatpush1.bf16.msra.mxu0 0
        %1419 = vmatprep.subr.bf16.mxu0 0
        %1420 = vmatpush1.bf16.msra.mxu0 0
        %1421 = vmatprep.subr.bf16.mxu0 0
        %1422 = vmatpush1.bf16.msra.mxu0 0
        %1423 = vmatprep.subr.bf16.mxu0 0
        %1424 = vmatpush1.bf16.msra.mxu0 0
        %1425 = vmatprep.subr.bf16.mxu0 0
        %1426 = vmatpush1.bf16.msra.mxu0 0
        %1427 = vmatprep.subr.bf16.mxu0 0
        %1428 = vmatpush1.bf16.msra.mxu0 0
        %1429 = vmatprep.subr.bf16.mxu0 0
        %1430 = vmatpush1.bf16.msra.mxu0 0
        %1431 = vmatprep.subr.bf16.mxu0 0
        %1432 = vmatpush1.bf16.msra.mxu0 0
        %1433 = vmatprep.subr.bf16.mxu0 0
        %1434 = vmatpush1.bf16.msra.mxu0 0
        %1435 = vmatprep.subr.bf16.mxu0 0
        %1436 = vmatpush1.bf16.msra.mxu0 0
        %1437 = vmatprep.subr.bf16.mxu0 0
        %1438 = vmatpush1.bf16.msra.mxu0 0
        %1439 = vmatprep.subr.bf16.mxu0 0
        %1440 = vmatpush1.bf16.msra.mxu0 0
        %1441 = vmatprep.subr.bf16.mxu0 0
        %1442 = vmatpush1.bf16.msra.mxu0 0
        %1443 = vmatprep.subr.bf16.mxu0 0
        %1444 = vmatpush1.bf16.msra.mxu0 0
        %1445 = vmatprep.mubr.bf16.mxu0 0
        %1446 = vmatmul.mubr.bf16.gmra.mrb[0].mxu0 %v1411
        %v1447 = vpop.f32.mrb[0].mxu0
        %v1448 = vadd.f32 0.0, %v1447
        %v1449 = vpop.f32.mrb[0].mxu0
        %v1450 = vpop.f32.mrb[0].mxu0
        %v1451 = vpop.f32.mrb[0].mxu0
        %1452 = vdwg.mxu0
        %v1453 = vpack.c.bf16 %v1448, %v1448
        %1455 = vrot.lane.b32.xlu0 %v1453, 96
        %v1456 = vpop.permute.xlu0 %1455
        %v1458 = vsel %vm620, %v1453, 0
        %v1461 = vsel %vm620, %v1456, 0
        %1463 = vmatprep.subr.bf16.mxu0 0
        %1464 = vmatpush1.bf16.xpose.msra.mxu0 %v1461
        %1465 = vmatprep.subr.bf16.mxu0 0
        %1466 = vmatpush1.bf16.xpose.msra.mxu0 0
        %1467 = vmatprep.subr.bf16.mxu0 0
        %1468 = vmatpush1.bf16.xpose.msra.mxu0 0
        %1469 = vmatprep.subr.bf16.mxu0 0
        %1470 = vmatpush1.bf16.xpose.msra.mxu0 0
        %1471 = vmatprep.subr.bf16.mxu0 0
        %1472 = vmatpush1.bf16.xpose.msra.mxu0 0
        %1473 = vmatprep.subr.bf16.mxu0 0
        %1474 = vmatpush1.bf16.xpose.msra.mxu0 0
        %1475 = vmatprep.subr.bf16.mxu0 0
        %1476 = vmatpush1.bf16.xpose.msra.mxu0 0
        %1477 = vmatprep.subr.bf16.mxu0 0
        %1478 = vmatpush1.bf16.xpose.msra.mxu0 0
        %1479 = vmatprep.subr.bf16.mxu0 0
        %1480 = vmatpush1.bf16.xpose.msra.mxu0 0
        %1481 = vmatprep.subr.bf16.mxu0 0
        %1482 = vmatpush1.bf16.xpose.msra.mxu0 0
        %1483 = vmatprep.subr.bf16.mxu0 0
        %1484 = vmatpush1.bf16.xpose.msra.mxu0 0
        %1485 = vmatprep.subr.bf16.mxu0 0
        %1486 = vmatpush1.bf16.xpose.msra.mxu0 0
        %1487 = vmatprep.subr.bf16.mxu0 0
        %1488 = vmatpush1.bf16.xpose.msra.mxu0 0
        %1489 = vmatprep.subr.bf16.mxu0 0
        %1490 = vmatpush1.bf16.xpose.msra.mxu0 0
        %1491 = vmatprep.subr.bf16.mxu0 0
        %1492 = vmatpush1.bf16.xpose.msra.mxu0 0
        %1493 = vmatprep.subr.bf16.mxu0 0
        %1494 = vmatpush1.bf16.xpose.msra.mxu0 0
        %1495 = vmatprep.mubr.bf16.mxu0 0
        %1496 = vmatmul.mubr.bf16.gmra.mrb[0].mxu0 %v1458
        %v1497 = vpop.f32.mrb[0].mxu0
        %v1498 = vadd.f32 0.0, %v1497
        %v1499 = vpop.f32.mrb[0].mxu0
        %v1500 = vpop.f32.mrb[0].mxu0
        %v1501 = vpop.f32.mrb[0].mxu0
        %1502 = vdwg.mxu0
        %v1503 = vmul.f32 %v1498, 0.35355338
        %v1504 = vsel %vm524, %v1503, -1e+30
        %v1505 = vsel %vm620, %v1504, -inf
        %1506 = vmax.xlane.f32.xlu0 %v1505
        %v1507 = vpop.xlane.xlu0 %1506
        %v1508 = vsub.f32 %v1504, %v1507
        %v1509 = vmul.f32 %v1508, 1.442695
        %v1510 = vpow.pop %v1509
        %v1511 = vsel %vm620, %v1510, 0.0
        %1512 = vadd.xlane.f32.xlu0 %v1511
        %v1513 = vpop.xlane.xlu0 %1512
        %v1514 = vrcp.pop %v1513
        %v1515 = vmul.f32 %v1510, %v1514
        %v1516 = vpack.c.bf16 %v1515, %v1515
        %1517 = vrot.lane.b32.xlu0 %v1453, 64
        %v1518 = vpop.permute.xlu0 %1517
        %v1520 = vsel %vm620, %v1516, 0
        %v1523 = vsel %vm686, %v1518, 0
        %1525 = vmatprep.subr.bf16.mxu0 0
        %1526 = vmatpush1.bf16.msra.mxu0 %v1523
        %1527 = vmatprep.subr.bf16.mxu0 0
        %1528 = vmatpush1.bf16.msra.mxu0 0
        %1529 = vmatprep.subr.bf16.mxu0 0
        %1530 = vmatpush1.bf16.msra.mxu0 0
        %1531 = vmatprep.subr.bf16.mxu0 0
        %1532 = vmatpush1.bf16.msra.mxu0 0
        %1533 = vmatprep.subr.bf16.mxu0 0
        %1534 = vmatpush1.bf16.msra.mxu0 0
        %1535 = vmatprep.subr.bf16.mxu0 0
        %1536 = vmatpush1.bf16.msra.mxu0 0
        %1537 = vmatprep.subr.bf16.mxu0 0
        %1538 = vmatpush1.bf16.msra.mxu0 0
        %1539 = vmatprep.subr.bf16.mxu0 0
        %1540 = vmatpush1.bf16.msra.mxu0 0
        %1541 = vmatprep.subr.bf16.mxu0 0
        %1542 = vmatpush1.bf16.msra.mxu0 0
        %1543 = vmatprep.subr.bf16.mxu0 0
        %1544 = vmatpush1.bf16.msra.mxu0 0
        %1545 = vmatprep.subr.bf16.mxu0 0
        %1546 = vmatpush1.bf16.msra.mxu0 0
        %1547 = vmatprep.subr.bf16.mxu0 0
        %1548 = vmatpush1.bf16.msra.mxu0 0
        %1549 = vmatprep.subr.bf16.mxu0 0
        %1550 = vmatpush1.bf16.msra.mxu0 0
        %1551 = vmatprep.subr.bf16.mxu0 0
        %1552 = vmatpush1.bf16.msra.mxu0 0
        %1553 = vmatprep.subr.bf16.mxu0 0
        %1554 = vmatpush1.bf16.msra.mxu0 0
        %1555 = vmatprep.subr.bf16.mxu0 0
        %1556 = vmatpush1.bf16.msra.mxu0 0
        %1557 = vmatprep.mubr.bf16.mxu0 0
        %1558 = vmatmul.mubr.bf16.gmra.mrb[0].mxu0 %v1520
        %v1559 = vpop.f32.mrb[0].mxu0
        %v1560 = vadd.f32 0.0, %v1559
        %v1561 = vpop.f32.mrb[0].mxu0
        %v1562 = vpop.f32.mrb[0].mxu0
        %v1563 = vpop.f32.mrb[0].mxu0
        %1564 = vdwg.mxu0
        %1565 = vrot.lane.b32.xlu0 %v1453, 120
        %v1566 = vpop.permute.xlu0 %1565
        %1567 = vrot.lane.b32.xlu0 %v1453, 88
        %v1568 = vpop.permute.xlu0 %1567
        %v1570 = vsel %vm620, %v1566, 0
        %v1573 = vsel %vm620, %v1568, 0
        %1575 = vmatprep.subr.bf16.mxu0 0
        %1576 = vmatpush1.bf16.xpose.msra.mxu0 %v1573
        %1577 = vmatprep.subr.bf16.mxu0 0
        %1578 = vmatpush1.bf16.xpose.msra.mxu0 0
        %1579 = vmatprep.subr.bf16.mxu0 0
        %1580 = vmatpush1.bf16.xpose.msra.mxu0 0
        %1581 = vmatprep.subr.bf16.mxu0 0
        %1582 = vmatpush1.bf16.xpose.msra.mxu0 0
        %1583 = vmatprep.subr.bf16.mxu0 0
        %1584 = vmatpush1.bf16.xpose.msra.mxu0 0
        %1585 = vmatprep.subr.bf16.mxu0 0
        %1586 = vmatpush1.bf16.xpose.msra.mxu0 0
        %1587 = vmatprep.subr.bf16.mxu0 0
        %1588 = vmatpush1.bf16.xpose.msra.mxu0 0
        %1589 = vmatprep.subr.bf16.mxu0 0
        %1590 = vmatpush1.bf16.xpose.msra.mxu0 0
        %1591 = vmatprep.subr.bf16.mxu0 0
        %1592 = vmatpush1.bf16.xpose.msra.mxu0 0
        %1593 = vmatprep.subr.bf16.mxu0 0
        %1594 = vmatpush1.bf16.xpose.msra.mxu0 0
        %1595 = vmatprep.subr.bf16.mxu0 0
        %1596 = vmatpush1.bf16.xpose.msra.mxu0 0
        %1597 = vmatprep.subr.bf16.mxu0 0
        %1598 = vmatpush1.bf16.xpose.msra.mxu0 0
        %1599 = vmatprep.subr.bf16.mxu0 0
        %1600 = vmatpush1.bf16.xpose.msra.mxu0 0
        %1601 = vmatprep.subr.bf16.mxu0 0
        %1602 = vmatpush1.bf16.xpose.msra.mxu0 0
        %1603 = vmatprep.subr.bf16.mxu0 0
        %1604 = vmatpush1.bf16.xpose.msra.mxu0 0
        %1605 = vmatprep.subr.bf16.mxu0 0
        %1606 = vmatpush1.bf16.xpose.msra.mxu0 0
        %1607 = vmatprep.mubr.bf16.mxu0 0
        %1608 = vmatmul.mubr.bf16.gmra.mrb[0].mxu0 %v1570
        %v1609 = vpop.f32.mrb[0].mxu0
        %v1610 = vadd.f32 0.0, %v1609
        %v1611 = vpop.f32.mrb[0].mxu0
        %v1612 = vpop.f32.mrb[0].mxu0
        %v1613 = vpop.f32.mrb[0].mxu0
        %1614 = vdwg.mxu0
        %v1615 = vmul.f32 %v1610, 0.35355338
        %v1616 = vsel %vm524, %v1615, -1e+30
        %v1617 = vsel %vm620, %v1616, -inf
        %1618 = vmax.xlane.f32.xlu0 %v1617
        %v1619 = vpop.xlane.xlu0 %1618
        %v1620 = vsub.f32 %v1616, %v1619
        %v1621 = vmul.f32 %v1620, 1.442695
        %v1622 = vpow.pop %v1621
        %v1623 = vsel %vm620, %v1622, 0.0
        %1624 = vadd.xlane.f32.xlu0 %v1623
        %v1625 = vpop.xlane.xlu0 %1624
        %v1626 = vrcp.pop %v1625
        %v1627 = vmul.f32 %v1622, %v1626
        %v1628 = vpack.c.bf16 %v1627, %v1627
        %1629 = vrot.lane.b32.xlu0 %v1453, 56
        %v1630 = vpop.permute.xlu0 %1629
        %v1632 = vsel %vm620, %v1628, 0
        %v1635 = vsel %vm686, %v1630, 0
        %1637 = vmatprep.subr.bf16.mxu0 0
        %1638 = vmatpush1.bf16.msra.mxu0 %v1635
        %1639 = vmatprep.subr.bf16.mxu0 0
        %1640 = vmatpush1.bf16.msra.mxu0 0
        %1641 = vmatprep.subr.bf16.mxu0 0
        %1642 = vmatpush1.bf16.msra.mxu0 0
        %1643 = vmatprep.subr.bf16.mxu0 0
        %1644 = vmatpush1.bf16.msra.mxu0 0
        %1645 = vmatprep.subr.bf16.mxu0 0
        %1646 = vmatpush1.bf16.msra.mxu0 0
        %1647 = vmatprep.subr.bf16.mxu0 0
        %1648 = vmatpush1.bf16.msra.mxu0 0
        %1649 = vmatprep.subr.bf16.mxu0 0
        %1650 = vmatpush1.bf16.msra.mxu0 0
        %1651 = vmatprep.subr.bf16.mxu0 0
        %1652 = vmatpush1.bf16.msra.mxu0 0
        %1653 = vmatprep.subr.bf16.mxu0 0
        %1654 = vmatpush1.bf16.msra.mxu0 0
        %1655 = vmatprep.subr.bf16.mxu0 0
        %1656 = vmatpush1.bf16.msra.mxu0 0
        %1657 = vmatprep.subr.bf16.mxu0 0
        %1658 = vmatpush1.bf16.msra.mxu0 0
        %1659 = vmatprep.subr.bf16.mxu0 0
        %1660 = vmatpush1.bf16.msra.mxu0 0
        %1661 = vmatprep.subr.bf16.mxu0 0
        %1662 = vmatpush1.bf16.msra.mxu0 0
        %1663 = vmatprep.subr.bf16.mxu0 0
        %1664 = vmatpush1.bf16.msra.mxu0 0
        %1665 = vmatprep.subr.bf16.mxu0 0
        %1666 = vmatpush1.bf16.msra.mxu0 0
        %1667 = vmatprep.subr.bf16.mxu0 0
        %1668 = vmatpush1.bf16.msra.mxu0 0
        %1669 = vmatprep.mubr.bf16.mxu0 0
        %1670 = vmatmul.mubr.bf16.gmra.mrb[0].mxu0 %v1632
        %v1671 = vpop.f32.mrb[0].mxu0
        %v1672 = vadd.f32 0.0, %v1671
        %v1673 = vpop.f32.mrb[0].mxu0
        %v1674 = vpop.f32.mrb[0].mxu0
        %v1675 = vpop.f32.mrb[0].mxu0
        %1676 = vdwg.mxu0
        %1677 = vrot.lane.b32.xlu0 %v1453, 112
        %v1678 = vpop.permute.xlu0 %1677
        %1679 = vrot.lane.b32.xlu0 %v1453, 80
        %v1680 = vpop.permute.xlu0 %1679
        %v1682 = vsel %vm620, %v1678, 0
        %v1685 = vsel %vm620, %v1680, 0
        %1687 = vmatprep.subr.bf16.mxu0 0
        %1688 = vmatpush1.bf16.xpose.msra.mxu0 %v1685
        %1689 = vmatprep.subr.bf16.mxu0 0
        %1690 = vmatpush1.bf16.xpose.msra.mxu0 0
        %1691 = vmatprep.subr.bf16.mxu0 0
        %1692 = vmatpush1.bf16.xpose.msra.mxu0 0
        %1693 = vmatprep.subr.bf16.mxu0 0
        %1694 = vmatpush1.bf16.xpose.msra.mxu0 0
        %1695 = vmatprep.subr.bf16.mxu0 0
        %1696 = vmatpush1.bf16.xpose.msra.mxu0 0
        %1697 = vmatprep.subr.bf16.mxu0 0
        %1698 = vmatpush1.bf16.xpose.msra.mxu0 0
        %1699 = vmatprep.subr.bf16.mxu0 0
        %1700 = vmatpush1.bf16.xpose.msra.mxu0 0
        %1701 = vmatprep.subr.bf16.mxu0 0
        %1702 = vmatpush1.bf16.xpose.msra.mxu0 0
        %1703 = vmatprep.subr.bf16.mxu0 0
        %1704 = vmatpush1.bf16.xpose.msra.mxu0 0
        %1705 = vmatprep.subr.bf16.mxu0 0
        %1706 = vmatpush1.bf16.xpose.msra.mxu0 0
        %1707 = vmatprep.subr.bf16.mxu0 0
        %1708 = vmatpush1.bf16.xpose.msra.mxu0 0
        %1709 = vmatprep.subr.bf16.mxu0 0
        %1710 = vmatpush1.bf16.xpose.msra.mxu0 0
        %1711 = vmatprep.subr.bf16.mxu0 0
        %1712 = vmatpush1.bf16.xpose.msra.mxu0 0
        %1713 = vmatprep.subr.bf16.mxu0 0
        %1714 = vmatpush1.bf16.xpose.msra.mxu0 0
        %1715 = vmatprep.subr.bf16.mxu0 0
        %1716 = vmatpush1.bf16.xpose.msra.mxu0 0
        %1717 = vmatprep.subr.bf16.mxu0 0
        %1718 = vmatpush1.bf16.xpose.msra.mxu0 0
        %1719 = vmatprep.mubr.bf16.mxu0 0
        %1720 = vmatmul.mubr.bf16.gmra.mrb[0].mxu0 %v1682
        %v1721 = vpop.f32.mrb[0].mxu0
        %v1722 = vadd.f32 0.0, %v1721
        %v1723 = vpop.f32.mrb[0].mxu0
        %v1724 = vpop.f32.mrb[0].mxu0
        %v1725 = vpop.f32.mrb[0].mxu0
        %1726 = vdwg.mxu0
        %v1727 = vmul.f32 %v1722, 0.35355338
        %v1728 = vsel %vm524, %v1727, -1e+30
        %v1729 = vsel %vm620, %v1728, -inf
        %1730 = vmax.xlane.f32.xlu0 %v1729
        %v1731 = vpop.xlane.xlu0 %1730
        %v1732 = vsub.f32 %v1728, %v1731
        %v1733 = vmul.f32 %v1732, 1.442695
        %v1734 = vpow.pop %v1733
        %v1735 = vsel %vm620, %v1734, 0.0
        %1736 = vadd.xlane.f32.xlu0 %v1735
        %v1737 = vpop.xlane.xlu0 %1736
        %v1738 = vrcp.pop %v1737
        %v1739 = vmul.f32 %v1734, %v1738
        %v1740 = vpack.c.bf16 %v1739, %v1739
        %1741 = vrot.lane.b32.xlu0 %v1453, 48
        %v1742 = vpop.permute.xlu0 %1741
        %v1744 = vsel %vm620, %v1740, 0
        %v1747 = vsel %vm686, %v1742, 0
        %1749 = vmatprep.subr.bf16.mxu0 0
        %1750 = vmatpush1.bf16.msra.mxu0 %v1747
        %1751 = vmatprep.subr.bf16.mxu0 0
        %1752 = vmatpush1.bf16.msra.mxu0 0
        %1753 = vmatprep.subr.bf16.mxu0 0
        %1754 = vmatpush1.bf16.msra.mxu0 0
        %1755 = vmatprep.subr.bf16.mxu0 0
        %1756 = vmatpush1.bf16.msra.mxu0 0
        %1757 = vmatprep.subr.bf16.mxu0 0
        %1758 = vmatpush1.bf16.msra.mxu0 0
        %1759 = vmatprep.subr.bf16.mxu0 0
        %1760 = vmatpush1.bf16.msra.mxu0 0
        %1761 = vmatprep.subr.bf16.mxu0 0
        %1762 = vmatpush1.bf16.msra.mxu0 0
        %1763 = vmatprep.subr.bf16.mxu0 0
        %1764 = vmatpush1.bf16.msra.mxu0 0
        %1765 = vmatprep.subr.bf16.mxu0 0
        %1766 = vmatpush1.bf16.msra.mxu0 0
        %1767 = vmatprep.subr.bf16.mxu0 0
        %1768 = vmatpush1.bf16.msra.mxu0 0
        %1769 = vmatprep.subr.bf16.mxu0 0
        %1770 = vmatpush1.bf16.msra.mxu0 0
        %1771 = vmatprep.subr.bf16.mxu0 0
        %1772 = vmatpush1.bf16.msra.mxu0 0
        %1773 = vmatprep.subr.bf16.mxu0 0
        %1774 = vmatpush1.bf16.msra.mxu0 0
        %1775 = vmatprep.subr.bf16.mxu0 0
        %1776 = vmatpush1.bf16.msra.mxu0 0
        %1777 = vmatprep.subr.bf16.mxu0 0
        %1778 = vmatpush1.bf16.msra.mxu0 0
        %1779 = vmatprep.subr.bf16.mxu0 0
        %1780 = vmatpush1.bf16.msra.mxu0 0
        %1781 = vmatprep.mubr.bf16.mxu0 0
        %1782 = vmatmul.mubr.bf16.gmra.mrb[0].mxu0 %v1744
        %v1783 = vpop.f32.mrb[0].mxu0
        %v1784 = vadd.f32 0.0, %v1783
        %v1785 = vpop.f32.mrb[0].mxu0
        %v1786 = vpop.f32.mrb[0].mxu0
        %v1787 = vpop.f32.mrb[0].mxu0
        %1788 = vdwg.mxu0
        %1789 = vrot.lane.b32.xlu0 %v1453, 104
        %v1790 = vpop.permute.xlu0 %1789
        %1791 = vrot.lane.b32.xlu0 %v1453, 72
        %v1792 = vpop.permute.xlu0 %1791
        %v1794 = vsel %vm620, %v1790, 0
        %v1797 = vsel %vm620, %v1792, 0
        %1799 = vmatprep.subr.bf16.mxu0 0
        %1800 = vmatpush1.bf16.xpose.msra.mxu0 %v1797
        %1801 = vmatprep.subr.bf16.mxu0 0
        %1802 = vmatpush1.bf16.xpose.msra.mxu0 0
        %1803 = vmatprep.subr.bf16.mxu0 0
        %1804 = vmatpush1.bf16.xpose.msra.mxu0 0
        %1805 = vmatprep.subr.bf16.mxu0 0
        %1806 = vmatpush1.bf16.xpose.msra.mxu0 0
        %1807 = vmatprep.subr.bf16.mxu0 0
        %1808 = vmatpush1.bf16.xpose.msra.mxu0 0
        %1809 = vmatprep.subr.bf16.mxu0 0
        %1810 = vmatpush1.bf16.xpose.msra.mxu0 0
        %1811 = vmatprep.subr.bf16.mxu0 0
        %1812 = vmatpush1.bf16.xpose.msra.mxu0 0
        %1813 = vmatprep.subr.bf16.mxu0 0
        %1814 = vmatpush1.bf16.xpose.msra.mxu0 0
        %1815 = vmatprep.subr.bf16.mxu0 0
        %1816 = vmatpush1.bf16.xpose.msra.mxu0 0
        %1817 = vmatprep.subr.bf16.mxu0 0
        %1818 = vmatpush1.bf16.xpose.msra.mxu0 0
        %1819 = vmatprep.subr.bf16.mxu0 0
        %1820 = vmatpush1.bf16.xpose.msra.mxu0 0
        %1821 = vmatprep.subr.bf16.mxu0 0
        %1822 = vmatpush1.bf16.xpose.msra.mxu0 0
        %1823 = vmatprep.subr.bf16.mxu0 0
        %1824 = vmatpush1.bf16.xpose.msra.mxu0 0
        %1825 = vmatprep.subr.bf16.mxu0 0
        %1826 = vmatpush1.bf16.xpose.msra.mxu0 0
        %1827 = vmatprep.subr.bf16.mxu0 0
        %1828 = vmatpush1.bf16.xpose.msra.mxu0 0
        %1829 = vmatprep.subr.bf16.mxu0 0
        %1830 = vmatpush1.bf16.xpose.msra.mxu0 0
        %1831 = vmatprep.mubr.bf16.mxu0 0
        %1832 = vmatmul.mubr.bf16.gmra.mrb[0].mxu0 %v1794
        %v1833 = vpop.f32.mrb[0].mxu0
        %v1834 = vadd.f32 0.0, %v1833
        %v1835 = vpop.f32.mrb[0].mxu0
        %v1836 = vpop.f32.mrb[0].mxu0
        %v1837 = vpop.f32.mrb[0].mxu0
        %1838 = vdwg.mxu0
        %v1839 = vmul.f32 %v1834, 0.35355338
        %v1840 = vsel %vm524, %v1839, -1e+30
        %v1841 = vsel %vm620, %v1840, -inf
        %1842 = vmax.xlane.f32.xlu0 %v1841
        %v1843 = vpop.xlane.xlu0 %1842
        %v1844 = vsub.f32 %v1840, %v1843
        %v1845 = vmul.f32 %v1844, 1.442695
        %v1846 = vpow.pop %v1845
        %v1847 = vsel %vm620, %v1846, 0.0
        %1848 = vadd.xlane.f32.xlu0 %v1847
        %v1849 = vpop.xlane.xlu0 %1848
        %v1850 = vrcp.pop %v1849
        %v1851 = vmul.f32 %v1846, %v1850
        %v1852 = vpack.c.bf16 %v1851, %v1851
        %1853 = vrot.lane.b32.xlu0 %v1453, 40
        %v1854 = vpop.permute.xlu0 %1853
        %v1856 = vsel %vm620, %v1852, 0
        %v1859 = vsel %vm686, %v1854, 0
        %1861 = vmatprep.subr.bf16.mxu0 0
        %1862 = vmatpush1.bf16.msra.mxu0 %v1859
        %1863 = vmatprep.subr.bf16.mxu0 0
        %1864 = vmatpush1.bf16.msra.mxu0 0
        %1865 = vmatprep.subr.bf16.mxu0 0
        %1866 = vmatpush1.bf16.msra.mxu0 0
        %1867 = vmatprep.subr.bf16.mxu0 0
        %1868 = vmatpush1.bf16.msra.mxu0 0
        %1869 = vmatprep.subr.bf16.mxu0 0
        %1870 = vmatpush1.bf16.msra.mxu0 0
        %1871 = vmatprep.subr.bf16.mxu0 0
        %1872 = vmatpush1.bf16.msra.mxu0 0
        %1873 = vmatprep.subr.bf16.mxu0 0
        %1874 = vmatpush1.bf16.msra.mxu0 0
        %1875 = vmatprep.subr.bf16.mxu0 0
        %1876 = vmatpush1.bf16.msra.mxu0 0
        %1877 = vmatprep.subr.bf16.mxu0 0
        %1878 = vmatpush1.bf16.msra.mxu0 0
        %1879 = vmatprep.subr.bf16.mxu0 0
        %1880 = vmatpush1.bf16.msra.mxu0 0
        %1881 = vmatprep.subr.bf16.mxu0 0
        %1882 = vmatpush1.bf16.msra.mxu0 0
        %1883 = vmatprep.subr.bf16.mxu0 0
        %1884 = vmatpush1.bf16.msra.mxu0 0
        %1885 = vmatprep.subr.bf16.mxu0 0
        %1886 = vmatpush1.bf16.msra.mxu0 0
        %1887 = vmatprep.subr.bf16.mxu0 0
        %1888 = vmatpush1.bf16.msra.mxu0 0
        %1889 = vmatprep.subr.bf16.mxu0 0
        %1890 = vmatpush1.bf16.msra.mxu0 0
        %1891 = vmatprep.subr.bf16.mxu0 0
        %1892 = vmatpush1.bf16.msra.mxu0 0
        %1893 = vmatprep.mubr.bf16.mxu0 0
        %1894 = vmatmul.mubr.bf16.gmra.mrb[0].mxu0 %v1856
        %v1895 = vpop.f32.mrb[0].mxu0
        %v1896 = vadd.f32 0.0, %v1895
        %v1897 = vpop.f32.mrb[0].mxu0
        %v1898 = vpop.f32.mrb[0].mxu0
        %v1899 = vpop.f32.mrb[0].mxu0
        %1900 = vdwg.mxu0
        %1902 = vrot.lane.b32.xlu0 %v1672, 8
        %v1903 = vpop.permute.xlu0 %1902
        %1906 = vrot.lane.b32.xlu0 %v1784, 16
        %v1907 = vpop.permute.xlu0 %1906
        %1910 = vrot.lane.b32.xlu0 %v1896, 24
        %v1911 = vpop.permute.xlu0 %1910
        %v1913 = vsel %vm620, %v1560, %v1903
        %v1914 = vsel %vm1079, %v1913, %v1907
        %v1915 = vsel %vm1081, %v1914, %v1911
        %v1916 = vpack.c.bf16 %v1915, %v1915
        %s1917 = scalar_lea.vmem %s4, 16
        %v1918 = vld [vmem:[%s1917] sm:$0xf]
        %v1919 = vld [vmem:[%s1917 + $0x4] sm:$0xf]
        %v1920 = vld [vmem:[%s1917 + $0x8] sm:$0xf]
        %v1921 = vld [vmem:[%s1917 + $0xc] sm:$0xf]
        %s1922 = scalar_lea.vmem %s5, 1
        %v1923 = vld [vmem:[%s1922] sm:$0x1]
        %v1925 = vlaneseq
        %v1926 = vshrl.u32 %v1925, 7
        %v1927 = vsub.s32 0, %v1926
        %v1928 = vrot.slane %v1923, %v1927
        %v1934 = vunpack.c.l.b16 %v1918
        %v1935 = vunpack.c.l.b16 %v1919
        %v1936 = vunpack.c.l.b16 %v1920
        %v1937 = vunpack.c.l.b16 %v1921
        %v1938 = vpack.c.b16 %v1935, %v1934
        %v1939 = vpack.c.b16 %v1937, %v1936
        %v1943 = vsel %vm527, %v1916, 0
        %1945 = vmatprep.subr.bf16.mxu0 0
        %1946 = vmatpush1.bf16.msra.mxu0 %v1938
        %1947 = vmatprep.subr.bf16.mxu0 0
        %1948 = vmatpush1.bf16.msra.mxu0 %v1939
        %1949 = vmatprep.subr.bf16.mxu0 0
        %1950 = vmatpush1.bf16.msra.mxu0 0
        %1951 = vmatprep.subr.bf16.mxu0 0
        %1952 = vmatpush1.bf16.msra.mxu0 0
        %1953 = vmatprep.subr.bf16.mxu0 0
        %1954 = vmatpush1.bf16.msra.mxu0 0
        %1955 = vmatprep.subr.bf16.mxu0 0
        %1956 = vmatpush1.bf16.msra.mxu0 0
        %1957 = vmatprep.subr.bf16.mxu0 0
        %1958 = vmatpush1.bf16.msra.mxu0 0
        %1959 = vmatprep.subr.bf16.mxu0 0
        %1960 = vmatpush1.bf16.msra.mxu0 0
        %1961 = vmatprep.subr.bf16.mxu0 0
        %1962 = vmatpush1.bf16.msra.mxu0 0
        %1963 = vmatprep.subr.bf16.mxu0 0
        %1964 = vmatpush1.bf16.msra.mxu0 0
        %1965 = vmatprep.subr.bf16.mxu0 0
        %1966 = vmatpush1.bf16.msra.mxu0 0
        %1967 = vmatprep.subr.bf16.mxu0 0
        %1968 = vmatpush1.bf16.msra.mxu0 0
        %1969 = vmatprep.subr.bf16.mxu0 0
        %1970 = vmatpush1.bf16.msra.mxu0 0
        %1971 = vmatprep.subr.bf16.mxu0 0
        %1972 = vmatpush1.bf16.msra.mxu0 0
        %1973 = vmatprep.subr.bf16.mxu0 0
        %1974 = vmatpush1.bf16.msra.mxu0 0
        %1975 = vmatprep.subr.bf16.mxu0 0
        %1976 = vmatpush1.bf16.msra.mxu0 0
        %1977 = vmatprep.mubr.bf16.mxu0 0
        %1978 = vmatmul.mubr.bf16.gmra.mrb[0].mxu0 %v1943
        %v1979 = vpop.f32.mrb[0].mxu0
        %v1980 = vadd.f32 %v1928, %v1979
        %v1981 = vpop.f32.mrb[0].mxu0
        %v1982 = vpop.f32.mrb[0].mxu0
        %v1983 = vpop.f32.mrb[0].mxu0
        %1984 = vdwg.mxu0
        %v1985 = vadd.f32 %v1360, %v1980
        %s1986 = scalar_lea.vmem %s6, 1
        %v1987 = vld [vmem:[%s1986] sm:$0x1]
        %s1988 = scalar_lea.vmem %s7, 1
        %v1989 = vld [vmem:[%s1988] sm:$0x1]
        %v1990 = vsel %vm527, %v1985, 0.0
        %1991 = vadd.xlane.f32.xlu0 %v1990
        %v1992 = vpop.xlane.xlu0 %1991
        %v1993 = vmul.f32 %v1992, %v531
        %v1994 = vsub.f32 %v1985, %v1993
        %v1995 = vmul.f32 %v1994, %v1994
        %v1996 = vsel %vm527, %v1995, 0.0
        %1997 = vadd.xlane.f32.xlu0 %v1996
        %v1998 = vpop.xlane.xlu0 %1997
        %v1999 = vmul.f32 %v1998, %v531
        %v2000 = vadd.f32 %v1999, 1e-05
        %v2001 = vrsqrt.pop %v2000
        %v2002 = vmul.f32 %v1994, %v2001
        %v2004 = vlaneseq
        %v2005 = vshrl.u32 %v2004, 7
        %v2006 = vsub.s32 0, %v2005
        %v2007 = vrot.slane %v1987, %v2006
        %v2009 = vmul.f32 %v2002, %v2007
        %v2011 = vlaneseq
        %v2012 = vshrl.u32 %v2011, 7
        %v2013 = vsub.s32 0, %v2012
        %v2014 = vrot.slane %v1989, %v2013
        %v2016 = vadd.f32 %v2009, %v2014
        %v2017 = vpack.c.bf16 %v2016, %v2016
        %s2018 = scalar_lea.vmem %s8, 16
        %v2019 = vld [vmem:[%s2018] sm:$0xf]
        %v2020 = vld [vmem:[%s2018 + $0x4] sm:$0xf]
        %v2021 = vld [vmem:[%s2018 + $0x8] sm:$0xf]
        %v2022 = vld [vmem:[%s2018 + $0xc] sm:$0xf]
        %s2023 = scalar_lea.vmem %s9, 1
        %v2024 = vld [vmem:[%s2023] sm:$0x1]
        %v2026 = vlaneseq
        %v2027 = vshrl.u32 %v2026, 7
        %v2028 = vsub.s32 0, %v2027
        %v2029 = vrot.slane %v2024, %v2028
        %v2035 = vunpack.c.l.b16 %v2019
        %v2036 = vunpack.c.l.b16 %v2020
        %v2037 = vunpack.c.l.b16 %v2021
        %v2038 = vunpack.c.l.b16 %v2022
        %v2039 = vpack.c.b16 %v2036, %v2035
        %v2040 = vpack.c.b16 %v2038, %v2037
        %v2044 = vsel %vm527, %v2017, 0
        %2046 = vmatprep.subr.bf16.mxu0 0
        %2047 = vmatpush1.bf16.msra.mxu0 %v2039
        %2048 = vmatprep.subr.bf16.mxu0 0
        %2049 = vmatpush1.bf16.msra.mxu0 %v2040
        %2050 = vmatprep.subr.bf16.mxu0 0
        %2051 = vmatpush1.bf16.msra.mxu0 0
        %2052 = vmatprep.subr.bf16.mxu0 0
        %2053 = vmatpush1.bf16.msra.mxu0 0
        %2054 = vmatprep.subr.bf16.mxu0 0
        %2055 = vmatpush1.bf16.msra.mxu0 0
        %2056 = vmatprep.subr.bf16.mxu0 0
        %2057 = vmatpush1.bf16.msra.mxu0 0
        %2058 = vmatprep.subr.bf16.mxu0 0
        %2059 = vmatpush1.bf16.msra.mxu0 0
        %2060 = vmatprep.subr.bf16.mxu0 0
        %2061 = vmatpush1.bf16.msra.mxu0 0
        %2062 = vmatprep.subr.bf16.mxu0 0
        %2063 = vmatpush1.bf16.msra.mxu0 0
        %2064 = vmatprep.subr.bf16.mxu0 0
        %2065 = vmatpush1.bf16.msra.mxu0 0
        %2066 = vmatprep.subr.bf16.mxu0 0
        %2067 = vmatpush1.bf16.msra.mxu0 0
        %2068 = vmatprep.subr.bf16.mxu0 0
        %2069 = vmatpush1.bf16.msra.mxu0 0
        %2070 = vmatprep.subr.bf16.mxu0 0
        %2071 = vmatpush1.bf16.msra.mxu0 0
        %2072 = vmatprep.subr.bf16.mxu0 0
        %2073 = vmatpush1.bf16.msra.mxu0 0
        %2074 = vmatprep.subr.bf16.mxu0 0
        %2075 = vmatpush1.bf16.msra.mxu0 0
        %2076 = vmatprep.subr.bf16.mxu0 0
        %2077 = vmatpush1.bf16.msra.mxu0 0
        %2078 = vmatprep.mubr.bf16.mxu0 0
        %2079 = vmatmul.mubr.bf16.gmra.mrb[0].mxu0 %v2044
        %v2080 = vpop.f32.mrb[0].mxu0
        %v2081 = vadd.f32 %v2029, %v2080
        %v2082 = vpop.f32.mrb[0].mxu0
        %v2083 = vpop.f32.mrb[0].mxu0
        %v2084 = vpop.f32.mrb[0].mxu0
        %2085 = vdwg.mxu0
        %v2086 = vmax.f32 %v2081, 0.0
        %v2087 = vpack.c.bf16 %v2086, %v2086
        %s2088 = scalar_lea.vmem %s10, 64
        %v2089 = vld [vmem:[%s2088] sm:$0xf]
        %v2090 = vld [vmem:[%s2088 + $0x4] sm:$0xf]
        %v2091 = vld [vmem:[%s2088 + $0x8] sm:$0xf]
        %v2092 = vld [vmem:[%s2088 + $0xc] sm:$0xf]
        %v2093 = vld [vmem:[%s2088 + $0x10] sm:$0xf]
        %v2094 = vld [vmem:[%s2088 + $0x14] sm:$0xf]
        %v2095 = vld [vmem:[%s2088 + $0x18] sm:$0xf]
        %v2096 = vld [vmem:[%s2088 + $0x1c] sm:$0xf]
        %v2097 = vld [vmem:[%s2088 + $0x20] sm:$0xf]
        %v2098 = vld [vmem:[%s2088 + $0x24] sm:$0xf]
        %v2099 = vld [vmem:[%s2088 + $0x28] sm:$0xf]
        %v2100 = vld [vmem:[%s2088 + $0x2c] sm:$0xf]
        %v2101 = vld [vmem:[%s2088 + $0x30] sm:$0xf]
        %v2102 = vld [vmem:[%s2088 + $0x34] sm:$0xf]
        %v2103 = vld [vmem:[%s2088 + $0x38] sm:$0xf]
        %v2104 = vld [vmem:[%s2088 + $0x3c] sm:$0xf]
        %s2105 = scalar_lea.vmem %s11, 1
        %v2106 = vld [vmem:[%s2105] sm:$0x1]
        %v2108 = vlaneseq
        %v2109 = vshrl.u32 %v2108, 7
        %v2110 = vsub.s32 0, %v2109
        %v2111 = vrot.slane %v2106, %v2110
        %v2129 = vunpack.c.l.b16 %v2089
        %v2130 = vunpack.c.l.b16 %v2090
        %v2131 = vunpack.c.l.b16 %v2091
        %v2132 = vunpack.c.l.b16 %v2092
        %v2133 = vunpack.c.l.b16 %v2093
        %v2134 = vunpack.c.l.b16 %v2094
        %v2135 = vunpack.c.l.b16 %v2095
        %v2136 = vunpack.c.l.b16 %v2096
        %v2137 = vunpack.c.l.b16 %v2097
        %v2138 = vunpack.c.l.b16 %v2098
        %v2139 = vunpack.c.l.b16 %v2099
        %v2140 = vunpack.c.l.b16 %v2100
        %v2141 = vunpack.c.l.b16 %v2101
        %v2142 = vunpack.c.l.b16 %v2102
        %v2143 = vunpack.c.l.b16 %v2103
        %v2144 = vunpack.c.l.b16 %v2104
        %v2145 = vpack.c.b16 %v2130, %v2129
        %v2146 = vpack.c.b16 %v2132, %v2131
        %v2147 = vpack.c.b16 %v2134, %v2133
        %v2148 = vpack.c.b16 %v2136, %v2135
        %v2149 = vpack.c.b16 %v2138, %v2137
        %v2150 = vpack.c.b16 %v2140, %v2139
        %v2151 = vpack.c.b16 %v2142, %v2141
        %v2152 = vpack.c.b16 %v2144, %v2143
        %2161 = vmatprep.subr.bf16.mxu0 0
        %2162 = vmatpush1.bf16.msra.mxu0 %v2145
        %2163 = vmatprep.subr.bf16.mxu0 0
        %2164 = vmatpush1.bf16.msra.mxu0 %v2146
        %2165 = vmatprep.subr.bf16.mxu0 0
        %2166 = vmatpush1.bf16.msra.mxu0 %v2147
        %2167 = vmatprep.subr.bf16.mxu0 0
        %2168 = vmatpush1.bf16.msra.mxu0 %v2148
        %2169 = vmatprep.subr.bf16.mxu0 0
        %2170 = vmatpush1.bf16.msra.mxu0 %v2149
        %2171 = vmatprep.subr.bf16.mxu0 0
        %2172 = vmatpush1.bf16.msra.mxu0 %v2150
        %2173 = vmatprep.subr.bf16.mxu0 0
        %2174 = vmatpush1.bf16.msra.mxu0 %v2151
        %2175 = vmatprep.subr.bf16.mxu0 0
        %2176 = vmatpush1.bf16.msra.mxu0 %v2152
        %2177 = vmatprep.subr.bf16.mxu0 0
        %2178 = vmatpush1.bf16.msra.mxu0 0
        %2179 = vmatprep.subr.bf16.mxu0 0
        %2180 = vmatpush1.bf16.msra.mxu0 0
        %2181 = vmatprep.subr.bf16.mxu0 0
        %2182 = vmatpush1.bf16.msra.mxu0 0
        %2183 = vmatprep.subr.bf16.mxu0 0
        %2184 = vmatpush1.bf16.msra.mxu0 0
        %2185 = vmatprep.subr.bf16.mxu0 0
        %2186 = vmatpush1.bf16.msra.mxu0 0
        %2187 = vmatprep.subr.bf16.mxu0 0
        %2188 = vmatpush1.bf16.msra.mxu0 0
        %2189 = vmatprep.subr.bf16.mxu0 0
        %2190 = vmatpush1.bf16.msra.mxu0 0
        %2191 = vmatprep.subr.bf16.mxu0 0
        %2192 = vmatpush1.bf16.msra.mxu0 0
        %2193 = vmatprep.mubr.bf16.mxu0 0
        %2194 = vmatmul.mubr.bf16.gmra.mrb[0].mxu0 %v2087
        %v2195 = vpop.f32.mrb[0].mxu0
        %v2196 = vadd.f32 %v2111, %v2195
        %v2197 = vpop.f32.mrb[0].mxu0
        %v2198 = vpop.f32.mrb[0].mxu0
        %v2199 = vpop.f32.mrb[0].mxu0
        %2200 = vdwg.mxu0
        %v2201 = vadd.f32 %v1985, %v2196
        %v2202 = vld [vmem:[%s12] sm:$0x1]
        %v2203 = vld [vmem:[%s13] sm:$0x1]
        %v2204 = vsel %vm527, %v2201, 0.0
        %2205 = vadd.xlane.f32.xlu0 %v2204
        %v2206 = vpop.xlane.xlu0 %2205
        %v2207 = vmul.f32 %v2206, %v531
        %v2208 = vsub.f32 %v2201, %v2207
        %v2209 = vmul.f32 %v2208, %v2208
        %v2210 = vsel %vm527, %v2209, 0.0
        %2211 = vadd.xlane.f32.xlu0 %v2210
        %v2212 = vpop.xlane.xlu0 %2211
        %v2213 = vmul.f32 %v2212, %v531
        %v2214 = vadd.f32 %v2213, 1e-05
        %v2215 = vrsqrt.pop %v2214
        %v2216 = vmul.f32 %v2208, %v2215
        %v2218 = vlaneseq
        %v2219 = vshrl.u32 %v2218, 7
        %v2220 = vsub.s32 0, %v2219
        %v2221 = vrot.slane %v2202, %v2220
        %v2223 = vmul.f32 %v2216, %v2221
        %v2225 = vlaneseq
        %v2226 = vshrl.u32 %v2225, 7
        %v2227 = vsub.s32 0, %v2226
        %v2228 = vrot.slane %v2203, %v2227
        %v2230 = vadd.f32 %v2223, %v2228
        %v2231 = vpack.c.bf16 %v2230, %v2230
        %v2232 = vld [vmem:[%s14] sm:$0xf]
        %v2233 = vld [vmem:[%s14 + $0x4] sm:$0xf]
        %v2234 = vld [vmem:[%s14 + $0x8] sm:$0xf]
        %v2235 = vld [vmem:[%s14 + $0xc] sm:$0xf]
        %v2236 = vld [vmem:[%s15] sm:$0x1]
        %v2238 = vlaneseq
        %v2239 = vshrl.u32 %v2238, 7
        %v2240 = vsub.s32 0, %v2239
        %v2241 = vrot.slane %v2236, %v2240
        %v2247 = vunpack.c.l.b16 %v2232
        %v2248 = vunpack.c.l.b16 %v2233
        %v2249 = vunpack.c.l.b16 %v2234
        %v2250 = vunpack.c.l.b16 %v2235
        %v2251 = vpack.c.b16 %v2248, %v2247
        %v2252 = vpack.c.b16 %v2250, %v2249
        %v2256 = vsel %vm527, %v2231, 0
        %2258 = vmatprep.subr.bf16.mxu0 0
        %2259 = vmatpush1.bf16.msra.mxu0 %v2251
        %2260 = vmatprep.subr.bf16.mxu0 0
        %2261 = vmatpush1.bf16.msra.mxu0 %v2252
        %2262 = vmatprep.subr.bf16.mxu0 0
        %2263 = vmatpush1.bf16.msra.mxu0 0
        %2264 = vmatprep.subr.bf16.mxu0 0
        %2265 = vmatpush1.bf16.msra.mxu0 0
        %2266 = vmatprep.subr.bf16.mxu0 0
        %2267 = vmatpush1.bf16.msra.mxu0 0
        %2268 = vmatprep.subr.bf16.mxu0 0
        %2269 = vmatpush1.bf16.msra.mxu0 0
        %2270 = vmatprep.subr.bf16.mxu0 0
        %2271 = vmatpush1.bf16.msra.mxu0 0
        %2272 = vmatprep.subr.bf16.mxu0 0
        %2273 = vmatpush1.bf16.msra.mxu0 0
        %2274 = vmatprep.subr.bf16.mxu0 0
        %2275 = vmatpush1.bf16.msra.mxu0 0
        %2276 = vmatprep.subr.bf16.mxu0 0
        %2277 = vmatpush1.bf16.msra.mxu0 0
        %2278 = vmatprep.subr.bf16.mxu0 0
        %2279 = vmatpush1.bf16.msra.mxu0 0
        %2280 = vmatprep.subr.bf16.mxu0 0
        %2281 = vmatpush1.bf16.msra.mxu0 0
        %2282 = vmatprep.subr.bf16.mxu0 0
        %2283 = vmatpush1.bf16.msra.mxu0 0
        %2284 = vmatprep.subr.bf16.mxu0 0
        %2285 = vmatpush1.bf16.msra.mxu0 0
        %2286 = vmatprep.subr.bf16.mxu0 0
        %2287 = vmatpush1.bf16.msra.mxu0 0
        %2288 = vmatprep.subr.bf16.mxu0 0
        %2289 = vmatpush1.bf16.msra.mxu0 0
        %2290 = vmatprep.mubr.bf16.mxu0 0
        %2291 = vmatmul.mubr.bf16.gmra.mrb[0].mxu0 %v2256
        %v2292 = vpop.f32.mrb[0].mxu0
        %v2293 = vadd.f32 %v2241, %v2292
        %v2294 = vpop.f32.mrb[0].mxu0
        %v2295 = vpop.f32.mrb[0].mxu0
        %v2296 = vpop.f32.mrb[0].mxu0
        %2297 = vdwg.mxu0
        %v2298 = vpack.c.bf16 %v2293, %v2293
        %2299 = vst [vmem:[%s512] sm:$0xf] %v2298
        %s2300 = sand.u32 %s379, 1
        %s2301 = scalar_lea.sflag [#allocation3], %s2300
        %s2302 = sand.u32 %s379, 1
        %s2303 = smul.addr %s2302, 4
        %s2304 = scalar_lea.vmem [#allocation2], %s2303
        // Predicated region
        $region85: #{tpu_custom_call.1} parent=83 // pred_check
          %p2305 = pneg %p389
        $region86: #{tpu_custom_call.1} parent=83 // pred_check_branch
          %2307 = sbr.rel (%p2305) target = $region88
        $region87: #{tpu_custom_call.1} parent=83 // pred_region
          %s2309 = ssub.s32 64, 64
          %2310 = vsyncadd %s2301, %s2309
          %s2311 = smul.addr %s30, 64
          %s2312 = scalar_lea.hbm %s16, %s2311
          %s2314 = sshll.u32 %s2304, 4
          %s2315 = int_to_ptr.vmem [resolvable:$true] %s2314
          %2317 = dma.vmem_to_hbm [thread:$0]  %s2315, 64, %s2312, %s2301
        $region88: #{tpu_custom_call.1} parent=83 // pred_fallthru
          _
      $region84: #{tpu_custom_call.1} parent=5 // pred_fallthru
        _
      %p2318 = scmp.le.s32.totalorder 2, %s25
      // Predicated region
      $region89: #{tpu_custom_call.1} parent=5 // pred_check
        %p2319 = pneg %p2318
      $region90: #{tpu_custom_call.1} parent=5 // pred_check_branch
        %2321 = sbr.rel (%p2319) target = $region92
      $region91: #{tpu_custom_call.1} parent=5 // pred_region
        %s2322 = ssub.s32 %s25, 2
        // Predicated region
        $region93: #{tpu_custom_call.1} parent=91 // pred_check
          %p2323 = pneg %p395
        $region94: #{tpu_custom_call.1} parent=91 // pred_check_branch
          %2325 = sbr.rel (%p2323) target = $region96
        $region95: #{tpu_custom_call.1} parent=91 // pred_region
          %s2326 = sand.u32 %s380, 1
          %s2327 = scalar_lea.sflag [#allocation3], %s2326
          %s2328 = sand.u32 %s380, 1
          %s2329 = smul.addr %s2328, 4
          %s2330 = scalar_lea.vmem [#allocation2], %s2329
          %2331 = dma.done %s2327, 64
        $region96: #{tpu_custom_call.1} parent=91 // pred_fallthru
          _
      $region92: #{tpu_custom_call.1} parent=5 // pred_fallthru
        _
    $region6: #{tpu_custom_call.1} parent=1 // loop_footer
      %s29 = sadd.s32 1, %s25
    $region7: #{tpu_custom_call.1} parent=1 // loop_footer_branch
      %24 = sbr.rel target = $region3
    $region8: #{tpu_custom_call.1} parent=1 // loop_exit
      _
    %2332 = vsyncpa [#allocation3], 1
    %s2333 = scalar_lea.sflag [#allocation3], 1
    %2334 = vsyncpa %s2333, 1

</llo_original>
